<compile_context>
chip_gen: v7x
topology: tpu7x:2x2x1
jax: 0.10.0
libtpu: 0.0.40
codegen_flags: <defaults>
</compile_context>

<pallas_src>
import jax
import jax.numpy as jnp
from jax import lax
from jax.experimental import pallas as pl
from jax.experimental.pallas import tpu as pltpu

IN_CHANNELS = 1024          # resnet feature dim expected by HallucinationNet
NOISE_CHANNELS = 128
HIDDEN = IN_CHANNELS // 4   # 256


def _round_up(n, m):
    return ((n + m - 1) // m) * m


# TODO(synk): resnet.resnet18 backbone is not defined in the provided source; a
# flatten + single Linear (K-tiled, bf16-streamed) is used as a deterministic
# stand-in feature extractor producing the 1024-dim features.
def _extractor_kernel(x_ref, wb_ref, bb_ref, noise_ref, w1f_ref, w1n_ref,
                      b1_ref, w2_ref, b2_ref, o_ref):
    k = pl.program_id(0)
    nk = pl.num_programs(0)

    @pl.when(k == 0)
    def _():
        o_ref[...] = jnp.zeros_like(o_ref)

    # Backbone stand-in: stream K-tiles of flatten(x) @ Wb (bf16 in, f32 acc)
    # directly into the resident output block (no scratch accumulator).
    o_ref[...] += jnp.dot(x_ref[...], wb_ref[...],
                          preferred_element_type=jnp.float32)

    @pl.when(k == nk - 1)
    def _():
        feats = o_ref[...] + bb_ref[...]                       # (Bp, C) f32
        bp = feats.shape[0]
        hd = noise_ref.shape[0] // bp                          # h_degree

        # HallucinationNet encoder (Dropout = identity at inference).
        # Layer 1 split: concat(feature, noise) @ W1 == feats@W1f + noise@W1n.
        hf = jnp.dot(feats.astype(jnp.bfloat16), w1f_ref[...],
                     preferred_element_type=jnp.float32)       # (Bp, Hid)
        hn = jnp.dot(noise_ref[...], w1n_ref[...],
                     preferred_element_type=jnp.float32)       # (hd*Bp, Hid)

        # Only the per-sample MEAN of the hd fake features is needed, so sum
        # the hd ReLU activations before layer 2.  Noise rows are
        # hallucination-major, so slice j picks rows (j, 0..Bp) — aligned
        # 8-sublane static slices, no expand/segment-sum matrices.
        h_sum = jnp.zeros((bp, HIDDEN), jnp.float32)
        for j in range(hd):                                    # hd tiny, static
            hn_j = hn[j * bp:(j + 1) * bp, :]
            h_sum = h_sum + jnp.maximum(hf + hn_j + b1_ref[...], 0.0)

        sum_fake = jnp.dot(h_sum.astype(jnp.bfloat16), w2_ref[...],
                           preferred_element_type=jnp.float32) \
                   + hd * b2_ref[...]                          # (Bp, C)

        mix = (feats + sum_fake) * (1.0 / (hd + 1))

        # mix / (||mix||_2 * 2) ** 0.5   (sqrt + rsqrt go to the EUP slot).
        ssq = jnp.sum(mix * mix, axis=1, keepdims=True)
        l2 = jnp.sqrt(ssq)
        inv = lax.rsqrt(2.0 * jnp.maximum(l2, 1e-12))          # finite for tiny rows
        o_ref[...] = mix * inv


def prepare_params(params, d_in, *, tk=2048):
    """Pad + cast weights to their kernel dtypes ONCE (outside the per-call path).

    tk is the backbone K tile; sweep {1024, 2048, 4096} for large d_in.  It is
    clamped to the 128-padded input dim so tiny inputs don't over-pad.
    """
    d128 = _round_up(d_in, 128)
    tk = min(_round_up(tk, 128), d128)
    kp = _round_up(d_in, tk)
    return {
        "wb": jnp.pad(params["wb"].astype(jnp.float32),
                      ((0, kp - d_in), (0, 0))).astype(jnp.bfloat16),
        "bb": params["bb"].astype(jnp.float32).reshape(1, IN_CHANNELS),
        "w1f": params["w1f"].astype(jnp.bfloat16),
        "w1n": params["w1n"].astype(jnp.bfloat16),
        "b1": params["b1"].astype(jnp.float32).reshape(1, HIDDEN),
        "w2": params["w2"].astype(jnp.bfloat16),
        "b2": params["b2"].astype(jnp.float32).reshape(1, IN_CHANNELS),
        "tk": tk,
        "kp": kp,
        "d_in": d_in,
    }


def extractor_forward(x, prep, noise):
    """x: (B, C, H, W); noise: (B, h_degree, 128). Returns (B, 1024) f32."""
    B = x.shape[0]
    hd = noise.shape[1]
    C = IN_CHANNELS
    tk, kp, d_in = prep["tk"], prep["kp"], prep["d_in"]

    x_flat = x.reshape(B, -1)
    assert x_flat.shape[1] == d_in
    Bp = _round_up(B, 8)                       # f32 sublane alignment
    nk = kp // tk

    x_pad = jnp.pad(x_flat.astype(jnp.float32),
                    ((0, Bp - B), (0, kp - d_in))).astype(jnp.bfloat16)

    # Hallucination-major noise: row (j, b) holds noise[b, j]; padded samples
    # are zero and sliced off after the kernel.
    noise_hm = jnp.pad(noise.astype(jnp.float32).transpose(1, 0, 2),
                       ((0, 0), (0, Bp - B), (0, 0)))
    noise_hm = noise_hm.reshape(hd * Bp, NOISE_CHANNELS).astype(jnp.bfloat16)

    out = pl.pallas_call(
        _extractor_kernel,
        out_shape=jax.ShapeDtypeStruct((Bp, C), jnp.float32),
        grid=(nk,),
        in_specs=[
            pl.BlockSpec((Bp, tk), lambda k: (0, k)),                  # x K-tiles
            pl.BlockSpec((tk, C), lambda k: (k, 0)),                   # Wb K-tiles
            pl.BlockSpec((1, C), lambda k: (0, 0)),                    # bb
            pl.BlockSpec((hd * Bp, NOISE_CHANNELS), lambda k: (0, 0)),  # noise
            pl.BlockSpec((C, HIDDEN), lambda k: (0, 0)),               # w1f
            pl.BlockSpec((NOISE_CHANNELS, HIDDEN), lambda k: (0, 0)),  # w1n
            pl.BlockSpec((1, HIDDEN), lambda k: (0, 0)),               # b1
            pl.BlockSpec((HIDDEN, C), lambda k: (0, 0)),               # w2
            pl.BlockSpec((1, C), lambda k: (0, 0)),                    # b2
        ],
        out_specs=pl.BlockSpec((Bp, C), lambda k: (0, 0)),
        compiler_params=pltpu.CompilerParams(
            dimension_semantics=("arbitrary",),
            # Explicit scoped-VMEM limit so tk up to 4096 (16 MiB double-buffered
            # bf16 Wb tiles) compiles on v5e's 16 MiB default; safe on v6e/v7x.
            vmem_limit_bytes=48 * 1024 * 1024),
    )(x_pad, prep["wb"], prep["bb"], noise_hm, prep["w1f"], prep["w1n"],
      prep["b1"], prep["w2"], prep["b2"])
    return out[:B]


def _reference_forward(x, params, noise):
    """Pure-JAX f32 reference with identical semantics (for validation)."""
    B = x.shape[0]
    hd = noise.shape[1]
    x_flat = x.reshape(B, -1).astype(jnp.float32)
    feats = x_flat @ params["wb"] + params["bb"]
    w1 = jnp.concatenate([params["w1f"], params["w1n"]], axis=0)
    outs = []
    for b in range(B):
        fn = jnp.concatenate(
            [jnp.broadcast_to(feats[b], (hd, IN_CHANNELS)), noise[b]], axis=1)
        h = jnp.maximum(fn @ w1 + params["b1"], 0.0)
        fake = h @ params["w2"] + params["b2"]
        mix = jnp.mean(jnp.concatenate([feats[b:b + 1], fake], axis=0), axis=0)
        outs.append(mix / jnp.sqrt(2.0 * jnp.linalg.norm(mix)))
    return jnp.stack(outs, axis=0)


if __name__ == "__main__":
    key = jax.random.PRNGKey(0)
    B, Cin, Hh, Ww = 2, 4, 16, 16        # small NCHW input (D_in = 1024)
    h_degree = 4                          # args.h_degree
    D_in = Cin * Hh * Ww

    k1, k2, k3, k4, k5 = jax.random.split(key, 5)
    x = jax.random.normal(k1, (B, Cin, Hh, Ww), jnp.float32)

    # HallucinationNet.__initialize_weights: Linear weights ~ N(0, 0.1), biases = 0.
    params = {
        "wb":  jax.random.normal(k2, (D_in, IN_CHANNELS), jnp.float32) * 0.02,
        "bb":  jnp.zeros((1, IN_CHANNELS), jnp.float32),
        "w1f": jax.random.normal(k3, (IN_CHANNELS, HIDDEN), jnp.float32) * 0.1,
        "w1n": jax.random.normal(k4, (NOISE_CHANNELS, HIDDEN), jnp.float32) * 0.1,
        "b1":  jnp.zeros((1, HIDDEN), jnp.float32),
        "w2":  jax.random.normal(k5, (HIDDEN, IN_CHANNELS), jnp.float32) * 0.1,
        "b2":  jnp.zeros((1, IN_CHANNELS), jnp.float32),
    }

    # Per-sample Gaussian noise (torch.randn(h_degree, 128) per batch element),
    # passed explicitly so the kernel is deterministic.
    noise = jax.random.normal(
        jax.random.PRNGKey(1), (B, h_degree, NOISE_CHANNELS), jnp.float32)

    # Weights are padded / cast once, outside the per-call path.
    prep = prepare_params(params, D_in, tk=2048)

    out = extractor_forward(x, prep, noise)
    out = jax.block_until_ready(out)

    assert out.shape == (B, IN_CHANNELS)
    assert bool(jnp.all(jnp.isfinite(out)))

    # NOTE: matmul operands are deliberately rounded to bf16 (f32 accumulation);
    # the loose tolerance below covers that divergence from the f32 reference.
    ref = _reference_forward(x, params, noise)
    assert bool(jnp.allclose(out, ref, rtol=5e-2, atol=3e-2)), \
        float(jnp.max(jnp.abs(out - ref)))

    print("KERNEL_OK")
</pallas_src>

<mosaic_0001>
module attributes {stable_mosaic.version = 11 : i64} {
  func.func @_extractor_kernel(%arg0: i32, %arg1: memref<8x1024xbf16, #tpu.memory_space<vmem>>, %arg2: memref<1024x1024xbf16, #tpu.memory_space<vmem>>, %arg3: memref<1x1024xf32, #tpu.memory_space<vmem>>, %arg4: memref<32x128xbf16, #tpu.memory_space<vmem>>, %arg5: memref<1024x256xbf16, #tpu.memory_space<vmem>>, %arg6: memref<128x256xbf16, #tpu.memory_space<vmem>>, %arg7: memref<1x256xf32, #tpu.memory_space<vmem>>, %arg8: memref<256x1024xbf16, #tpu.memory_space<vmem>>, %arg9: memref<1x1024xf32, #tpu.memory_space<vmem>>, %arg10: memref<8x1024xf32, #tpu.memory_space<vmem>>) attributes {dimension_semantics = [#tpu.dimension_semantics<arbitrary>], iteration_bounds = array<i64: 1>, scalar_prefetch = 0 : i64, scratch_operands = 0 : i64, tpu.core_type = #tpu.core_type<tc>, window_params = [{transform_indices = @transform_0, window_bounds = array<i64: 8, 1024>}, {transform_indices = @transform_1, window_bounds = array<i64: 1024, 1024>}, {pipeline_mode = #tpu.pipeline_mode<synchronous>, transform_indices = @transform_2, window_bounds = array<i64: 1, 1024>}, {pipeline_mode = #tpu.pipeline_mode<synchronous>, transform_indices = @transform_3, window_bounds = array<i64: 32, 128>}, {pipeline_mode = #tpu.pipeline_mode<synchronous>, transform_indices = @transform_4, window_bounds = array<i64: 1024, 256>}, {pipeline_mode = #tpu.pipeline_mode<synchronous>, transform_indices = @transform_5, window_bounds = array<i64: 128, 256>}, {pipeline_mode = #tpu.pipeline_mode<synchronous>, transform_indices = @transform_6, window_bounds = array<i64: 1, 256>}, {pipeline_mode = #tpu.pipeline_mode<synchronous>, transform_indices = @transform_7, window_bounds = array<i64: 256, 1024>}, {pipeline_mode = #tpu.pipeline_mode<synchronous>, transform_indices = @transform_8, window_bounds = array<i64: 1, 1024>}, {pipeline_mode = #tpu.pipeline_mode<synchronous>, transform_indices = @transform_9, window_bounds = array<i64: 8, 1024>}]} {
    %c0_i32 = arith.constant 0 : i32
    %0 = arith.cmpi eq, %arg0, %c0_i32 : i32
    %1 = arith.extui %0 : i1 to i32
    %c0_i32_0 = arith.constant 0 : i32
    %2 = arith.cmpi ne, %1, %c0_i32_0 : i32
    scf.if %2 {
      %cst_10 = arith.constant 0.000000e+00 : f32
      %12 = vector.broadcast %cst_10 : f32 to vector<8x1024xf32>
      %c0_11 = arith.constant 0 : index
      %c0_12 = arith.constant 0 : index
      %13 = vector.load %arg10[%c0_11, %c0_12] : memref<8x1024xf32, #tpu.memory_space<vmem>>, vector<8x1024xf32>
      tpu.vector_store %arg10[%c0_11, %c0_12], %12 {strides = array<i32>} : memref<8x1024xf32, #tpu.memory_space<vmem>>, vector<8x1024xf32>,
    } else {
    }
    %c0 = arith.constant 0 : index
    %c0_1 = arith.constant 0 : index
    %3 = vector.load %arg10[%c0, %c0_1] : memref<8x1024xf32, #tpu.memory_space<vmem>>, vector<8x1024xf32>
    %c0_2 = arith.constant 0 : index
    %c0_3 = arith.constant 0 : index
    %4 = vector.load %arg1[%c0_2, %c0_3] : memref<8x1024xbf16, #tpu.memory_space<vmem>>, vector<8x1024xbf16>
    %c0_4 = arith.constant 0 : index
    %c0_5 = arith.constant 0 : index
    %5 = vector.load %arg2[%c0_4, %c0_5] : memref<1024x1024xbf16, #tpu.memory_space<vmem>>, vector<1024x1024xbf16>
    %cst = arith.constant dense<0.000000e+00> : vector<8x1024xf32>
    %6 = tpu.matmul %4, %5, %cst {dimension_numbers = #tpu.dot_dimension_numbers<[1], [0], [0], [1], [0, 0, 1, 1], [], []>} : vector<8x1024xbf16>, vector<1024x1024xbf16>, vector<8x1024xf32> -> vector<8x1024xf32>
    %7 = arith.addf %3, %6 : vector<8x1024xf32>
    %c0_6 = arith.constant 0 : index
    %c0_7 = arith.constant 0 : index
    %8 = vector.load %arg10[%c0_6, %c0_7] : memref<8x1024xf32, #tpu.memory_space<vmem>>, vector<8x1024xf32>
    tpu.vector_store %arg10[%c0_6, %c0_7], %7 {strides = array<i32>} : memref<8x1024xf32, #tpu.memory_space<vmem>>, vector<8x1024xf32>,
    %c0_i32_8 = arith.constant 0 : i32
    %9 = arith.cmpi eq, %arg0, %c0_i32_8 : i32
    %10 = arith.extui %9 : i1 to i32
    %c0_i32_9 = arith.constant 0 : i32
    %11 = arith.cmpi ne, %10, %c0_i32_9 : i32
    scf.if %11 {
      %c0_10 = arith.constant 0 : index
      %c0_11 = arith.constant 0 : index
      %12 = vector.load %arg10[%c0_10, %c0_11] : memref<8x1024xf32, #tpu.memory_space<vmem>>, vector<8x1024xf32>
      %c0_12 = arith.constant 0 : index
      %c0_13 = arith.constant 0 : index
      %13 = vector.load %arg3[%c0_12, %c0_13] : memref<1x1024xf32, #tpu.memory_space<vmem>>, vector<1x1024xf32>
      %14 = vector.broadcast %13 : vector<1x1024xf32> to vector<8x1024xf32>
      %15 = arith.addf %12, %14 : vector<8x1024xf32>
      %16 = arith.truncf %15 : vector<8x1024xf32> to vector<8x1024xbf16>
      %c0_14 = arith.constant 0 : index
      %c0_15 = arith.constant 0 : index
      %17 = vector.load %arg5[%c0_14, %c0_15] : memref<1024x256xbf16, #tpu.memory_space<vmem>>, vector<1024x256xbf16>
      %cst_16 = arith.constant dense<0.000000e+00> : vector<8x256xf32>
      %18 = tpu.matmul %16, %17, %cst_16 {dimension_numbers = #tpu.dot_dimension_numbers<[1], [0], [0], [1], [0, 0, 1, 1], [], []>} : vector<8x1024xbf16>, vector<1024x256xbf16>, vector<8x256xf32> -> vector<8x256xf32>
      %c0_17 = arith.constant 0 : index
      %c0_18 = arith.constant 0 : index
      %19 = vector.load %arg4[%c0_17, %c0_18] : memref<32x128xbf16, #tpu.memory_space<vmem>>, vector<32x128xbf16>
      %c0_19 = arith.constant 0 : index
      %c0_20 = arith.constant 0 : index
      %20 = vector.load %arg6[%c0_19, %c0_20] : memref<128x256xbf16, #tpu.memory_space<vmem>>, vector<128x256xbf16>
      %cst_21 = arith.constant dense<0.000000e+00> : vector<32x256xf32>
      %21 = tpu.matmul %19, %20, %cst_21 {dimension_numbers = #tpu.dot_dimension_numbers<[1], [0], [0], [1], [0, 0, 1, 1], [], []>} : vector<32x128xbf16>, vector<128x256xbf16>, vector<32x256xf32> -> vector<32x256xf32>
      %cst_22 = arith.constant 0.000000e+00 : f32
      %22 = vector.broadcast %cst_22 : f32 to vector<8x256xf32>
      %23 = vector.extract_strided_slice %21 {offsets = [0, 0], sizes = [8, 256], strides = [1, 1]} : vector<32x256xf32> to vector<8x256xf32>
      %24 = arith.addf %18, %23 : vector<8x256xf32>
      %c0_23 = arith.constant 0 : index
      %c0_24 = arith.constant 0 : index
      %25 = vector.load %arg7[%c0_23, %c0_24] : memref<1x256xf32, #tpu.memory_space<vmem>>, vector<1x256xf32>
      %26 = vector.broadcast %25 : vector<1x256xf32> to vector<8x256xf32>
      %27 = arith.addf %24, %26 : vector<8x256xf32>
      %cst_25 = arith.constant 0.000000e+00 : f32
      %28 = vector.broadcast %cst_25 : f32 to vector<8x256xf32>
      %29 = arith.maximumf %27, %28 : vector<8x256xf32>
      %30 = arith.addf %22, %29 : vector<8x256xf32>
      %31 = vector.extract_strided_slice %21 {offsets = [8, 0], sizes = [8, 256], strides = [1, 1]} : vector<32x256xf32> to vector<8x256xf32>
      %32 = arith.addf %18, %31 : vector<8x256xf32>
      %c0_26 = arith.constant 0 : index
      %c0_27 = arith.constant 0 : index
      %33 = vector.load %arg7[%c0_26, %c0_27] : memref<1x256xf32, #tpu.memory_space<vmem>>, vector<1x256xf32>
      %34 = vector.broadcast %33 : vector<1x256xf32> to vector<8x256xf32>
      %35 = arith.addf %32, %34 : vector<8x256xf32>
      %cst_28 = arith.constant 0.000000e+00 : f32
      %36 = vector.broadcast %cst_28 : f32 to vector<8x256xf32>
      %37 = arith.maximumf %35, %36 : vector<8x256xf32>
      %38 = arith.addf %30, %37 : vector<8x256xf32>
      %39 = vector.extract_strided_slice %21 {offsets = [16, 0], sizes = [8, 256], strides = [1, 1]} : vector<32x256xf32> to vector<8x256xf32>
      %40 = arith.addf %18, %39 : vector<8x256xf32>
      %c0_29 = arith.constant 0 : index
      %c0_30 = arith.constant 0 : index
      %41 = vector.load %arg7[%c0_29, %c0_30] : memref<1x256xf32, #tpu.memory_space<vmem>>, vector<1x256xf32>
      %42 = vector.broadcast %41 : vector<1x256xf32> to vector<8x256xf32>
      %43 = arith.addf %40, %42 : vector<8x256xf32>
      %cst_31 = arith.constant 0.000000e+00 : f32
      %44 = vector.broadcast %cst_31 : f32 to vector<8x256xf32>
      %45 = arith.maximumf %43, %44 : vector<8x256xf32>
      %46 = arith.addf %38, %45 : vector<8x256xf32>
      %47 = vector.extract_strided_slice %21 {offsets = [24, 0], sizes = [8, 256], strides = [1, 1]} : vector<32x256xf32> to vector<8x256xf32>
      %48 = arith.addf %18, %47 : vector<8x256xf32>
      %c0_32 = arith.constant 0 : index
      %c0_33 = arith.constant 0 : index
      %49 = vector.load %arg7[%c0_32, %c0_33] : memref<1x256xf32, #tpu.memory_space<vmem>>, vector<1x256xf32>
      %50 = vector.broadcast %49 : vector<1x256xf32> to vector<8x256xf32>
      %51 = arith.addf %48, %50 : vector<8x256xf32>
      %cst_34 = arith.constant 0.000000e+00 : f32
      %52 = vector.broadcast %cst_34 : f32 to vector<8x256xf32>
      %53 = arith.maximumf %51, %52 : vector<8x256xf32>
      %54 = arith.addf %46, %53 : vector<8x256xf32>
      %55 = arith.truncf %54 : vector<8x256xf32> to vector<8x256xbf16>
      %c0_35 = arith.constant 0 : index
      %c0_36 = arith.constant 0 : index
      %56 = vector.load %arg8[%c0_35, %c0_36] : memref<256x1024xbf16, #tpu.memory_space<vmem>>, vector<256x1024xbf16>
      %cst_37 = arith.constant dense<0.000000e+00> : vector<8x1024xf32>
      %57 = tpu.matmul %55, %56, %cst_37 {dimension_numbers = #tpu.dot_dimension_numbers<[1], [0], [0], [1], [0, 0, 1, 1], [], []>} : vector<8x256xbf16>, vector<256x1024xbf16>, vector<8x1024xf32> -> vector<8x1024xf32>
      %c0_38 = arith.constant 0 : index
      %c0_39 = arith.constant 0 : index
      %58 = vector.load %arg9[%c0_38, %c0_39] : memref<1x1024xf32, #tpu.memory_space<vmem>>, vector<1x1024xf32>
      %cst_40 = arith.constant 4.000000e+00 : f32
      %59 = vector.broadcast %cst_40 : f32 to vector<1x1024xf32>
      %60 = arith.mulf %59, %58 : vector<1x1024xf32>
      %61 = vector.broadcast %60 : vector<1x1024xf32> to vector<8x1024xf32>
      %62 = arith.addf %57, %61 : vector<8x1024xf32>
      %63 = arith.addf %15, %62 : vector<8x1024xf32>
      %cst_41 = arith.constant 2.000000e-01 : f32
      %64 = vector.broadcast %cst_41 : f32 to vector<8x1024xf32>
      %65 = arith.mulf %63, %64 : vector<8x1024xf32>
      %66 = arith.mulf %65, %65 : vector<8x1024xf32>
      %cst_42 = arith.constant dense<0.000000e+00> : vector<8xf32>
      %67 = vector.multi_reduction <add>, %66, %cst_42 [1] : vector<8x1024xf32> to vector<8xf32>
      %68 = vector.shape_cast %67 : vector<8xf32> to vector<8x1xf32>
      %69 = math.sqrt %68 : vector<8x1xf32>
      %cst_43 = arith.constant 9.99999996E-13 : f32
      %70 = vector.broadcast %cst_43 : f32 to vector<8x1xf32>
      %71 = arith.maximumf %69, %70 : vector<8x1xf32>
      %cst_44 = arith.constant 2.000000e+00 : f32
      %72 = vector.broadcast %cst_44 : f32 to vector<8x1xf32>
      %73 = arith.mulf %72, %71 : vector<8x1xf32>
      %74 = math.rsqrt %73 : vector<8x1xf32>
      %75 = vector.broadcast %74 : vector<8x1xf32> to vector<8x1024xf32>
      %76 = arith.mulf %65, %75 : vector<8x1024xf32>
      %c0_45 = arith.constant 0 : index
      %c0_46 = arith.constant 0 : index
      %77 = vector.load %arg10[%c0_45, %c0_46] : memref<8x1024xf32, #tpu.memory_space<vmem>>, vector<8x1024xf32>
      tpu.vector_store %arg10[%c0_45, %c0_46], %76 {strides = array<i32>} : memref<8x1024xf32, #tpu.memory_space<vmem>>, vector<8x1024xf32>,
    } else {
    }
    return
  }
  func.func @transform_0(%arg0: i32) -> (i32, i32) {
    %c0_i32 = arith.constant 0 : i32
    %c0_i32_0 = arith.constant 0 : i32
    return %c0_i32, %arg0 : i32, i32
  }
  func.func @transform_1(%arg0: i32) -> (i32, i32) {
    %c0_i32 = arith.constant 0 : i32
    %c0_i32_0 = arith.constant 0 : i32
    return %arg0, %c0_i32 : i32, i32
  }
  func.func @transform_2(%arg0: i32) -> (i32, i32) {
    %c0_i32 = arith.constant 0 : i32
    %c0_i32_0 = arith.constant 0 : i32
    %c0_i32_1 = arith.constant 0 : i32
    return %c0_i32, %c0_i32_0 : i32, i32
  }
  func.func @transform_3(%arg0: i32) -> (i32, i32) {
    %c0_i32 = arith.constant 0 : i32
    %c0_i32_0 = arith.constant 0 : i32
    %c0_i32_1 = arith.constant 0 : i32
    return %c0_i32, %c0_i32_0 : i32, i32
  }
  func.func @transform_4(%arg0: i32) -> (i32, i32) {
    %c0_i32 = arith.constant 0 : i32
    %c0_i32_0 = arith.constant 0 : i32
    %c0_i32_1 = arith.constant 0 : i32
    return %c0_i32, %c0_i32_0 : i32, i32
  }
  func.func @transform_5(%arg0: i32) -> (i32, i32) {
    %c0_i32 = arith.constant 0 : i32
    %c0_i32_0 = arith.constant 0 : i32
    %c0_i32_1 = arith.constant 0 : i32
    return %c0_i32, %c0_i32_0 : i32, i32
  }
  func.func @transform_6(%arg0: i32) -> (i32, i32) {
    %c0_i32 = arith.constant 0 : i32
    %c0_i32_0 = arith.constant 0 : i32
    %c0_i32_1 = arith.constant 0 : i32
    return %c0_i32, %c0_i32_0 : i32, i32
  }
  func.func @transform_7(%arg0: i32) -> (i32, i32) {
    %c0_i32 = arith.constant 0 : i32
    %c0_i32_0 = arith.constant 0 : i32
    %c0_i32_1 = arith.constant 0 : i32
    return %c0_i32, %c0_i32_0 : i32, i32
  }
  func.func @transform_8(%arg0: i32) -> (i32, i32) {
    %c0_i32 = arith.constant 0 : i32
    %c0_i32_0 = arith.constant 0 : i32
    %c0_i32_1 = arith.constant 0 : i32
    return %c0_i32, %c0_i32_0 : i32, i32
  }
  func.func @transform_9(%arg0: i32) -> (i32, i32) {
    %c0_i32 = arith.constant 0 : i32
    %c0_i32_0 = arith.constant 0 : i32
    %c0_i32_1 = arith.constant 0 : i32
    return %c0_i32, %c0_i32_0 : i32, i32
  }
}

</mosaic_0001>

<llo_original>
// kernel: tpu_custom_call.1
$region0: #{tpu_custom_call.1}
  #allocation0 [shape = 'u32[]', space=smem, size = 0x4, offset = 0x4, fixed_abs, tag = 'smem constant byte address 0x4 - core index']
  #allocation1 [shape = 'u32[144,128]{1,0:T(1,128)}', space=vmem, size = 0x12000, scoped, tag = 'internal scratch']
  %s0 = inlined_call_operand.hbm [shape: bf16[8,1024], index: 0, kind: input, shape index: {}]
  %s1 = inlined_call_operand.hbm [shape: bf16[1024,1024], index: 1, kind: input, shape index: {}]
  %s2 = inlined_call_operand.hbm [shape: f32[1,1024], index: 2, kind: input, shape index: {}]
  %s3 = inlined_call_operand.hbm [shape: bf16[32,128], index: 3, kind: input, shape index: {}]
  %s4 = inlined_call_operand.hbm [shape: bf16[1024,256], index: 4, kind: input, shape index: {}]
  %s5 = inlined_call_operand.hbm [shape: bf16[128,256], index: 5, kind: input, shape index: {}]
  %s6 = inlined_call_operand.hbm [shape: f32[1,256], index: 6, kind: input, shape index: {}]
  %s7 = inlined_call_operand.hbm [shape: bf16[256,1024], index: 7, kind: input, shape index: {}]
  %s8 = inlined_call_operand.hbm [shape: f32[1,1024], index: 8, kind: input, shape index: {}]
  %s9 = inlined_call_operand.hbm [shape: f32[8,1024], index: 9, kind: output, shape index: {}]
  %s10 = sld [smem:[#allocation0]]
  $region90: #{tpu_custom_call.1} parent=0
    _
  %s12 = ssub.s32 1, %s10
  %s13 = scalar_select 0, %s12, %s10
  $region1: #{tpu_custom_call.1} parent=0
    #allocation2 [shape = 'u8[16384]{0}', space=vmem, size = 0x4000, scoped, tag = 'input window, operand 0, single buffered']
    #allocation3 [shape = 's32[1]{0}', space=sflag, size = 0x4, scoped, tag = 'scoped memory for tpu_custom_call.1']
    #allocation4 [shape = 's32[1]{0}', space=sflag, size = 0x4, scoped, tag = 'scoped memory for tpu_custom_call.1']
    #allocation5 [shape = 'u8[2097152]{0}', space=vmem, size = 0x200000, scoped, tag = 'input window, operand 1, single buffered']
    #allocation6 [shape = 's32[1]{0}', space=sflag, size = 0x4, scoped, tag = 'scoped memory for tpu_custom_call.1']
    #allocation7 [shape = 'u8[4096]{0}', space=vmem, size = 0x1000, scoped, tag = 'input window, operand 2, single buffered']
    #allocation8 [shape = 'u8[8192]{0}', space=vmem, size = 0x2000, scoped, tag = 'input window, operand 3, single buffered']
    #allocation9 [shape = 's32[1]{0}', space=sflag, size = 0x4, scoped, tag = 'scoped memory for tpu_custom_call.1']
    #allocation10 [shape = 'u8[524288]{0}', space=vmem, size = 0x80000, scoped, tag = 'input window, operand 4, single buffered']
    #allocation11 [shape = 'u8[65536]{0}', space=vmem, size = 0x10000, scoped, tag = 'input window, operand 5, single buffered']
    #allocation12 [shape = 's32[1]{0}', space=sflag, size = 0x4, scoped, tag = 'scoped memory for tpu_custom_call.1']
    #allocation13 [shape = 'u8[1024]{0}', space=vmem, size = 0x400, scoped, tag = 'input window, operand 6, single buffered']
    #allocation14 [shape = 'u8[524288]{0}', space=vmem, size = 0x80000, scoped, tag = 'input window, operand 7, single buffered']
    #allocation15 [shape = 's32[1]{0}', space=sflag, size = 0x4, scoped, tag = 'scoped memory for tpu_custom_call.1']
    #allocation16 [shape = 'u8[4096]{0}', space=vmem, size = 0x1000, scoped, tag = 'input window, operand 8, single buffered']
    #allocation17 [shape = 'u8[32768]{0}', space=vmem, size = 0x8000, scoped, tag = 'output window, operand 0, single buffered']
    %14 = vsyncpa [#allocation3], 0
    %15 = vsyncpa [#allocation6], 0
    %16 = vsyncpa [#allocation9], 0
    %17 = vsyncpa [#allocation12], 0
    %18 = vsyncpa [#allocation15], 0
    %19 = vsyncpa [#allocation4], 0
    // Predicated region
    $region2: #{tpu_custom_call.1} parent=1 // pred_check
      _
    $region3: #{tpu_custom_call.1} parent=1 // pred_check_branch
      %21 = sbr.rel (0) target = $region5
    $region4: #{tpu_custom_call.1} parent=1 // pred_region
      %s23 = ssub.s32 512, 512
      %24 = vsyncadd [#allocation3], %s23
      %s26 = sshll.u32 [#allocation2], 4
      %s27 = int_to_ptr.vmem [resolvable:$true] %s26
      %29 = dma.hbm_to_vmem [thread:$0]  %s0, 512, %s27, [#allocation3]
    $region5: #{tpu_custom_call.1} parent=1 // pred_fallthru
      _
    // Predicated region
    $region6: #{tpu_custom_call.1} parent=1 // pred_check
      _
    $region7: #{tpu_custom_call.1} parent=1 // pred_check_branch
      %31 = sbr.rel (0) target = $region9
    $region8: #{tpu_custom_call.1} parent=1 // pred_region
      %s33 = ssub.s32 65536, 65536
      %34 = vsyncadd [#allocation6], %s33
      %s35 = sshll.u32 [#allocation5], 4
      %s36 = int_to_ptr.vmem [resolvable:$true] %s35
      %41 = dma.hbm_to_vmem [thread:$0]  %s1, 65536, %s36, [#allocation6], 512, 512, 32
    $region9: #{tpu_custom_call.1} parent=1 // pred_fallthru
      _
    // Predicated region
    $region10: #{tpu_custom_call.1} parent=1 // pred_check
      _
    $region11: #{tpu_custom_call.1} parent=1 // pred_check_branch
      %43 = sbr.rel (0) target = $region13
    $region12: #{tpu_custom_call.1} parent=1 // pred_region
      %s45 = ssub.s32 128, 128
      %46 = vsyncadd [#allocation6], %s45
      %s48 = sshll.u32 [#allocation7], 4
      %s49 = int_to_ptr.vmem [resolvable:$true] %s48
      %51 = dma.hbm_to_vmem [thread:$0]  %s2, 128, %s49, [#allocation6]
    $region13: #{tpu_custom_call.1} parent=1 // pred_fallthru
      _
    // Predicated region
    $region14: #{tpu_custom_call.1} parent=1 // pred_check
      _
    $region15: #{tpu_custom_call.1} parent=1 // pred_check_branch
      %53 = sbr.rel (0) target = $region17
    $region16: #{tpu_custom_call.1} parent=1 // pred_region
      %s55 = ssub.s32 256, 256
      %56 = vsyncadd [#allocation9], %s55
      %s57 = sshll.u32 [#allocation8], 4
      %s58 = int_to_ptr.vmem [resolvable:$true] %s57
      %63 = dma.hbm_to_vmem [thread:$0]  %s3, 256, %s58, [#allocation9], 64, 64, 4
    $region17: #{tpu_custom_call.1} parent=1 // pred_fallthru
      _
    // Predicated region
    $region18: #{tpu_custom_call.1} parent=1 // pred_check
      _
    $region19: #{tpu_custom_call.1} parent=1 // pred_check_branch
      %65 = sbr.rel (0) target = $region21
    $region20: #{tpu_custom_call.1} parent=1 // pred_region
      %s67 = ssub.s32 16384, 16384
      %68 = vsyncadd [#allocation9], %s67
      %s69 = sshll.u32 [#allocation10], 4
      %s70 = int_to_ptr.vmem [resolvable:$true] %s69
      %75 = dma.hbm_to_vmem [thread:$0]  %s4, 16384, %s70, [#allocation9], 128, 128, 8
    $region21: #{tpu_custom_call.1} parent=1 // pred_fallthru
      _
    // Predicated region
    $region22: #{tpu_custom_call.1} parent=1 // pred_check
      _
    $region23: #{tpu_custom_call.1} parent=1 // pred_check_branch
      %77 = sbr.rel (0) target = $region25
    $region24: #{tpu_custom_call.1} parent=1 // pred_region
      %s79 = ssub.s32 2048, 2048
      %80 = vsyncadd [#allocation12], %s79
      %s81 = sshll.u32 [#allocation11], 4
      %s82 = int_to_ptr.vmem [resolvable:$true] %s81
      %87 = dma.hbm_to_vmem [thread:$0]  %s5, 2048, %s82, [#allocation12], 128, 128, 8
    $region25: #{tpu_custom_call.1} parent=1 // pred_fallthru
      _
    // Predicated region
    $region26: #{tpu_custom_call.1} parent=1 // pred_check
      _
    $region27: #{tpu_custom_call.1} parent=1 // pred_check_branch
      %89 = sbr.rel (0) target = $region29
    $region28: #{tpu_custom_call.1} parent=1 // pred_region
      %s91 = ssub.s32 32, 32
      %92 = vsyncadd [#allocation12], %s91
      %s94 = sshll.u32 [#allocation13], 4
      %s95 = int_to_ptr.vmem [resolvable:$true] %s94
      %97 = dma.hbm_to_vmem [thread:$0]  %s6, 32, %s95, [#allocation12]
    $region29: #{tpu_custom_call.1} parent=1 // pred_fallthru
      _
    // Predicated region
    $region30: #{tpu_custom_call.1} parent=1 // pred_check
      _
    $region31: #{tpu_custom_call.1} parent=1 // pred_check_branch
      %99 = sbr.rel (0) target = $region33
    $region32: #{tpu_custom_call.1} parent=1 // pred_region
      %s101 = ssub.s32 16384, 16384
      %102 = vsyncadd [#allocation15], %s101
      %s103 = sshll.u32 [#allocation14], 4
      %s104 = int_to_ptr.vmem [resolvable:$true] %s103
      %109 = dma.hbm_to_vmem [thread:$0]  %s7, 16384, %s104, [#allocation15], 512, 512, 32
    $region33: #{tpu_custom_call.1} parent=1 // pred_fallthru
      _
    // Predicated region
    $region34: #{tpu_custom_call.1} parent=1 // pred_check
      _
    $region35: #{tpu_custom_call.1} parent=1 // pred_check_branch
      %111 = sbr.rel (0) target = $region37
    $region36: #{tpu_custom_call.1} parent=1 // pred_region
      %s113 = ssub.s32 128, 128
      %114 = vsyncadd [#allocation15], %s113
      %s116 = sshll.u32 [#allocation16], 4
      %s117 = int_to_ptr.vmem [resolvable:$true] %s116
      %119 = dma.hbm_to_vmem [thread:$0]  %s8, 128, %s117, [#allocation15]
    $region37: #{tpu_custom_call.1} parent=1 // pred_fallthru
      _
    // Predicated region
    $region38: #{tpu_custom_call.1} parent=1 // pred_check
      _
    $region39: #{tpu_custom_call.1} parent=1 // pred_check_branch
      %121 = sbr.rel (0) target = $region41
    $region40: #{tpu_custom_call.1} parent=1 // pred_region
      %122 = dma.done [#allocation3], 512
    $region41: #{tpu_custom_call.1} parent=1 // pred_fallthru
      _
    // Predicated region
    $region42: #{tpu_custom_call.1} parent=1 // pred_check
      _
    $region43: #{tpu_custom_call.1} parent=1 // pred_check_branch
      %124 = sbr.rel (0) target = $region45
    $region44: #{tpu_custom_call.1} parent=1 // pred_region
      %125 = dma.done [#allocation6], 65536
    $region45: #{tpu_custom_call.1} parent=1 // pred_fallthru
      _
    // Predicated region
    $region46: #{tpu_custom_call.1} parent=1 // pred_check
      _
    $region47: #{tpu_custom_call.1} parent=1 // pred_check_branch
      %127 = sbr.rel (0) target = $region49
    $region48: #{tpu_custom_call.1} parent=1 // pred_region
      %128 = dma.done [#allocation6], 128
    $region49: #{tpu_custom_call.1} parent=1 // pred_fallthru
      _
    // Predicated region
    $region50: #{tpu_custom_call.1} parent=1 // pred_check
      _
    $region51: #{tpu_custom_call.1} parent=1 // pred_check_branch
      %130 = sbr.rel (0) target = $region53
    $region52: #{tpu_custom_call.1} parent=1 // pred_region
      %131 = dma.done [#allocation9], 256
    $region53: #{tpu_custom_call.1} parent=1 // pred_fallthru
      _
    // Predicated region
    $region54: #{tpu_custom_call.1} parent=1 // pred_check
      _
    $region55: #{tpu_custom_call.1} parent=1 // pred_check_branch
      %133 = sbr.rel (0) target = $region57
    $region56: #{tpu_custom_call.1} parent=1 // pred_region
      %134 = dma.done [#allocation9], 16384
    $region57: #{tpu_custom_call.1} parent=1 // pred_fallthru
      _
    // Predicated region
    $region58: #{tpu_custom_call.1} parent=1 // pred_check
      _
    $region59: #{tpu_custom_call.1} parent=1 // pred_check_branch
      %136 = sbr.rel (0) target = $region61
    $region60: #{tpu_custom_call.1} parent=1 // pred_region
      %137 = dma.done [#allocation12], 2048
    $region61: #{tpu_custom_call.1} parent=1 // pred_fallthru
      _
    // Predicated region
    $region62: #{tpu_custom_call.1} parent=1 // pred_check
      _
    $region63: #{tpu_custom_call.1} parent=1 // pred_check_branch
      %139 = sbr.rel (0) target = $region65
    $region64: #{tpu_custom_call.1} parent=1 // pred_region
      %140 = dma.done [#allocation12], 32
    $region65: #{tpu_custom_call.1} parent=1 // pred_fallthru
      _
    // Predicated region
    $region66: #{tpu_custom_call.1} parent=1 // pred_check
      _
    $region67: #{tpu_custom_call.1} parent=1 // pred_check_branch
      %142 = sbr.rel (0) target = $region69
    $region68: #{tpu_custom_call.1} parent=1 // pred_region
      %143 = dma.done [#allocation15], 16384
    $region69: #{tpu_custom_call.1} parent=1 // pred_fallthru
      _
    // Predicated region
    $region70: #{tpu_custom_call.1} parent=1 // pred_check
      _
    $region71: #{tpu_custom_call.1} parent=1 // pred_check_branch
      %145 = sbr.rel (0) target = $region73
    $region72: #{tpu_custom_call.1} parent=1 // pred_region
      %146 = dma.done [#allocation15], 128
    $region73: #{tpu_custom_call.1} parent=1 // pred_fallthru
      _
    %p148 = scmp.eq.s32.totalorder 0, 0
    // Predicated region
    $region74: #{tpu_custom_call.1} parent=1 // pred_check
      %p149 = pneg %p148
    $region75: #{tpu_custom_call.1} parent=1 // pred_check_branch
      %151 = sbr.rel (%p149) target = $region77
    $region76: #{tpu_custom_call.1} parent=1 // pred_region
      %152 = vst [vmem:[#allocation17] sm:$0xff] 0.0
      %153 = vst [vmem:[#allocation17 + $0x8] sm:$0xff] 0.0
      %154 = vst [vmem:[#allocation17 + $0x10] sm:$0xff] 0.0
      %155 = vst [vmem:[#allocation17 + $0x18] sm:$0xff] 0.0
      %156 = vst [vmem:[#allocation17 + $0x20] sm:$0xff] 0.0
      %157 = vst [vmem:[#allocation17 + $0x28] sm:$0xff] 0.0
      %158 = vst [vmem:[#allocation17 + $0x30] sm:$0xff] 0.0
      %159 = vst [vmem:[#allocation17 + $0x38] sm:$0xff] 0.0
    $region77: #{tpu_custom_call.1} parent=1 // pred_fallthru
      _
    %v160 = vld [vmem:[#allocation17] sm:$0xff]
    %v161 = vld [vmem:[#allocation17 + $0x8] sm:$0xff]
    %v162 = vld [vmem:[#allocation17 + $0x10] sm:$0xff]
    %v163 = vld [vmem:[#allocation17 + $0x18] sm:$0xff]
    %v164 = vld [vmem:[#allocation17 + $0x20] sm:$0xff]
    %v165 = vld [vmem:[#allocation17 + $0x28] sm:$0xff]
    %v166 = vld [vmem:[#allocation17 + $0x30] sm:$0xff]
    %v167 = vld [vmem:[#allocation17 + $0x38] sm:$0xff]
    %v168 = vld [vmem:[#allocation2] sm:$0xff]
    %v169 = vld [vmem:[#allocation2 + $0x8] sm:$0xff]
    %v170 = vld [vmem:[#allocation2 + $0x10] sm:$0xff]
    %v171 = vld [vmem:[#allocation2 + $0x18] sm:$0xff]
    %v172 = vld [vmem:[#allocation5] sm:$0xff]
    %v173 = vld [vmem:[#allocation5 + $0x8] sm:$0xff]
    %v174 = vld [vmem:[#allocation5 + $0x10] sm:$0xff]
    %v175 = vld [vmem:[#allocation5 + $0x18] sm:$0xff]
    %v176 = vld [vmem:[#allocation5 + $0x20] sm:$0xff]
    %v177 = vld [vmem:[#allocation5 + $0x28] sm:$0xff]
    %v178 = vld [vmem:[#allocation5 + $0x30] sm:$0xff]
    %v179 = vld [vmem:[#allocation5 + $0x38] sm:$0xff]
    %v180 = vld [vmem:[#allocation5 + $0x40] sm:$0xff]
    %v181 = vld [vmem:[#allocation5 + $0x48] sm:$0xff]
    %v182 = vld [vmem:[#allocation5 + $0x50] sm:$0xff]
    %v183 = vld [vmem:[#allocation5 + $0x58] sm:$0xff]
    %v184 = vld [vmem:[#allocation5 + $0x60] sm:$0xff]
    %v185 = vld [vmem:[#allocation5 + $0x68] sm:$0xff]
    %v186 = vld [vmem:[#allocation5 + $0x70] sm:$0xff]
    %v187 = vld [vmem:[#allocation5 + $0x78] sm:$0xff]
    %v188 = vld [vmem:[#allocation5 + $0x80] sm:$0xff]
    %v189 = vld [vmem:[#allocation5 + $0x88] sm:$0xff]
    %v190 = vld [vmem:[#allocation5 + $0x90] sm:$0xff]
    %v191 = vld [vmem:[#allocation5 + $0x98] sm:$0xff]
    %v192 = vld [vmem:[#allocation5 + $0xa0] sm:$0xff]
    %v193 = vld [vmem:[#allocation5 + $0xa8] sm:$0xff]
    %v194 = vld [vmem:[#allocation5 + $0xb0] sm:$0xff]
    %v195 = vld [vmem:[#allocation5 + $0xb8] sm:$0xff]
    %v196 = vld [vmem:[#allocation5 + $0xc0] sm:$0xff]
    %v197 = vld [vmem:[#allocation5 + $0xc8] sm:$0xff]
    %v198 = vld [vmem:[#allocation5 + $0xd0] sm:$0xff]
    %v199 = vld [vmem:[#allocation5 + $0xd8] sm:$0xff]
    %v200 = vld [vmem:[#allocation5 + $0xe0] sm:$0xff]
    %v201 = vld [vmem:[#allocation5 + $0xe8] sm:$0xff]
    %v202 = vld [vmem:[#allocation5 + $0xf0] sm:$0xff]
    %v203 = vld [vmem:[#allocation5 + $0xf8] sm:$0xff]
    %v204 = vld [vmem:[#allocation5 + $0x100] sm:$0xff]
    %v205 = vld [vmem:[#allocation5 + $0x108] sm:$0xff]
    %v206 = vld [vmem:[#allocation5 + $0x110] sm:$0xff]
    %v207 = vld [vmem:[#allocation5 + $0x118] sm:$0xff]
    %v208 = vld [vmem:[#allocation5 + $0x120] sm:$0xff]
    %v209 = vld [vmem:[#allocation5 + $0x128] sm:$0xff]
    %v210 = vld [vmem:[#allocation5 + $0x130] sm:$0xff]
    %v211 = vld [vmem:[#allocation5 + $0x138] sm:$0xff]
    %v212 = vld [vmem:[#allocation5 + $0x140] sm:$0xff]
    %v213 = vld [vmem:[#allocation5 + $0x148] sm:$0xff]
    %v214 = vld [vmem:[#allocation5 + $0x150] sm:$0xff]
    %v215 = vld [vmem:[#allocation5 + $0x158] sm:$0xff]
    %v216 = vld [vmem:[#allocation5 + $0x160] sm:$0xff]
    %v217 = vld [vmem:[#allocation5 + $0x168] sm:$0xff]
    %v218 = vld [vmem:[#allocation5 + $0x170] sm:$0xff]
    %v219 = vld [vmem:[#allocation5 + $0x178] sm:$0xff]
    %v220 = vld [vmem:[#allocation5 + $0x180] sm:$0xff]
    %v221 = vld [vmem:[#allocation5 + $0x188] sm:$0xff]
    %v222 = vld [vmem:[#allocation5 + $0x190] sm:$0xff]
    %v223 = vld [vmem:[#allocation5 + $0x198] sm:$0xff]
    %v224 = vld [vmem:[#allocation5 + $0x1a0] sm:$0xff]
    %v225 = vld [vmem:[#allocation5 + $0x1a8] sm:$0xff]
    %v226 = vld [vmem:[#allocation5 + $0x1b0] sm:$0xff]
    %v227 = vld [vmem:[#allocation5 + $0x1b8] sm:$0xff]
    %v228 = vld [vmem:[#allocation5 + $0x1c0] sm:$0xff]
    %v229 = vld [vmem:[#allocation5 + $0x1c8] sm:$0xff]
    %v230 = vld [vmem:[#allocation5 + $0x1d0] sm:$0xff]
    %v231 = vld [vmem:[#allocation5 + $0x1d8] sm:$0xff]
    %v232 = vld [vmem:[#allocation5 + $0x1e0] sm:$0xff]
    %v233 = vld [vmem:[#allocation5 + $0x1e8] sm:$0xff]
    %v234 = vld [vmem:[#allocation5 + $0x1f0] sm:$0xff]
    %v235 = vld [vmem:[#allocation5 + $0x1f8] sm:$0xff]
    %v236 = vld [vmem:[#allocation5 + $0x200] sm:$0xff]
    %v237 = vld [vmem:[#allocation5 + $0x208] sm:$0xff]
    %v238 = vld [vmem:[#allocation5 + $0x210] sm:$0xff]
    %v239 = vld [vmem:[#allocation5 + $0x218] sm:$0xff]
    %v240 = vld [vmem:[#allocation5 + $0x220] sm:$0xff]
    %v241 = vld [vmem:[#allocation5 + $0x228] sm:$0xff]
    %v242 = vld [vmem:[#allocation5 + $0x230] sm:$0xff]
    %v243 = vld [vmem:[#allocation5 + $0x238] sm:$0xff]
    %v244 = vld [vmem:[#allocation5 + $0x240] sm:$0xff]
    %v245 = vld [vmem:[#allocation5 + $0x248] sm:$0xff]
    %v246 = vld [vmem:[#allocation5 + $0x250] sm:$0xff]
    %v247 = vld [vmem:[#allocation5 + $0x258] sm:$0xff]
    %v248 = vld [vmem:[#allocation5 + $0x260] sm:$0xff]
    %v249 = vld [vmem:[#allocation5 + $0x268] sm:$0xff]
    %v250 = vld [vmem:[#allocation5 + $0x270] sm:$0xff]
    %v251 = vld [vmem:[#allocation5 + $0x278] sm:$0xff]
    %v252 = vld [vmem:[#allocation5 + $0x280] sm:$0xff]
    %v253 = vld [vmem:[#allocation5 + $0x288] sm:$0xff]
    %v254 = vld [vmem:[#allocation5 + $0x290] sm:$0xff]
    %v255 = vld [vmem:[#allocation5 + $0x298] sm:$0xff]
    %v256 = vld [vmem:[#allocation5 + $0x2a0] sm:$0xff]
    %v257 = vld [vmem:[#allocation5 + $0x2a8] sm:$0xff]
    %v258 = vld [vmem:[#allocation5 + $0x2b0] sm:$0xff]
    %v259 = vld [vmem:[#allocation5 + $0x2b8] sm:$0xff]
    %v260 = vld [vmem:[#allocation5 + $0x2c0] sm:$0xff]
    %v261 = vld [vmem:[#allocation5 + $0x2c8] sm:$0xff]
    %v262 = vld [vmem:[#allocation5 + $0x2d0] sm:$0xff]
    %v263 = vld [vmem:[#allocation5 + $0x2d8] sm:$0xff]
    %v264 = vld [vmem:[#allocation5 + $0x2e0] sm:$0xff]
    %v265 = vld [vmem:[#allocation5 + $0x2e8] sm:$0xff]
    %v266 = vld [vmem:[#allocation5 + $0x2f0] sm:$0xff]
    %v267 = vld [vmem:[#allocation5 + $0x2f8] sm:$0xff]
    %v268 = vld [vmem:[#allocation5 + $0x300] sm:$0xff]
    %v269 = vld [vmem:[#allocation5 + $0x308] sm:$0xff]
    %v270 = vld [vmem:[#allocation5 + $0x310] sm:$0xff]
    %v271 = vld [vmem:[#allocation5 + $0x318] sm:$0xff]
    %v272 = vld [vmem:[#allocation5 + $0x320] sm:$0xff]
    %v273 = vld [vmem:[#allocation5 + $0x328] sm:$0xff]
    %v274 = vld [vmem:[#allocation5 + $0x330] sm:$0xff]
    %v275 = vld [vmem:[#allocation5 + $0x338] sm:$0xff]
    %v276 = vld [vmem:[#allocation5 + $0x340] sm:$0xff]
    %v277 = vld [vmem:[#allocation5 + $0x348] sm:$0xff]
    %v278 = vld [vmem:[#allocation5 + $0x350] sm:$0xff]
    %v279 = vld [vmem:[#allocation5 + $0x358] sm:$0xff]
    %v280 = vld [vmem:[#allocation5 + $0x360] sm:$0xff]
    %v281 = vld [vmem:[#allocation5 + $0x368] sm:$0xff]
    %v282 = vld [vmem:[#allocation5 + $0x370] sm:$0xff]
    %v283 = vld [vmem:[#allocation5 + $0x378] sm:$0xff]
    %v284 = vld [vmem:[#allocation5 + $0x380] sm:$0xff]
    %v285 = vld [vmem:[#allocation5 + $0x388] sm:$0xff]
    %v286 = vld [vmem:[#allocation5 + $0x390] sm:$0xff]
    %v287 = vld [vmem:[#allocation5 + $0x398] sm:$0xff]
    %v288 = vld [vmem:[#allocation5 + $0x3a0] sm:$0xff]
    %v289 = vld [vmem:[#allocation5 + $0x3a8] sm:$0xff]
    %v290 = vld [vmem:[#allocation5 + $0x3b0] sm:$0xff]
    %v291 = vld [vmem:[#allocation5 + $0x3b8] sm:$0xff]
    %v292 = vld [vmem:[#allocation5 + $0x3c0] sm:$0xff]
    %v293 = vld [vmem:[#allocation5 + $0x3c8] sm:$0xff]
    %v294 = vld [vmem:[#allocation5 + $0x3d0] sm:$0xff]
    %v295 = vld [vmem:[#allocation5 + $0x3d8] sm:$0xff]
    %v296 = vld [vmem:[#allocation5 + $0x3e0] sm:$0xff]
    %v297 = vld [vmem:[#allocation5 + $0x3e8] sm:$0xff]
    %v298 = vld [vmem:[#allocation5 + $0x3f0] sm:$0xff]
    %v299 = vld [vmem:[#allocation5 + $0x3f8] sm:$0xff]
    %v300 = vld [vmem:[#allocation5 + $0x400] sm:$0xff]
    %v301 = vld [vmem:[#allocation5 + $0x408] sm:$0xff]
    %v302 = vld [vmem:[#allocation5 + $0x410] sm:$0xff]
    %v303 = vld [vmem:[#allocation5 + $0x418] sm:$0xff]
    %v304 = vld [vmem:[#allocation5 + $0x420] sm:$0xff]
    %v305 = vld [vmem:[#allocation5 + $0x428] sm:$0xff]
    %v306 = vld [vmem:[#allocation5 + $0x430] sm:$0xff]
    %v307 = vld [vmem:[#allocation5 + $0x438] sm:$0xff]
    %v308 = vld [vmem:[#allocation5 + $0x440] sm:$0xff]
    %v309 = vld [vmem:[#allocation5 + $0x448] sm:$0xff]
    %v310 = vld [vmem:[#allocation5 + $0x450] sm:$0xff]
    %v311 = vld [vmem:[#allocation5 + $0x458] sm:$0xff]
    %v312 = vld [vmem:[#allocation5 + $0x460] sm:$0xff]
    %v313 = vld [vmem:[#allocation5 + $0x468] sm:$0xff]
    %v314 = vld [vmem:[#allocation5 + $0x470] sm:$0xff]
    %v315 = vld [vmem:[#allocation5 + $0x478] sm:$0xff]
    %v316 = vld [vmem:[#allocation5 + $0x480] sm:$0xff]
    %v317 = vld [vmem:[#allocation5 + $0x488] sm:$0xff]
    %v318 = vld [vmem:[#allocation5 + $0x490] sm:$0xff]
    %v319 = vld [vmem:[#allocation5 + $0x498] sm:$0xff]
    %v320 = vld [vmem:[#allocation5 + $0x4a0] sm:$0xff]
    %v321 = vld [vmem:[#allocation5 + $0x4a8] sm:$0xff]
    %v322 = vld [vmem:[#allocation5 + $0x4b0] sm:$0xff]
    %v323 = vld [vmem:[#allocation5 + $0x4b8] sm:$0xff]
    %v324 = vld [vmem:[#allocation5 + $0x4c0] sm:$0xff]
    %v325 = vld [vmem:[#allocation5 + $0x4c8] sm:$0xff]
    %v326 = vld [vmem:[#allocation5 + $0x4d0] sm:$0xff]
    %v327 = vld [vmem:[#allocation5 + $0x4d8] sm:$0xff]
    %v328 = vld [vmem:[#allocation5 + $0x4e0] sm:$0xff]
    %v329 = vld [vmem:[#allocation5 + $0x4e8] sm:$0xff]
    %v330 = vld [vmem:[#allocation5 + $0x4f0] sm:$0xff]
    %v331 = vld [vmem:[#allocation5 + $0x4f8] sm:$0xff]
    %v332 = vld [vmem:[#allocation5 + $0x500] sm:$0xff]
    %v333 = vld [vmem:[#allocation5 + $0x508] sm:$0xff]
    %v334 = vld [vmem:[#allocation5 + $0x510] sm:$0xff]
    %v335 = vld [vmem:[#allocation5 + $0x518] sm:$0xff]
    %v336 = vld [vmem:[#allocation5 + $0x520] sm:$0xff]
    %v337 = vld [vmem:[#allocation5 + $0x528] sm:$0xff]
    %v338 = vld [vmem:[#allocation5 + $0x530] sm:$0xff]
    %v339 = vld [vmem:[#allocation5 + $0x538] sm:$0xff]
    %v340 = vld [vmem:[#allocation5 + $0x540] sm:$0xff]
    %v341 = vld [vmem:[#allocation5 + $0x548] sm:$0xff]
    %v342 = vld [vmem:[#allocation5 + $0x550] sm:$0xff]
    %v343 = vld [vmem:[#allocation5 + $0x558] sm:$0xff]
    %v344 = vld [vmem:[#allocation5 + $0x560] sm:$0xff]
    %v345 = vld [vmem:[#allocation5 + $0x568] sm:$0xff]
    %v346 = vld [vmem:[#allocation5 + $0x570] sm:$0xff]
    %v347 = vld [vmem:[#allocation5 + $0x578] sm:$0xff]
    %v348 = vld [vmem:[#allocation5 + $0x580] sm:$0xff]
    %v349 = vld [vmem:[#allocation5 + $0x588] sm:$0xff]
    %v350 = vld [vmem:[#allocation5 + $0x590] sm:$0xff]
    %v351 = vld [vmem:[#allocation5 + $0x598] sm:$0xff]
    %v352 = vld [vmem:[#allocation5 + $0x5a0] sm:$0xff]
    %v353 = vld [vmem:[#allocation5 + $0x5a8] sm:$0xff]
    %v354 = vld [vmem:[#allocation5 + $0x5b0] sm:$0xff]
    %v355 = vld [vmem:[#allocation5 + $0x5b8] sm:$0xff]
    %v356 = vld [vmem:[#allocation5 + $0x5c0] sm:$0xff]
    %v357 = vld [vmem:[#allocation5 + $0x5c8] sm:$0xff]
    %v358 = vld [vmem:[#allocation5 + $0x5d0] sm:$0xff]
    %v359 = vld [vmem:[#allocation5 + $0x5d8] sm:$0xff]
    %v360 = vld [vmem:[#allocation5 + $0x5e0] sm:$0xff]
    %v361 = vld [vmem:[#allocation5 + $0x5e8] sm:$0xff]
    %v362 = vld [vmem:[#allocation5 + $0x5f0] sm:$0xff]
    %v363 = vld [vmem:[#allocation5 + $0x5f8] sm:$0xff]
    %v364 = vld [vmem:[#allocation5 + $0x600] sm:$0xff]
    %v365 = vld [vmem:[#allocation5 + $0x608] sm:$0xff]
    %v366 = vld [vmem:[#allocation5 + $0x610] sm:$0xff]
    %v367 = vld [vmem:[#allocation5 + $0x618] sm:$0xff]
    %v368 = vld [vmem:[#allocation5 + $0x620] sm:$0xff]
    %v369 = vld [vmem:[#allocation5 + $0x628] sm:$0xff]
    %v370 = vld [vmem:[#allocation5 + $0x630] sm:$0xff]
    %v371 = vld [vmem:[#allocation5 + $0x638] sm:$0xff]
    %v372 = vld [vmem:[#allocation5 + $0x640] sm:$0xff]
    %v373 = vld [vmem:[#allocation5 + $0x648] sm:$0xff]
    %v374 = vld [vmem:[#allocation5 + $0x650] sm:$0xff]
    %v375 = vld [vmem:[#allocation5 + $0x658] sm:$0xff]
    %v376 = vld [vmem:[#allocation5 + $0x660] sm:$0xff]
    %v377 = vld [vmem:[#allocation5 + $0x668] sm:$0xff]
    %v378 = vld [vmem:[#allocation5 + $0x670] sm:$0xff]
    %v379 = vld [vmem:[#allocation5 + $0x678] sm:$0xff]
    %v380 = vld [vmem:[#allocation5 + $0x680] sm:$0xff]
    %v381 = vld [vmem:[#allocation5 + $0x688] sm:$0xff]
    %v382 = vld [vmem:[#allocation5 + $0x690] sm:$0xff]
    %v383 = vld [vmem:[#allocation5 + $0x698] sm:$0xff]
    %v384 = vld [vmem:[#allocation5 + $0x6a0] sm:$0xff]
    %v385 = vld [vmem:[#allocation5 + $0x6a8] sm:$0xff]
    %v386 = vld [vmem:[#allocation5 + $0x6b0] sm:$0xff]
    %v387 = vld [vmem:[#allocation5 + $0x6b8] sm:$0xff]
    %v388 = vld [vmem:[#allocation5 + $0x6c0] sm:$0xff]
    %v389 = vld [vmem:[#allocation5 + $0x6c8] sm:$0xff]
    %v390 = vld [vmem:[#allocation5 + $0x6d0] sm:$0xff]
    %v391 = vld [vmem:[#allocation5 + $0x6d8] sm:$0xff]
    %v392 = vld [vmem:[#allocation5 + $0x6e0] sm:$0xff]
    %v393 = vld [vmem:[#allocation5 + $0x6e8] sm:$0xff]
    %v394 = vld [vmem:[#allocation5 + $0x6f0] sm:$0xff]
    %v395 = vld [vmem:[#allocation5 + $0x6f8] sm:$0xff]
    %v396 = vld [vmem:[#allocation5 + $0x700] sm:$0xff]
    %v397 = vld [vmem:[#allocation5 + $0x708] sm:$0xff]
    %v398 = vld [vmem:[#allocation5 + $0x710] sm:$0xff]
    %v399 = vld [vmem:[#allocation5 + $0x718] sm:$0xff]
    %v400 = vld [vmem:[#allocation5 + $0x720] sm:$0xff]
    %v401 = vld [vmem:[#allocation5 + $0x728] sm:$0xff]
    %v402 = vld [vmem:[#allocation5 + $0x730] sm:$0xff]
    %v403 = vld [vmem:[#allocation5 + $0x738] sm:$0xff]
    %v404 = vld [vmem:[#allocation5 + $0x740] sm:$0xff]
    %v405 = vld [vmem:[#allocation5 + $0x748] sm:$0xff]
    %v406 = vld [vmem:[#allocation5 + $0x750] sm:$0xff]
    %v407 = vld [vmem:[#allocation5 + $0x758] sm:$0xff]
    %v408 = vld [vmem:[#allocation5 + $0x760] sm:$0xff]
    %v409 = vld [vmem:[#allocation5 + $0x768] sm:$0xff]
    %v410 = vld [vmem:[#allocation5 + $0x770] sm:$0xff]
    %v411 = vld [vmem:[#allocation5 + $0x778] sm:$0xff]
    %v412 = vld [vmem:[#allocation5 + $0x780] sm:$0xff]
    %v413 = vld [vmem:[#allocation5 + $0x788] sm:$0xff]
    %v414 = vld [vmem:[#allocation5 + $0x790] sm:$0xff]
    %v415 = vld [vmem:[#allocation5 + $0x798] sm:$0xff]
    %v416 = vld [vmem:[#allocation5 + $0x7a0] sm:$0xff]
    %v417 = vld [vmem:[#allocation5 + $0x7a8] sm:$0xff]
    %v418 = vld [vmem:[#allocation5 + $0x7b0] sm:$0xff]
    %v419 = vld [vmem:[#allocation5 + $0x7b8] sm:$0xff]
    %v420 = vld [vmem:[#allocation5 + $0x7c0] sm:$0xff]
    %v421 = vld [vmem:[#allocation5 + $0x7c8] sm:$0xff]
    %v422 = vld [vmem:[#allocation5 + $0x7d0] sm:$0xff]
    %v423 = vld [vmem:[#allocation5 + $0x7d8] sm:$0xff]
    %v424 = vld [vmem:[#allocation5 + $0x7e0] sm:$0xff]
    %v425 = vld [vmem:[#allocation5 + $0x7e8] sm:$0xff]
    %v426 = vld [vmem:[#allocation5 + $0x7f0] sm:$0xff]
    %v427 = vld [vmem:[#allocation5 + $0x7f8] sm:$0xff]
    %v428 = vld [vmem:[#allocation5 + $0x800] sm:$0xff]
    %v429 = vld [vmem:[#allocation5 + $0x808] sm:$0xff]
    %v430 = vld [vmem:[#allocation5 + $0x810] sm:$0xff]
    %v431 = vld [vmem:[#allocation5 + $0x818] sm:$0xff]
    %v432 = vld [vmem:[#allocation5 + $0x820] sm:$0xff]
    %v433 = vld [vmem:[#allocation5 + $0x828] sm:$0xff]
    %v434 = vld [vmem:[#allocation5 + $0x830] sm:$0xff]
    %v435 = vld [vmem:[#allocation5 + $0x838] sm:$0xff]
    %v436 = vld [vmem:[#allocation5 + $0x840] sm:$0xff]
    %v437 = vld [vmem:[#allocation5 + $0x848] sm:$0xff]
    %v438 = vld [vmem:[#allocation5 + $0x850] sm:$0xff]
    %v439 = vld [vmem:[#allocation5 + $0x858] sm:$0xff]
    %v440 = vld [vmem:[#allocation5 + $0x860] sm:$0xff]
    %v441 = vld [vmem:[#allocation5 + $0x868] sm:$0xff]
    %v442 = vld [vmem:[#allocation5 + $0x870] sm:$0xff]
    %v443 = vld [vmem:[#allocation5 + $0x878] sm:$0xff]
    %v444 = vld [vmem:[#allocation5 + $0x880] sm:$0xff]
    %v445 = vld [vmem:[#allocation5 + $0x888] sm:$0xff]
    %v446 = vld [vmem:[#allocation5 + $0x890] sm:$0xff]
    %v447 = vld [vmem:[#allocation5 + $0x898] sm:$0xff]
    %v448 = vld [vmem:[#allocation5 + $0x8a0] sm:$0xff]
    %v449 = vld [vmem:[#allocation5 + $0x8a8] sm:$0xff]
    %v450 = vld [vmem:[#allocation5 + $0x8b0] sm:$0xff]
    %v451 = vld [vmem:[#allocation5 + $0x8b8] sm:$0xff]
    %v452 = vld [vmem:[#allocation5 + $0x8c0] sm:$0xff]
    %v453 = vld [vmem:[#allocation5 + $0x8c8] sm:$0xff]
    %v454 = vld [vmem:[#allocation5 + $0x8d0] sm:$0xff]
    %v455 = vld [vmem:[#allocation5 + $0x8d8] sm:$0xff]
    %v456 = vld [vmem:[#allocation5 + $0x8e0] sm:$0xff]
    %v457 = vld [vmem:[#allocation5 + $0x8e8] sm:$0xff]
    %v458 = vld [vmem:[#allocation5 + $0x8f0] sm:$0xff]
    %v459 = vld [vmem:[#allocation5 + $0x8f8] sm:$0xff]
    %v460 = vld [vmem:[#allocation5 + $0x900] sm:$0xff]
    %v461 = vld [vmem:[#allocation5 + $0x908] sm:$0xff]
    %v462 = vld [vmem:[#allocation5 + $0x910] sm:$0xff]
    %v463 = vld [vmem:[#allocation5 + $0x918] sm:$0xff]
    %v464 = vld [vmem:[#allocation5 + $0x920] sm:$0xff]
    %v465 = vld [vmem:[#allocation5 + $0x928] sm:$0xff]
    %v466 = vld [vmem:[#allocation5 + $0x930] sm:$0xff]
    %v467 = vld [vmem:[#allocation5 + $0x938] sm:$0xff]
    %v468 = vld [vmem:[#allocation5 + $0x940] sm:$0xff]
    %v469 = vld [vmem:[#allocation5 + $0x948] sm:$0xff]
    %v470 = vld [vmem:[#allocation5 + $0x950] sm:$0xff]
    %v471 = vld [vmem:[#allocation5 + $0x958] sm:$0xff]
    %v472 = vld [vmem:[#allocation5 + $0x960] sm:$0xff]
    %v473 = vld [vmem:[#allocation5 + $0x968] sm:$0xff]
    %v474 = vld [vmem:[#allocation5 + $0x970] sm:$0xff]
    %v475 = vld [vmem:[#allocation5 + $0x978] sm:$0xff]
    %v476 = vld [vmem:[#allocation5 + $0x980] sm:$0xff]
    %v477 = vld [vmem:[#allocation5 + $0x988] sm:$0xff]
    %v478 = vld [vmem:[#allocation5 + $0x990] sm:$0xff]
    %v479 = vld [vmem:[#allocation5 + $0x998] sm:$0xff]
    %v480 = vld [vmem:[#allocation5 + $0x9a0] sm:$0xff]
    %v481 = vld [vmem:[#allocation5 + $0x9a8] sm:$0xff]
    %v482 = vld [vmem:[#allocation5 + $0x9b0] sm:$0xff]
    %v483 = vld [vmem:[#allocation5 + $0x9b8] sm:$0xff]
    %v484 = vld [vmem:[#allocation5 + $0x9c0] sm:$0xff]
    %v485 = vld [vmem:[#allocation5 + $0x9c8] sm:$0xff]
    %v486 = vld [vmem:[#allocation5 + $0x9d0] sm:$0xff]
    %v487 = vld [vmem:[#allocation5 + $0x9d8] sm:$0xff]
    %v488 = vld [vmem:[#allocation5 + $0x9e0] sm:$0xff]
    %v489 = vld [vmem:[#allocation5 + $0x9e8] sm:$0xff]
    %v490 = vld [vmem:[#allocation5 + $0x9f0] sm:$0xff]
    %v491 = vld [vmem:[#allocation5 + $0x9f8] sm:$0xff]
    %v492 = vld [vmem:[#allocation5 + $0xa00] sm:$0xff]
    %v493 = vld [vmem:[#allocation5 + $0xa08] sm:$0xff]
    %v494 = vld [vmem:[#allocation5 + $0xa10] sm:$0xff]
    %v495 = vld [vmem:[#allocation5 + $0xa18] sm:$0xff]
    %v496 = vld [vmem:[#allocation5 + $0xa20] sm:$0xff]
    %v497 = vld [vmem:[#allocation5 + $0xa28] sm:$0xff]
    %v498 = vld [vmem:[#allocation5 + $0xa30] sm:$0xff]
    %v499 = vld [vmem:[#allocation5 + $0xa38] sm:$0xff]
    %v500 = vld [vmem:[#allocation5 + $0xa40] sm:$0xff]
    %v501 = vld [vmem:[#allocation5 + $0xa48] sm:$0xff]
    %v502 = vld [vmem:[#allocation5 + $0xa50] sm:$0xff]
    %v503 = vld [vmem:[#allocation5 + $0xa58] sm:$0xff]
    %v504 = vld [vmem:[#allocation5 + $0xa60] sm:$0xff]
    %v505 = vld [vmem:[#allocation5 + $0xa68] sm:$0xff]
    %v506 = vld [vmem:[#allocation5 + $0xa70] sm:$0xff]
    %v507 = vld [vmem:[#allocation5 + $0xa78] sm:$0xff]
    %v508 = vld [vmem:[#allocation5 + $0xa80] sm:$0xff]
    %v509 = vld [vmem:[#allocation5 + $0xa88] sm:$0xff]
    %v510 = vld [vmem:[#allocation5 + $0xa90] sm:$0xff]
    %v511 = vld [vmem:[#allocation5 + $0xa98] sm:$0xff]
    %v512 = vld [vmem:[#allocation5 + $0xaa0] sm:$0xff]
    %v513 = vld [vmem:[#allocation5 + $0xaa8] sm:$0xff]
    %v514 = vld [vmem:[#allocation5 + $0xab0] sm:$0xff]
    %v515 = vld [vmem:[#allocation5 + $0xab8] sm:$0xff]
    %v516 = vld [vmem:[#allocation5 + $0xac0] sm:$0xff]
    %v517 = vld [vmem:[#allocation5 + $0xac8] sm:$0xff]
    %v518 = vld [vmem:[#allocation5 + $0xad0] sm:$0xff]
    %v519 = vld [vmem:[#allocation5 + $0xad8] sm:$0xff]
    %v520 = vld [vmem:[#allocation5 + $0xae0] sm:$0xff]
    %v521 = vld [vmem:[#allocation5 + $0xae8] sm:$0xff]
    %v522 = vld [vmem:[#allocation5 + $0xaf0] sm:$0xff]
    %v523 = vld [vmem:[#allocation5 + $0xaf8] sm:$0xff]
    %v524 = vld [vmem:[#allocation5 + $0xb00] sm:$0xff]
    %v525 = vld [vmem:[#allocation5 + $0xb08] sm:$0xff]
    %v526 = vld [vmem:[#allocation5 + $0xb10] sm:$0xff]
    %v527 = vld [vmem:[#allocation5 + $0xb18] sm:$0xff]
    %v528 = vld [vmem:[#allocation5 + $0xb20] sm:$0xff]
    %v529 = vld [vmem:[#allocation5 + $0xb28] sm:$0xff]
    %v530 = vld [vmem:[#allocation5 + $0xb30] sm:$0xff]
    %v531 = vld [vmem:[#allocation5 + $0xb38] sm:$0xff]
    %v532 = vld [vmem:[#allocation5 + $0xb40] sm:$0xff]
    %v533 = vld [vmem:[#allocation5 + $0xb48] sm:$0xff]
    %v534 = vld [vmem:[#allocation5 + $0xb50] sm:$0xff]
    %v535 = vld [vmem:[#allocation5 + $0xb58] sm:$0xff]
    %v536 = vld [vmem:[#allocation5 + $0xb60] sm:$0xff]
    %v537 = vld [vmem:[#allocation5 + $0xb68] sm:$0xff]
    %v538 = vld [vmem:[#allocation5 + $0xb70] sm:$0xff]
    %v539 = vld [vmem:[#allocation5 + $0xb78] sm:$0xff]
    %v540 = vld [vmem:[#allocation5 + $0xb80] sm:$0xff]
    %v541 = vld [vmem:[#allocation5 + $0xb88] sm:$0xff]
    %v542 = vld [vmem:[#allocation5 + $0xb90] sm:$0xff]
    %v543 = vld [vmem:[#allocation5 + $0xb98] sm:$0xff]
    %v544 = vld [vmem:[#allocation5 + $0xba0] sm:$0xff]
    %v545 = vld [vmem:[#allocation5 + $0xba8] sm:$0xff]
    %v546 = vld [vmem:[#allocation5 + $0xbb0] sm:$0xff]
    %v547 = vld [vmem:[#allocation5 + $0xbb8] sm:$0xff]
    %v548 = vld [vmem:[#allocation5 + $0xbc0] sm:$0xff]
    %v549 = vld [vmem:[#allocation5 + $0xbc8] sm:$0xff]
    %v550 = vld [vmem:[#allocation5 + $0xbd0] sm:$0xff]
    %v551 = vld [vmem:[#allocation5 + $0xbd8] sm:$0xff]
    %v552 = vld [vmem:[#allocation5 + $0xbe0] sm:$0xff]
    %v553 = vld [vmem:[#allocation5 + $0xbe8] sm:$0xff]
    %v554 = vld [vmem:[#allocation5 + $0xbf0] sm:$0xff]
    %v555 = vld [vmem:[#allocation5 + $0xbf8] sm:$0xff]
    %v556 = vld [vmem:[#allocation5 + $0xc00] sm:$0xff]
    %v557 = vld [vmem:[#allocation5 + $0xc08] sm:$0xff]
    %v558 = vld [vmem:[#allocation5 + $0xc10] sm:$0xff]
    %v559 = vld [vmem:[#allocation5 + $0xc18] sm:$0xff]
    %v560 = vld [vmem:[#allocation5 + $0xc20] sm:$0xff]
    %v561 = vld [vmem:[#allocation5 + $0xc28] sm:$0xff]
    %v562 = vld [vmem:[#allocation5 + $0xc30] sm:$0xff]
    %v563 = vld [vmem:[#allocation5 + $0xc38] sm:$0xff]
    %v564 = vld [vmem:[#allocation5 + $0xc40] sm:$0xff]
    %v565 = vld [vmem:[#allocation5 + $0xc48] sm:$0xff]
    %v566 = vld [vmem:[#allocation5 + $0xc50] sm:$0xff]
    %v567 = vld [vmem:[#allocation5 + $0xc58] sm:$0xff]
    %v568 = vld [vmem:[#allocation5 + $0xc60] sm:$0xff]
    %v569 = vld [vmem:[#allocation5 + $0xc68] sm:$0xff]
    %v570 = vld [vmem:[#allocation5 + $0xc70] sm:$0xff]
    %v571 = vld [vmem:[#allocation5 + $0xc78] sm:$0xff]
    %v572 = vld [vmem:[#allocation5 + $0xc80] sm:$0xff]
    %v573 = vld [vmem:[#allocation5 + $0xc88] sm:$0xff]
    %v574 = vld [vmem:[#allocation5 + $0xc90] sm:$0xff]
    %v575 = vld [vmem:[#allocation5 + $0xc98] sm:$0xff]
    %v576 = vld [vmem:[#allocation5 + $0xca0] sm:$0xff]
    %v577 = vld [vmem:[#allocation5 + $0xca8] sm:$0xff]
    %v578 = vld [vmem:[#allocation5 + $0xcb0] sm:$0xff]
    %v579 = vld [vmem:[#allocation5 + $0xcb8] sm:$0xff]
    %v580 = vld [vmem:[#allocation5 + $0xcc0] sm:$0xff]
    %v581 = vld [vmem:[#allocation5 + $0xcc8] sm:$0xff]
    %v582 = vld [vmem:[#allocation5 + $0xcd0] sm:$0xff]
    %v583 = vld [vmem:[#allocation5 + $0xcd8] sm:$0xff]
    %v584 = vld [vmem:[#allocation5 + $0xce0] sm:$0xff]
    %v585 = vld [vmem:[#allocation5 + $0xce8] sm:$0xff]
    %v586 = vld [vmem:[#allocation5 + $0xcf0] sm:$0xff]
    %v587 = vld [vmem:[#allocation5 + $0xcf8] sm:$0xff]
    %v588 = vld [vmem:[#allocation5 + $0xd00] sm:$0xff]
    %v589 = vld [vmem:[#allocation5 + $0xd08] sm:$0xff]
    %v590 = vld [vmem:[#allocation5 + $0xd10] sm:$0xff]
    %v591 = vld [vmem:[#allocation5 + $0xd18] sm:$0xff]
    %v592 = vld [vmem:[#allocation5 + $0xd20] sm:$0xff]
    %v593 = vld [vmem:[#allocation5 + $0xd28] sm:$0xff]
    %v594 = vld [vmem:[#allocation5 + $0xd30] sm:$0xff]
    %v595 = vld [vmem:[#allocation5 + $0xd38] sm:$0xff]
    %v596 = vld [vmem:[#allocation5 + $0xd40] sm:$0xff]
    %v597 = vld [vmem:[#allocation5 + $0xd48] sm:$0xff]
    %v598 = vld [vmem:[#allocation5 + $0xd50] sm:$0xff]
    %v599 = vld [vmem:[#allocation5 + $0xd58] sm:$0xff]
    %v600 = vld [vmem:[#allocation5 + $0xd60] sm:$0xff]
    %v601 = vld [vmem:[#allocation5 + $0xd68] sm:$0xff]
    %v602 = vld [vmem:[#allocation5 + $0xd70] sm:$0xff]
    %v603 = vld [vmem:[#allocation5 + $0xd78] sm:$0xff]
    %v604 = vld [vmem:[#allocation5 + $0xd80] sm:$0xff]
    %v605 = vld [vmem:[#allocation5 + $0xd88] sm:$0xff]
    %v606 = vld [vmem:[#allocation5 + $0xd90] sm:$0xff]
    %v607 = vld [vmem:[#allocation5 + $0xd98] sm:$0xff]
    %v608 = vld [vmem:[#allocation5 + $0xda0] sm:$0xff]
    %v609 = vld [vmem:[#allocation5 + $0xda8] sm:$0xff]
    %v610 = vld [vmem:[#allocation5 + $0xdb0] sm:$0xff]
    %v611 = vld [vmem:[#allocation5 + $0xdb8] sm:$0xff]
    %v612 = vld [vmem:[#allocation5 + $0xdc0] sm:$0xff]
    %v613 = vld [vmem:[#allocation5 + $0xdc8] sm:$0xff]
    %v614 = vld [vmem:[#allocation5 + $0xdd0] sm:$0xff]
    %v615 = vld [vmem:[#allocation5 + $0xdd8] sm:$0xff]
    %v616 = vld [vmem:[#allocation5 + $0xde0] sm:$0xff]
    %v617 = vld [vmem:[#allocation5 + $0xde8] sm:$0xff]
    %v618 = vld [vmem:[#allocation5 + $0xdf0] sm:$0xff]
    %v619 = vld [vmem:[#allocation5 + $0xdf8] sm:$0xff]
    %v620 = vld [vmem:[#allocation5 + $0xe00] sm:$0xff]
    %v621 = vld [vmem:[#allocation5 + $0xe08] sm:$0xff]
    %v622 = vld [vmem:[#allocation5 + $0xe10] sm:$0xff]
    %v623 = vld [vmem:[#allocation5 + $0xe18] sm:$0xff]
    %v624 = vld [vmem:[#allocation5 + $0xe20] sm:$0xff]
    %v625 = vld [vmem:[#allocation5 + $0xe28] sm:$0xff]
    %v626 = vld [vmem:[#allocation5 + $0xe30] sm:$0xff]
    %v627 = vld [vmem:[#allocation5 + $0xe38] sm:$0xff]
    %v628 = vld [vmem:[#allocation5 + $0xe40] sm:$0xff]
    %v629 = vld [vmem:[#allocation5 + $0xe48] sm:$0xff]
    %v630 = vld [vmem:[#allocation5 + $0xe50] sm:$0xff]
    %v631 = vld [vmem:[#allocation5 + $0xe58] sm:$0xff]
    %v632 = vld [vmem:[#allocation5 + $0xe60] sm:$0xff]
    %v633 = vld [vmem:[#allocation5 + $0xe68] sm:$0xff]
    %v634 = vld [vmem:[#allocation5 + $0xe70] sm:$0xff]
    %v635 = vld [vmem:[#allocation5 + $0xe78] sm:$0xff]
    %v636 = vld [vmem:[#allocation5 + $0xe80] sm:$0xff]
    %v637 = vld [vmem:[#allocation5 + $0xe88] sm:$0xff]
    %v638 = vld [vmem:[#allocation5 + $0xe90] sm:$0xff]
    %v639 = vld [vmem:[#allocation5 + $0xe98] sm:$0xff]
    %v640 = vld [vmem:[#allocation5 + $0xea0] sm:$0xff]
    %v641 = vld [vmem:[#allocation5 + $0xea8] sm:$0xff]
    %v642 = vld [vmem:[#allocation5 + $0xeb0] sm:$0xff]
    %v643 = vld [vmem:[#allocation5 + $0xeb8] sm:$0xff]
    %v644 = vld [vmem:[#allocation5 + $0xec0] sm:$0xff]
    %v645 = vld [vmem:[#allocation5 + $0xec8] sm:$0xff]
    %v646 = vld [vmem:[#allocation5 + $0xed0] sm:$0xff]
    %v647 = vld [vmem:[#allocation5 + $0xed8] sm:$0xff]
    %v648 = vld [vmem:[#allocation5 + $0xee0] sm:$0xff]
    %v649 = vld [vmem:[#allocation5 + $0xee8] sm:$0xff]
    %v650 = vld [vmem:[#allocation5 + $0xef0] sm:$0xff]
    %v651 = vld [vmem:[#allocation5 + $0xef8] sm:$0xff]
    %v652 = vld [vmem:[#allocation5 + $0xf00] sm:$0xff]
    %v653 = vld [vmem:[#allocation5 + $0xf08] sm:$0xff]
    %v654 = vld [vmem:[#allocation5 + $0xf10] sm:$0xff]
    %v655 = vld [vmem:[#allocation5 + $0xf18] sm:$0xff]
    %v656 = vld [vmem:[#allocation5 + $0xf20] sm:$0xff]
    %v657 = vld [vmem:[#allocation5 + $0xf28] sm:$0xff]
    %v658 = vld [vmem:[#allocation5 + $0xf30] sm:$0xff]
    %v659 = vld [vmem:[#allocation5 + $0xf38] sm:$0xff]
    %v660 = vld [vmem:[#allocation5 + $0xf40] sm:$0xff]
    %v661 = vld [vmem:[#allocation5 + $0xf48] sm:$0xff]
    %v662 = vld [vmem:[#allocation5 + $0xf50] sm:$0xff]
    %v663 = vld [vmem:[#allocation5 + $0xf58] sm:$0xff]
    %v664 = vld [vmem:[#allocation5 + $0xf60] sm:$0xff]
    %v665 = vld [vmem:[#allocation5 + $0xf68] sm:$0xff]
    %v666 = vld [vmem:[#allocation5 + $0xf70] sm:$0xff]
    %v667 = vld [vmem:[#allocation5 + $0xf78] sm:$0xff]
    %v668 = vld [vmem:[#allocation5 + $0xf80] sm:$0xff]
    %v669 = vld [vmem:[#allocation5 + $0xf88] sm:$0xff]
    %v670 = vld [vmem:[#allocation5 + $0xf90] sm:$0xff]
    %v671 = vld [vmem:[#allocation5 + $0xf98] sm:$0xff]
    %v672 = vld [vmem:[#allocation5 + $0xfa0] sm:$0xff]
    %v673 = vld [vmem:[#allocation5 + $0xfa8] sm:$0xff]
    %v674 = vld [vmem:[#allocation5 + $0xfb0] sm:$0xff]
    %v675 = vld [vmem:[#allocation5 + $0xfb8] sm:$0xff]
    %v676 = vld [vmem:[#allocation5 + $0xfc0] sm:$0xff]
    %v677 = vld [vmem:[#allocation5 + $0xfc8] sm:$0xff]
    %v678 = vld [vmem:[#allocation5 + $0xfd0] sm:$0xff]
    %v679 = vld [vmem:[#allocation5 + $0xfd8] sm:$0xff]
    %v680 = vld [vmem:[#allocation5 + $0xfe0] sm:$0xff]
    %v681 = vld [vmem:[#allocation5 + $0xfe8] sm:$0xff]
    %v682 = vld [vmem:[#allocation5 + $0xff0] sm:$0xff]
    %v683 = vld [vmem:[#allocation5 + $0xff8] sm:$0xff]
    %v688 = vunpack.c.l.b16 %v168
    %v689 = vunpack.c.h.b16 %v168
    %v690 = vunpack.c.l.b16 %v169
    %v691 = vunpack.c.h.b16 %v169
    %v692 = vunpack.c.l.b16 %v170
    %v693 = vunpack.c.h.b16 %v170
    %v694 = vunpack.c.l.b16 %v171
    %v695 = vunpack.c.h.b16 %v171
    %v696 = vpack.c.b16 %v688, %v688
    %v697 = vpack.c.b16 %v689, %v689
    %v698 = vpack.c.b16 %v690, %v690
    %v699 = vpack.c.b16 %v691, %v691
    %v700 = vpack.c.b16 %v692, %v692
    %v701 = vpack.c.b16 %v693, %v693
    %v702 = vpack.c.b16 %v694, %v694
    %v703 = vpack.c.b16 %v695, %v695
    %v1224 = vunpack.c.l.b16 %v172
    %v1225 = vunpack.c.h.b16 %v172
    %v1226 = vunpack.c.l.b16 %v173
    %v1227 = vunpack.c.h.b16 %v173
    %v1228 = vunpack.c.l.b16 %v174
    %v1229 = vunpack.c.h.b16 %v174
    %v1230 = vunpack.c.l.b16 %v175
    %v1231 = vunpack.c.h.b16 %v175
    %v1232 = vunpack.c.l.b16 %v176
    %v1233 = vunpack.c.h.b16 %v176
    %v1234 = vunpack.c.l.b16 %v177
    %v1235 = vunpack.c.h.b16 %v177
    %v1236 = vunpack.c.l.b16 %v178
    %v1237 = vunpack.c.h.b16 %v178
    %v1238 = vunpack.c.l.b16 %v179
    %v1239 = vunpack.c.h.b16 %v179
    %v1240 = vunpack.c.l.b16 %v180
    %v1241 = vunpack.c.h.b16 %v180
    %v1242 = vunpack.c.l.b16 %v181
    %v1243 = vunpack.c.h.b16 %v181
    %v1244 = vunpack.c.l.b16 %v182
    %v1245 = vunpack.c.h.b16 %v182
    %v1246 = vunpack.c.l.b16 %v183
    %v1247 = vunpack.c.h.b16 %v183
    %v1248 = vunpack.c.l.b16 %v184
    %v1249 = vunpack.c.h.b16 %v184
    %v1250 = vunpack.c.l.b16 %v185
    %v1251 = vunpack.c.h.b16 %v185
    %v1252 = vunpack.c.l.b16 %v186
    %v1253 = vunpack.c.h.b16 %v186
    %v1254 = vunpack.c.l.b16 %v187
    %v1255 = vunpack.c.h.b16 %v187
    %v1256 = vunpack.c.l.b16 %v188
    %v1257 = vunpack.c.h.b16 %v188
    %v1258 = vunpack.c.l.b16 %v189
    %v1259 = vunpack.c.h.b16 %v189
    %v1260 = vunpack.c.l.b16 %v190
    %v1261 = vunpack.c.h.b16 %v190
    %v1262 = vunpack.c.l.b16 %v191
    %v1263 = vunpack.c.h.b16 %v191
    %v1264 = vunpack.c.l.b16 %v192
    %v1265 = vunpack.c.h.b16 %v192
    %v1266 = vunpack.c.l.b16 %v193
    %v1267 = vunpack.c.h.b16 %v193
    %v1268 = vunpack.c.l.b16 %v194
    %v1269 = vunpack.c.h.b16 %v194
    %v1270 = vunpack.c.l.b16 %v195
    %v1271 = vunpack.c.h.b16 %v195
    %v1272 = vunpack.c.l.b16 %v196
    %v1273 = vunpack.c.h.b16 %v196
    %v1274 = vunpack.c.l.b16 %v197
    %v1275 = vunpack.c.h.b16 %v197
    %v1276 = vunpack.c.l.b16 %v198
    %v1277 = vunpack.c.h.b16 %v198
    %v1278 = vunpack.c.l.b16 %v199
    %v1279 = vunpack.c.h.b16 %v199
    %v1280 = vunpack.c.l.b16 %v200
    %v1281 = vunpack.c.h.b16 %v200
    %v1282 = vunpack.c.l.b16 %v201
    %v1283 = vunpack.c.h.b16 %v201
    %v1284 = vunpack.c.l.b16 %v202
    %v1285 = vunpack.c.h.b16 %v202
    %v1286 = vunpack.c.l.b16 %v203
    %v1287 = vunpack.c.h.b16 %v203
    %v1288 = vunpack.c.l.b16 %v204
    %v1289 = vunpack.c.h.b16 %v204
    %v1290 = vunpack.c.l.b16 %v205
    %v1291 = vunpack.c.h.b16 %v205
    %v1292 = vunpack.c.l.b16 %v206
    %v1293 = vunpack.c.h.b16 %v206
    %v1294 = vunpack.c.l.b16 %v207
    %v1295 = vunpack.c.h.b16 %v207
    %v1296 = vunpack.c.l.b16 %v208
    %v1297 = vunpack.c.h.b16 %v208
    %v1298 = vunpack.c.l.b16 %v209
    %v1299 = vunpack.c.h.b16 %v209
    %v1300 = vunpack.c.l.b16 %v210
    %v1301 = vunpack.c.h.b16 %v210
    %v1302 = vunpack.c.l.b16 %v211
    %v1303 = vunpack.c.h.b16 %v211
    %v1304 = vunpack.c.l.b16 %v212
    %v1305 = vunpack.c.h.b16 %v212
    %v1306 = vunpack.c.l.b16 %v213
    %v1307 = vunpack.c.h.b16 %v213
    %v1308 = vunpack.c.l.b16 %v214
    %v1309 = vunpack.c.h.b16 %v214
    %v1310 = vunpack.c.l.b16 %v215
    %v1311 = vunpack.c.h.b16 %v215
    %v1312 = vunpack.c.l.b16 %v216
    %v1313 = vunpack.c.h.b16 %v216
    %v1314 = vunpack.c.l.b16 %v217
    %v1315 = vunpack.c.h.b16 %v217
    %v1316 = vunpack.c.l.b16 %v218
    %v1317 = vunpack.c.h.b16 %v218
    %v1318 = vunpack.c.l.b16 %v219
    %v1319 = vunpack.c.h.b16 %v219
    %v1320 = vunpack.c.l.b16 %v220
    %v1321 = vunpack.c.h.b16 %v220
    %v1322 = vunpack.c.l.b16 %v221
    %v1323 = vunpack.c.h.b16 %v221
    %v1324 = vunpack.c.l.b16 %v222
    %v1325 = vunpack.c.h.b16 %v222
    %v1326 = vunpack.c.l.b16 %v223
    %v1327 = vunpack.c.h.b16 %v223
    %v1328 = vunpack.c.l.b16 %v224
    %v1329 = vunpack.c.h.b16 %v224
    %v1330 = vunpack.c.l.b16 %v225
    %v1331 = vunpack.c.h.b16 %v225
    %v1332 = vunpack.c.l.b16 %v226
    %v1333 = vunpack.c.h.b16 %v226
    %v1334 = vunpack.c.l.b16 %v227
    %v1335 = vunpack.c.h.b16 %v227
    %v1336 = vunpack.c.l.b16 %v228
    %v1337 = vunpack.c.h.b16 %v228
    %v1338 = vunpack.c.l.b16 %v229
    %v1339 = vunpack.c.h.b16 %v229
    %v1340 = vunpack.c.l.b16 %v230
    %v1341 = vunpack.c.h.b16 %v230
    %v1342 = vunpack.c.l.b16 %v231
    %v1343 = vunpack.c.h.b16 %v231
    %v1344 = vunpack.c.l.b16 %v232
    %v1345 = vunpack.c.h.b16 %v232
    %v1346 = vunpack.c.l.b16 %v233
    %v1347 = vunpack.c.h.b16 %v233
    %v1348 = vunpack.c.l.b16 %v234
    %v1349 = vunpack.c.h.b16 %v234
    %v1350 = vunpack.c.l.b16 %v235
    %v1351 = vunpack.c.h.b16 %v235
    %v1352 = vunpack.c.l.b16 %v236
    %v1353 = vunpack.c.h.b16 %v236
    %v1354 = vunpack.c.l.b16 %v237
    %v1355 = vunpack.c.h.b16 %v237
    %v1356 = vunpack.c.l.b16 %v238
    %v1357 = vunpack.c.h.b16 %v238
    %v1358 = vunpack.c.l.b16 %v239
    %v1359 = vunpack.c.h.b16 %v239
    %v1360 = vunpack.c.l.b16 %v240
    %v1361 = vunpack.c.h.b16 %v240
    %v1362 = vunpack.c.l.b16 %v241
    %v1363 = vunpack.c.h.b16 %v241
    %v1364 = vunpack.c.l.b16 %v242
    %v1365 = vunpack.c.h.b16 %v242
    %v1366 = vunpack.c.l.b16 %v243
    %v1367 = vunpack.c.h.b16 %v243
    %v1368 = vunpack.c.l.b16 %v244
    %v1369 = vunpack.c.h.b16 %v244
    %v1370 = vunpack.c.l.b16 %v245
    %v1371 = vunpack.c.h.b16 %v245
    %v1372 = vunpack.c.l.b16 %v246
    %v1373 = vunpack.c.h.b16 %v246
    %v1374 = vunpack.c.l.b16 %v247
    %v1375 = vunpack.c.h.b16 %v247
    %v1376 = vunpack.c.l.b16 %v248
    %v1377 = vunpack.c.h.b16 %v248
    %v1378 = vunpack.c.l.b16 %v249
    %v1379 = vunpack.c.h.b16 %v249
    %v1380 = vunpack.c.l.b16 %v250
    %v1381 = vunpack.c.h.b16 %v250
    %v1382 = vunpack.c.l.b16 %v251
    %v1383 = vunpack.c.h.b16 %v251
    %v1384 = vunpack.c.l.b16 %v252
    %v1385 = vunpack.c.h.b16 %v252
    %v1386 = vunpack.c.l.b16 %v253
    %v1387 = vunpack.c.h.b16 %v253
    %v1388 = vunpack.c.l.b16 %v254
    %v1389 = vunpack.c.h.b16 %v254
    %v1390 = vunpack.c.l.b16 %v255
    %v1391 = vunpack.c.h.b16 %v255
    %v1392 = vunpack.c.l.b16 %v256
    %v1393 = vunpack.c.h.b16 %v256
    %v1394 = vunpack.c.l.b16 %v257
    %v1395 = vunpack.c.h.b16 %v257
    %v1396 = vunpack.c.l.b16 %v258
    %v1397 = vunpack.c.h.b16 %v258
    %v1398 = vunpack.c.l.b16 %v259
    %v1399 = vunpack.c.h.b16 %v259
    %v1400 = vunpack.c.l.b16 %v260
    %v1401 = vunpack.c.h.b16 %v260
    %v1402 = vunpack.c.l.b16 %v261
    %v1403 = vunpack.c.h.b16 %v261
    %v1404 = vunpack.c.l.b16 %v262
    %v1405 = vunpack.c.h.b16 %v262
    %v1406 = vunpack.c.l.b16 %v263
    %v1407 = vunpack.c.h.b16 %v263
    %v1408 = vunpack.c.l.b16 %v264
    %v1409 = vunpack.c.h.b16 %v264
    %v1410 = vunpack.c.l.b16 %v265
    %v1411 = vunpack.c.h.b16 %v265
    %v1412 = vunpack.c.l.b16 %v266
    %v1413 = vunpack.c.h.b16 %v266
    %v1414 = vunpack.c.l.b16 %v267
    %v1415 = vunpack.c.h.b16 %v267
    %v1416 = vunpack.c.l.b16 %v268
    %v1417 = vunpack.c.h.b16 %v268
    %v1418 = vunpack.c.l.b16 %v269
    %v1419 = vunpack.c.h.b16 %v269
    %v1420 = vunpack.c.l.b16 %v270
    %v1421 = vunpack.c.h.b16 %v270
    %v1422 = vunpack.c.l.b16 %v271
    %v1423 = vunpack.c.h.b16 %v271
    %v1424 = vunpack.c.l.b16 %v272
    %v1425 = vunpack.c.h.b16 %v272
    %v1426 = vunpack.c.l.b16 %v273
    %v1427 = vunpack.c.h.b16 %v273
    %v1428 = vunpack.c.l.b16 %v274
    %v1429 = vunpack.c.h.b16 %v274
    %v1430 = vunpack.c.l.b16 %v275
    %v1431 = vunpack.c.h.b16 %v275
    %v1432 = vunpack.c.l.b16 %v276
    %v1433 = vunpack.c.h.b16 %v276
    %v1434 = vunpack.c.l.b16 %v277
    %v1435 = vunpack.c.h.b16 %v277
    %v1436 = vunpack.c.l.b16 %v278
    %v1437 = vunpack.c.h.b16 %v278
    %v1438 = vunpack.c.l.b16 %v279
    %v1439 = vunpack.c.h.b16 %v279
    %v1440 = vunpack.c.l.b16 %v280
    %v1441 = vunpack.c.h.b16 %v280
    %v1442 = vunpack.c.l.b16 %v281
    %v1443 = vunpack.c.h.b16 %v281
    %v1444 = vunpack.c.l.b16 %v282
    %v1445 = vunpack.c.h.b16 %v282
    %v1446 = vunpack.c.l.b16 %v283
    %v1447 = vunpack.c.h.b16 %v283
    %v1448 = vunpack.c.l.b16 %v284
    %v1449 = vunpack.c.h.b16 %v284
    %v1450 = vunpack.c.l.b16 %v285
    %v1451 = vunpack.c.h.b16 %v285
    %v1452 = vunpack.c.l.b16 %v286
    %v1453 = vunpack.c.h.b16 %v286
    %v1454 = vunpack.c.l.b16 %v287
    %v1455 = vunpack.c.h.b16 %v287
    %v1456 = vunpack.c.l.b16 %v288
    %v1457 = vunpack.c.h.b16 %v288
    %v1458 = vunpack.c.l.b16 %v289
    %v1459 = vunpack.c.h.b16 %v289
    %v1460 = vunpack.c.l.b16 %v290
    %v1461 = vunpack.c.h.b16 %v290
    %v1462 = vunpack.c.l.b16 %v291
    %v1463 = vunpack.c.h.b16 %v291
    %v1464 = vunpack.c.l.b16 %v292
    %v1465 = vunpack.c.h.b16 %v292
    %v1466 = vunpack.c.l.b16 %v293
    %v1467 = vunpack.c.h.b16 %v293
    %v1468 = vunpack.c.l.b16 %v294
    %v1469 = vunpack.c.h.b16 %v294
    %v1470 = vunpack.c.l.b16 %v295
    %v1471 = vunpack.c.h.b16 %v295
    %v1472 = vunpack.c.l.b16 %v296
    %v1473 = vunpack.c.h.b16 %v296
    %v1474 = vunpack.c.l.b16 %v297
    %v1475 = vunpack.c.h.b16 %v297
    %v1476 = vunpack.c.l.b16 %v298
    %v1477 = vunpack.c.h.b16 %v298
    %v1478 = vunpack.c.l.b16 %v299
    %v1479 = vunpack.c.h.b16 %v299
    %v1480 = vunpack.c.l.b16 %v300
    %v1481 = vunpack.c.h.b16 %v300
    %v1482 = vunpack.c.l.b16 %v301
    %v1483 = vunpack.c.h.b16 %v301
    %v1484 = vunpack.c.l.b16 %v302
    %v1485 = vunpack.c.h.b16 %v302
    %v1486 = vunpack.c.l.b16 %v303
    %v1487 = vunpack.c.h.b16 %v303
    %v1488 = vunpack.c.l.b16 %v304
    %v1489 = vunpack.c.h.b16 %v304
    %v1490 = vunpack.c.l.b16 %v305
    %v1491 = vunpack.c.h.b16 %v305
    %v1492 = vunpack.c.l.b16 %v306
    %v1493 = vunpack.c.h.b16 %v306
    %v1494 = vunpack.c.l.b16 %v307
    %v1495 = vunpack.c.h.b16 %v307
    %v1496 = vunpack.c.l.b16 %v308
    %v1497 = vunpack.c.h.b16 %v308
    %v1498 = vunpack.c.l.b16 %v309
    %v1499 = vunpack.c.h.b16 %v309
    %v1500 = vunpack.c.l.b16 %v310
    %v1501 = vunpack.c.h.b16 %v310
    %v1502 = vunpack.c.l.b16 %v311
    %v1503 = vunpack.c.h.b16 %v311
    %v1504 = vunpack.c.l.b16 %v312
    %v1505 = vunpack.c.h.b16 %v312
    %v1506 = vunpack.c.l.b16 %v313
    %v1507 = vunpack.c.h.b16 %v313
    %v1508 = vunpack.c.l.b16 %v314
    %v1509 = vunpack.c.h.b16 %v314
    %v1510 = vunpack.c.l.b16 %v315
    %v1511 = vunpack.c.h.b16 %v315
    %v1512 = vunpack.c.l.b16 %v316
    %v1513 = vunpack.c.h.b16 %v316
    %v1514 = vunpack.c.l.b16 %v317
    %v1515 = vunpack.c.h.b16 %v317
    %v1516 = vunpack.c.l.b16 %v318
    %v1517 = vunpack.c.h.b16 %v318
    %v1518 = vunpack.c.l.b16 %v319
    %v1519 = vunpack.c.h.b16 %v319
    %v1520 = vunpack.c.l.b16 %v320
    %v1521 = vunpack.c.h.b16 %v320
    %v1522 = vunpack.c.l.b16 %v321
    %v1523 = vunpack.c.h.b16 %v321
    %v1524 = vunpack.c.l.b16 %v322
    %v1525 = vunpack.c.h.b16 %v322
    %v1526 = vunpack.c.l.b16 %v323
    %v1527 = vunpack.c.h.b16 %v323
    %v1528 = vunpack.c.l.b16 %v324
    %v1529 = vunpack.c.h.b16 %v324
    %v1530 = vunpack.c.l.b16 %v325
    %v1531 = vunpack.c.h.b16 %v325
    %v1532 = vunpack.c.l.b16 %v326
    %v1533 = vunpack.c.h.b16 %v326
    %v1534 = vunpack.c.l.b16 %v327
    %v1535 = vunpack.c.h.b16 %v327
    %v1536 = vunpack.c.l.b16 %v328
    %v1537 = vunpack.c.h.b16 %v328
    %v1538 = vunpack.c.l.b16 %v329
    %v1539 = vunpack.c.h.b16 %v329
    %v1540 = vunpack.c.l.b16 %v330
    %v1541 = vunpack.c.h.b16 %v330
    %v1542 = vunpack.c.l.b16 %v331
    %v1543 = vunpack.c.h.b16 %v331
    %v1544 = vunpack.c.l.b16 %v332
    %v1545 = vunpack.c.h.b16 %v332
    %v1546 = vunpack.c.l.b16 %v333
    %v1547 = vunpack.c.h.b16 %v333
    %v1548 = vunpack.c.l.b16 %v334
    %v1549 = vunpack.c.h.b16 %v334
    %v1550 = vunpack.c.l.b16 %v335
    %v1551 = vunpack.c.h.b16 %v335
    %v1552 = vunpack.c.l.b16 %v336
    %v1553 = vunpack.c.h.b16 %v336
    %v1554 = vunpack.c.l.b16 %v337
    %v1555 = vunpack.c.h.b16 %v337
    %v1556 = vunpack.c.l.b16 %v338
    %v1557 = vunpack.c.h.b16 %v338
    %v1558 = vunpack.c.l.b16 %v339
    %v1559 = vunpack.c.h.b16 %v339
    %v1560 = vunpack.c.l.b16 %v340
    %v1561 = vunpack.c.h.b16 %v340
    %v1562 = vunpack.c.l.b16 %v341
    %v1563 = vunpack.c.h.b16 %v341
    %v1564 = vunpack.c.l.b16 %v342
    %v1565 = vunpack.c.h.b16 %v342
    %v1566 = vunpack.c.l.b16 %v343
    %v1567 = vunpack.c.h.b16 %v343
    %v1568 = vunpack.c.l.b16 %v344
    %v1569 = vunpack.c.h.b16 %v344
    %v1570 = vunpack.c.l.b16 %v345
    %v1571 = vunpack.c.h.b16 %v345
    %v1572 = vunpack.c.l.b16 %v346
    %v1573 = vunpack.c.h.b16 %v346
    %v1574 = vunpack.c.l.b16 %v347
    %v1575 = vunpack.c.h.b16 %v347
    %v1576 = vunpack.c.l.b16 %v348
    %v1577 = vunpack.c.h.b16 %v348
    %v1578 = vunpack.c.l.b16 %v349
    %v1579 = vunpack.c.h.b16 %v349
    %v1580 = vunpack.c.l.b16 %v350
    %v1581 = vunpack.c.h.b16 %v350
    %v1582 = vunpack.c.l.b16 %v351
    %v1583 = vunpack.c.h.b16 %v351
    %v1584 = vunpack.c.l.b16 %v352
    %v1585 = vunpack.c.h.b16 %v352
    %v1586 = vunpack.c.l.b16 %v353
    %v1587 = vunpack.c.h.b16 %v353
    %v1588 = vunpack.c.l.b16 %v354
    %v1589 = vunpack.c.h.b16 %v354
    %v1590 = vunpack.c.l.b16 %v355
    %v1591 = vunpack.c.h.b16 %v355
    %v1592 = vunpack.c.l.b16 %v356
    %v1593 = vunpack.c.h.b16 %v356
    %v1594 = vunpack.c.l.b16 %v357
    %v1595 = vunpack.c.h.b16 %v357
    %v1596 = vunpack.c.l.b16 %v358
    %v1597 = vunpack.c.h.b16 %v358
    %v1598 = vunpack.c.l.b16 %v359
    %v1599 = vunpack.c.h.b16 %v359
    %v1600 = vunpack.c.l.b16 %v360
    %v1601 = vunpack.c.h.b16 %v360
    %v1602 = vunpack.c.l.b16 %v361
    %v1603 = vunpack.c.h.b16 %v361
    %v1604 = vunpack.c.l.b16 %v362
    %v1605 = vunpack.c.h.b16 %v362
    %v1606 = vunpack.c.l.b16 %v363
    %v1607 = vunpack.c.h.b16 %v363
    %v1608 = vunpack.c.l.b16 %v364
    %v1609 = vunpack.c.h.b16 %v364
    %v1610 = vunpack.c.l.b16 %v365
    %v1611 = vunpack.c.h.b16 %v365
    %v1612 = vunpack.c.l.b16 %v366
    %v1613 = vunpack.c.h.b16 %v366
    %v1614 = vunpack.c.l.b16 %v367
    %v1615 = vunpack.c.h.b16 %v367
    %v1616 = vunpack.c.l.b16 %v368
    %v1617 = vunpack.c.h.b16 %v368
    %v1618 = vunpack.c.l.b16 %v369
    %v1619 = vunpack.c.h.b16 %v369
    %v1620 = vunpack.c.l.b16 %v370
    %v1621 = vunpack.c.h.b16 %v370
    %v1622 = vunpack.c.l.b16 %v371
    %v1623 = vunpack.c.h.b16 %v371
    %v1624 = vunpack.c.l.b16 %v372
    %v1625 = vunpack.c.h.b16 %v372
    %v1626 = vunpack.c.l.b16 %v373
    %v1627 = vunpack.c.h.b16 %v373
    %v1628 = vunpack.c.l.b16 %v374
    %v1629 = vunpack.c.h.b16 %v374
    %v1630 = vunpack.c.l.b16 %v375
    %v1631 = vunpack.c.h.b16 %v375
    %v1632 = vunpack.c.l.b16 %v376
    %v1633 = vunpack.c.h.b16 %v376
    %v1634 = vunpack.c.l.b16 %v377
    %v1635 = vunpack.c.h.b16 %v377
    %v1636 = vunpack.c.l.b16 %v378
    %v1637 = vunpack.c.h.b16 %v378
    %v1638 = vunpack.c.l.b16 %v379
    %v1639 = vunpack.c.h.b16 %v379
    %v1640 = vunpack.c.l.b16 %v380
    %v1641 = vunpack.c.h.b16 %v380
    %v1642 = vunpack.c.l.b16 %v381
    %v1643 = vunpack.c.h.b16 %v381
    %v1644 = vunpack.c.l.b16 %v382
    %v1645 = vunpack.c.h.b16 %v382
    %v1646 = vunpack.c.l.b16 %v383
    %v1647 = vunpack.c.h.b16 %v383
    %v1648 = vunpack.c.l.b16 %v384
    %v1649 = vunpack.c.h.b16 %v384
    %v1650 = vunpack.c.l.b16 %v385
    %v1651 = vunpack.c.h.b16 %v385
    %v1652 = vunpack.c.l.b16 %v386
    %v1653 = vunpack.c.h.b16 %v386
    %v1654 = vunpack.c.l.b16 %v387
    %v1655 = vunpack.c.h.b16 %v387
    %v1656 = vunpack.c.l.b16 %v388
    %v1657 = vunpack.c.h.b16 %v388
    %v1658 = vunpack.c.l.b16 %v389
    %v1659 = vunpack.c.h.b16 %v389
    %v1660 = vunpack.c.l.b16 %v390
    %v1661 = vunpack.c.h.b16 %v390
    %v1662 = vunpack.c.l.b16 %v391
    %v1663 = vunpack.c.h.b16 %v391
    %v1664 = vunpack.c.l.b16 %v392
    %v1665 = vunpack.c.h.b16 %v392
    %v1666 = vunpack.c.l.b16 %v393
    %v1667 = vunpack.c.h.b16 %v393
    %v1668 = vunpack.c.l.b16 %v394
    %v1669 = vunpack.c.h.b16 %v394
    %v1670 = vunpack.c.l.b16 %v395
    %v1671 = vunpack.c.h.b16 %v395
    %v1672 = vunpack.c.l.b16 %v396
    %v1673 = vunpack.c.h.b16 %v396
    %v1674 = vunpack.c.l.b16 %v397
    %v1675 = vunpack.c.h.b16 %v397
    %v1676 = vunpack.c.l.b16 %v398
    %v1677 = vunpack.c.h.b16 %v398
    %v1678 = vunpack.c.l.b16 %v399
    %v1679 = vunpack.c.h.b16 %v399
    %v1680 = vunpack.c.l.b16 %v400
    %v1681 = vunpack.c.h.b16 %v400
    %v1682 = vunpack.c.l.b16 %v401
    %v1683 = vunpack.c.h.b16 %v401
    %v1684 = vunpack.c.l.b16 %v402
    %v1685 = vunpack.c.h.b16 %v402
    %v1686 = vunpack.c.l.b16 %v403
    %v1687 = vunpack.c.h.b16 %v403
    %v1688 = vunpack.c.l.b16 %v404
    %v1689 = vunpack.c.h.b16 %v404
    %v1690 = vunpack.c.l.b16 %v405
    %v1691 = vunpack.c.h.b16 %v405
    %v1692 = vunpack.c.l.b16 %v406
    %v1693 = vunpack.c.h.b16 %v406
    %v1694 = vunpack.c.l.b16 %v407
    %v1695 = vunpack.c.h.b16 %v407
    %v1696 = vunpack.c.l.b16 %v408
    %v1697 = vunpack.c.h.b16 %v408
    %v1698 = vunpack.c.l.b16 %v409
    %v1699 = vunpack.c.h.b16 %v409
    %v1700 = vunpack.c.l.b16 %v410
    %v1701 = vunpack.c.h.b16 %v410
    %v1702 = vunpack.c.l.b16 %v411
    %v1703 = vunpack.c.h.b16 %v411
    %v1704 = vunpack.c.l.b16 %v412
    %v1705 = vunpack.c.h.b16 %v412
    %v1706 = vunpack.c.l.b16 %v413
    %v1707 = vunpack.c.h.b16 %v413
    %v1708 = vunpack.c.l.b16 %v414
    %v1709 = vunpack.c.h.b16 %v414
    %v1710 = vunpack.c.l.b16 %v415
    %v1711 = vunpack.c.h.b16 %v415
    %v1712 = vunpack.c.l.b16 %v416
    %v1713 = vunpack.c.h.b16 %v416
    %v1714 = vunpack.c.l.b16 %v417
    %v1715 = vunpack.c.h.b16 %v417
    %v1716 = vunpack.c.l.b16 %v418
    %v1717 = vunpack.c.h.b16 %v418
    %v1718 = vunpack.c.l.b16 %v419
    %v1719 = vunpack.c.h.b16 %v419
    %v1720 = vunpack.c.l.b16 %v420
    %v1721 = vunpack.c.h.b16 %v420
    %v1722 = vunpack.c.l.b16 %v421
    %v1723 = vunpack.c.h.b16 %v421
    %v1724 = vunpack.c.l.b16 %v422
    %v1725 = vunpack.c.h.b16 %v422
    %v1726 = vunpack.c.l.b16 %v423
    %v1727 = vunpack.c.h.b16 %v423
    %v1728 = vunpack.c.l.b16 %v424
    %v1729 = vunpack.c.h.b16 %v424
    %v1730 = vunpack.c.l.b16 %v425
    %v1731 = vunpack.c.h.b16 %v425
    %v1732 = vunpack.c.l.b16 %v426
    %v1733 = vunpack.c.h.b16 %v426
    %v1734 = vunpack.c.l.b16 %v427
    %v1735 = vunpack.c.h.b16 %v427
    %v1736 = vunpack.c.l.b16 %v428
    %v1737 = vunpack.c.h.b16 %v428
    %v1738 = vunpack.c.l.b16 %v429
    %v1739 = vunpack.c.h.b16 %v429
    %v1740 = vunpack.c.l.b16 %v430
    %v1741 = vunpack.c.h.b16 %v430
    %v1742 = vunpack.c.l.b16 %v431
    %v1743 = vunpack.c.h.b16 %v431
    %v1744 = vunpack.c.l.b16 %v432
    %v1745 = vunpack.c.h.b16 %v432
    %v1746 = vunpack.c.l.b16 %v433
    %v1747 = vunpack.c.h.b16 %v433
    %v1748 = vunpack.c.l.b16 %v434
    %v1749 = vunpack.c.h.b16 %v434
    %v1750 = vunpack.c.l.b16 %v435
    %v1751 = vunpack.c.h.b16 %v435
    %v1752 = vunpack.c.l.b16 %v436
    %v1753 = vunpack.c.h.b16 %v436
    %v1754 = vunpack.c.l.b16 %v437
    %v1755 = vunpack.c.h.b16 %v437
    %v1756 = vunpack.c.l.b16 %v438
    %v1757 = vunpack.c.h.b16 %v438
    %v1758 = vunpack.c.l.b16 %v439
    %v1759 = vunpack.c.h.b16 %v439
    %v1760 = vunpack.c.l.b16 %v440
    %v1761 = vunpack.c.h.b16 %v440
    %v1762 = vunpack.c.l.b16 %v441
    %v1763 = vunpack.c.h.b16 %v441
    %v1764 = vunpack.c.l.b16 %v442
    %v1765 = vunpack.c.h.b16 %v442
    %v1766 = vunpack.c.l.b16 %v443
    %v1767 = vunpack.c.h.b16 %v443
    %v1768 = vunpack.c.l.b16 %v444
    %v1769 = vunpack.c.h.b16 %v444
    %v1770 = vunpack.c.l.b16 %v445
    %v1771 = vunpack.c.h.b16 %v445
    %v1772 = vunpack.c.l.b16 %v446
    %v1773 = vunpack.c.h.b16 %v446
    %v1774 = vunpack.c.l.b16 %v447
    %v1775 = vunpack.c.h.b16 %v447
    %v1776 = vunpack.c.l.b16 %v448
    %v1777 = vunpack.c.h.b16 %v448
    %v1778 = vunpack.c.l.b16 %v449
    %v1779 = vunpack.c.h.b16 %v449
    %v1780 = vunpack.c.l.b16 %v450
    %v1781 = vunpack.c.h.b16 %v450
    %v1782 = vunpack.c.l.b16 %v451
    %v1783 = vunpack.c.h.b16 %v451
    %v1784 = vunpack.c.l.b16 %v452
    %v1785 = vunpack.c.h.b16 %v452
    %v1786 = vunpack.c.l.b16 %v453
    %v1787 = vunpack.c.h.b16 %v453
    %v1788 = vunpack.c.l.b16 %v454
    %v1789 = vunpack.c.h.b16 %v454
    %v1790 = vunpack.c.l.b16 %v455
    %v1791 = vunpack.c.h.b16 %v455
    %v1792 = vunpack.c.l.b16 %v456
    %v1793 = vunpack.c.h.b16 %v456
    %v1794 = vunpack.c.l.b16 %v457
    %v1795 = vunpack.c.h.b16 %v457
    %v1796 = vunpack.c.l.b16 %v458
    %v1797 = vunpack.c.h.b16 %v458
    %v1798 = vunpack.c.l.b16 %v459
    %v1799 = vunpack.c.h.b16 %v459
    %v1800 = vunpack.c.l.b16 %v460
    %v1801 = vunpack.c.h.b16 %v460
    %v1802 = vunpack.c.l.b16 %v461
    %v1803 = vunpack.c.h.b16 %v461
    %v1804 = vunpack.c.l.b16 %v462
    %v1805 = vunpack.c.h.b16 %v462
    %v1806 = vunpack.c.l.b16 %v463
    %v1807 = vunpack.c.h.b16 %v463
    %v1808 = vunpack.c.l.b16 %v464
    %v1809 = vunpack.c.h.b16 %v464
    %v1810 = vunpack.c.l.b16 %v465
    %v1811 = vunpack.c.h.b16 %v465
    %v1812 = vunpack.c.l.b16 %v466
    %v1813 = vunpack.c.h.b16 %v466
    %v1814 = vunpack.c.l.b16 %v467
    %v1815 = vunpack.c.h.b16 %v467
    %v1816 = vunpack.c.l.b16 %v468
    %v1817 = vunpack.c.h.b16 %v468
    %v1818 = vunpack.c.l.b16 %v469
    %v1819 = vunpack.c.h.b16 %v469
    %v1820 = vunpack.c.l.b16 %v470
    %v1821 = vunpack.c.h.b16 %v470
    %v1822 = vunpack.c.l.b16 %v471
    %v1823 = vunpack.c.h.b16 %v471
    %v1824 = vunpack.c.l.b16 %v472
    %v1825 = vunpack.c.h.b16 %v472
    %v1826 = vunpack.c.l.b16 %v473
    %v1827 = vunpack.c.h.b16 %v473
    %v1828 = vunpack.c.l.b16 %v474
    %v1829 = vunpack.c.h.b16 %v474
    %v1830 = vunpack.c.l.b16 %v475
    %v1831 = vunpack.c.h.b16 %v475
    %v1832 = vunpack.c.l.b16 %v476
    %v1833 = vunpack.c.h.b16 %v476
    %v1834 = vunpack.c.l.b16 %v477
    %v1835 = vunpack.c.h.b16 %v477
    %v1836 = vunpack.c.l.b16 %v478
    %v1837 = vunpack.c.h.b16 %v478
    %v1838 = vunpack.c.l.b16 %v479
    %v1839 = vunpack.c.h.b16 %v479
    %v1840 = vunpack.c.l.b16 %v480
    %v1841 = vunpack.c.h.b16 %v480
    %v1842 = vunpack.c.l.b16 %v481
    %v1843 = vunpack.c.h.b16 %v481
    %v1844 = vunpack.c.l.b16 %v482
    %v1845 = vunpack.c.h.b16 %v482
    %v1846 = vunpack.c.l.b16 %v483
    %v1847 = vunpack.c.h.b16 %v483
    %v1848 = vunpack.c.l.b16 %v484
    %v1849 = vunpack.c.h.b16 %v484
    %v1850 = vunpack.c.l.b16 %v485
    %v1851 = vunpack.c.h.b16 %v485
    %v1852 = vunpack.c.l.b16 %v486
    %v1853 = vunpack.c.h.b16 %v486
    %v1854 = vunpack.c.l.b16 %v487
    %v1855 = vunpack.c.h.b16 %v487
    %v1856 = vunpack.c.l.b16 %v488
    %v1857 = vunpack.c.h.b16 %v488
    %v1858 = vunpack.c.l.b16 %v489
    %v1859 = vunpack.c.h.b16 %v489
    %v1860 = vunpack.c.l.b16 %v490
    %v1861 = vunpack.c.h.b16 %v490
    %v1862 = vunpack.c.l.b16 %v491
    %v1863 = vunpack.c.h.b16 %v491
    %v1864 = vunpack.c.l.b16 %v492
    %v1865 = vunpack.c.h.b16 %v492
    %v1866 = vunpack.c.l.b16 %v493
    %v1867 = vunpack.c.h.b16 %v493
    %v1868 = vunpack.c.l.b16 %v494
    %v1869 = vunpack.c.h.b16 %v494
    %v1870 = vunpack.c.l.b16 %v495
    %v1871 = vunpack.c.h.b16 %v495
    %v1872 = vunpack.c.l.b16 %v496
    %v1873 = vunpack.c.h.b16 %v496
    %v1874 = vunpack.c.l.b16 %v497
    %v1875 = vunpack.c.h.b16 %v497
    %v1876 = vunpack.c.l.b16 %v498
    %v1877 = vunpack.c.h.b16 %v498
    %v1878 = vunpack.c.l.b16 %v499
    %v1879 = vunpack.c.h.b16 %v499
    %v1880 = vunpack.c.l.b16 %v500
    %v1881 = vunpack.c.h.b16 %v500
    %v1882 = vunpack.c.l.b16 %v501
    %v1883 = vunpack.c.h.b16 %v501
    %v1884 = vunpack.c.l.b16 %v502
    %v1885 = vunpack.c.h.b16 %v502
    %v1886 = vunpack.c.l.b16 %v503
    %v1887 = vunpack.c.h.b16 %v503
    %v1888 = vunpack.c.l.b16 %v504
    %v1889 = vunpack.c.h.b16 %v504
    %v1890 = vunpack.c.l.b16 %v505
    %v1891 = vunpack.c.h.b16 %v505
    %v1892 = vunpack.c.l.b16 %v506
    %v1893 = vunpack.c.h.b16 %v506
    %v1894 = vunpack.c.l.b16 %v507
    %v1895 = vunpack.c.h.b16 %v507
    %v1896 = vunpack.c.l.b16 %v508
    %v1897 = vunpack.c.h.b16 %v508
    %v1898 = vunpack.c.l.b16 %v509
    %v1899 = vunpack.c.h.b16 %v509
    %v1900 = vunpack.c.l.b16 %v510
    %v1901 = vunpack.c.h.b16 %v510
    %v1902 = vunpack.c.l.b16 %v511
    %v1903 = vunpack.c.h.b16 %v511
    %v1904 = vunpack.c.l.b16 %v512
    %v1905 = vunpack.c.h.b16 %v512
    %v1906 = vunpack.c.l.b16 %v513
    %v1907 = vunpack.c.h.b16 %v513
    %v1908 = vunpack.c.l.b16 %v514
    %v1909 = vunpack.c.h.b16 %v514
    %v1910 = vunpack.c.l.b16 %v515
    %v1911 = vunpack.c.h.b16 %v515
    %v1912 = vunpack.c.l.b16 %v516
    %v1913 = vunpack.c.h.b16 %v516
    %v1914 = vunpack.c.l.b16 %v517
    %v1915 = vunpack.c.h.b16 %v517
    %v1916 = vunpack.c.l.b16 %v518
    %v1917 = vunpack.c.h.b16 %v518
    %v1918 = vunpack.c.l.b16 %v519
    %v1919 = vunpack.c.h.b16 %v519
    %v1920 = vunpack.c.l.b16 %v520
    %v1921 = vunpack.c.h.b16 %v520
    %v1922 = vunpack.c.l.b16 %v521
    %v1923 = vunpack.c.h.b16 %v521
    %v1924 = vunpack.c.l.b16 %v522
    %v1925 = vunpack.c.h.b16 %v522
    %v1926 = vunpack.c.l.b16 %v523
    %v1927 = vunpack.c.h.b16 %v523
    %v1928 = vunpack.c.l.b16 %v524
    %v1929 = vunpack.c.h.b16 %v524
    %v1930 = vunpack.c.l.b16 %v525
    %v1931 = vunpack.c.h.b16 %v525
    %v1932 = vunpack.c.l.b16 %v526
    %v1933 = vunpack.c.h.b16 %v526
    %v1934 = vunpack.c.l.b16 %v527
    %v1935 = vunpack.c.h.b16 %v527
    %v1936 = vunpack.c.l.b16 %v528
    %v1937 = vunpack.c.h.b16 %v528
    %v1938 = vunpack.c.l.b16 %v529
    %v1939 = vunpack.c.h.b16 %v529
    %v1940 = vunpack.c.l.b16 %v530
    %v1941 = vunpack.c.h.b16 %v530
    %v1942 = vunpack.c.l.b16 %v531
    %v1943 = vunpack.c.h.b16 %v531
    %v1944 = vunpack.c.l.b16 %v532
    %v1945 = vunpack.c.h.b16 %v532
    %v1946 = vunpack.c.l.b16 %v533
    %v1947 = vunpack.c.h.b16 %v533
    %v1948 = vunpack.c.l.b16 %v534
    %v1949 = vunpack.c.h.b16 %v534
    %v1950 = vunpack.c.l.b16 %v535
    %v1951 = vunpack.c.h.b16 %v535
    %v1952 = vunpack.c.l.b16 %v536
    %v1953 = vunpack.c.h.b16 %v536
    %v1954 = vunpack.c.l.b16 %v537
    %v1955 = vunpack.c.h.b16 %v537
    %v1956 = vunpack.c.l.b16 %v538
    %v1957 = vunpack.c.h.b16 %v538
    %v1958 = vunpack.c.l.b16 %v539
    %v1959 = vunpack.c.h.b16 %v539
    %v1960 = vunpack.c.l.b16 %v540
    %v1961 = vunpack.c.h.b16 %v540
    %v1962 = vunpack.c.l.b16 %v541
    %v1963 = vunpack.c.h.b16 %v541
    %v1964 = vunpack.c.l.b16 %v542
    %v1965 = vunpack.c.h.b16 %v542
    %v1966 = vunpack.c.l.b16 %v543
    %v1967 = vunpack.c.h.b16 %v543
    %v1968 = vunpack.c.l.b16 %v544
    %v1969 = vunpack.c.h.b16 %v544
    %v1970 = vunpack.c.l.b16 %v545
    %v1971 = vunpack.c.h.b16 %v545
    %v1972 = vunpack.c.l.b16 %v546
    %v1973 = vunpack.c.h.b16 %v546
    %v1974 = vunpack.c.l.b16 %v547
    %v1975 = vunpack.c.h.b16 %v547
    %v1976 = vunpack.c.l.b16 %v548
    %v1977 = vunpack.c.h.b16 %v548
    %v1978 = vunpack.c.l.b16 %v549
    %v1979 = vunpack.c.h.b16 %v549
    %v1980 = vunpack.c.l.b16 %v550
    %v1981 = vunpack.c.h.b16 %v550
    %v1982 = vunpack.c.l.b16 %v551
    %v1983 = vunpack.c.h.b16 %v551
    %v1984 = vunpack.c.l.b16 %v552
    %v1985 = vunpack.c.h.b16 %v552
    %v1986 = vunpack.c.l.b16 %v553
    %v1987 = vunpack.c.h.b16 %v553
    %v1988 = vunpack.c.l.b16 %v554
    %v1989 = vunpack.c.h.b16 %v554
    %v1990 = vunpack.c.l.b16 %v555
    %v1991 = vunpack.c.h.b16 %v555
    %v1992 = vunpack.c.l.b16 %v556
    %v1993 = vunpack.c.h.b16 %v556
    %v1994 = vunpack.c.l.b16 %v557
    %v1995 = vunpack.c.h.b16 %v557
    %v1996 = vunpack.c.l.b16 %v558
    %v1997 = vunpack.c.h.b16 %v558
    %v1998 = vunpack.c.l.b16 %v559
    %v1999 = vunpack.c.h.b16 %v559
    %v2000 = vunpack.c.l.b16 %v560
    %v2001 = vunpack.c.h.b16 %v560
    %v2002 = vunpack.c.l.b16 %v561
    %v2003 = vunpack.c.h.b16 %v561
    %v2004 = vunpack.c.l.b16 %v562
    %v2005 = vunpack.c.h.b16 %v562
    %v2006 = vunpack.c.l.b16 %v563
    %v2007 = vunpack.c.h.b16 %v563
    %v2008 = vunpack.c.l.b16 %v564
    %v2009 = vunpack.c.h.b16 %v564
    %v2010 = vunpack.c.l.b16 %v565
    %v2011 = vunpack.c.h.b16 %v565
    %v2012 = vunpack.c.l.b16 %v566
    %v2013 = vunpack.c.h.b16 %v566
    %v2014 = vunpack.c.l.b16 %v567
    %v2015 = vunpack.c.h.b16 %v567
    %v2016 = vunpack.c.l.b16 %v568
    %v2017 = vunpack.c.h.b16 %v568
    %v2018 = vunpack.c.l.b16 %v569
    %v2019 = vunpack.c.h.b16 %v569
    %v2020 = vunpack.c.l.b16 %v570
    %v2021 = vunpack.c.h.b16 %v570
    %v2022 = vunpack.c.l.b16 %v571
    %v2023 = vunpack.c.h.b16 %v571
    %v2024 = vunpack.c.l.b16 %v572
    %v2025 = vunpack.c.h.b16 %v572
    %v2026 = vunpack.c.l.b16 %v573
    %v2027 = vunpack.c.h.b16 %v573
    %v2028 = vunpack.c.l.b16 %v574
    %v2029 = vunpack.c.h.b16 %v574
    %v2030 = vunpack.c.l.b16 %v575
    %v2031 = vunpack.c.h.b16 %v575
    %v2032 = vunpack.c.l.b16 %v576
    %v2033 = vunpack.c.h.b16 %v576
    %v2034 = vunpack.c.l.b16 %v577
    %v2035 = vunpack.c.h.b16 %v577
    %v2036 = vunpack.c.l.b16 %v578
    %v2037 = vunpack.c.h.b16 %v578
    %v2038 = vunpack.c.l.b16 %v579
    %v2039 = vunpack.c.h.b16 %v579
    %v2040 = vunpack.c.l.b16 %v580
    %v2041 = vunpack.c.h.b16 %v580
    %v2042 = vunpack.c.l.b16 %v581
    %v2043 = vunpack.c.h.b16 %v581
    %v2044 = vunpack.c.l.b16 %v582
    %v2045 = vunpack.c.h.b16 %v582
    %v2046 = vunpack.c.l.b16 %v583
    %v2047 = vunpack.c.h.b16 %v583
    %v2048 = vunpack.c.l.b16 %v584
    %v2049 = vunpack.c.h.b16 %v584
    %v2050 = vunpack.c.l.b16 %v585
    %v2051 = vunpack.c.h.b16 %v585
    %v2052 = vunpack.c.l.b16 %v586
    %v2053 = vunpack.c.h.b16 %v586
    %v2054 = vunpack.c.l.b16 %v587
    %v2055 = vunpack.c.h.b16 %v587
    %v2056 = vunpack.c.l.b16 %v588
    %v2057 = vunpack.c.h.b16 %v588
    %v2058 = vunpack.c.l.b16 %v589
    %v2059 = vunpack.c.h.b16 %v589
    %v2060 = vunpack.c.l.b16 %v590
    %v2061 = vunpack.c.h.b16 %v590
    %v2062 = vunpack.c.l.b16 %v591
    %v2063 = vunpack.c.h.b16 %v591
    %v2064 = vunpack.c.l.b16 %v592
    %v2065 = vunpack.c.h.b16 %v592
    %v2066 = vunpack.c.l.b16 %v593
    %v2067 = vunpack.c.h.b16 %v593
    %v2068 = vunpack.c.l.b16 %v594
    %v2069 = vunpack.c.h.b16 %v594
    %v2070 = vunpack.c.l.b16 %v595
    %v2071 = vunpack.c.h.b16 %v595
    %v2072 = vunpack.c.l.b16 %v596
    %v2073 = vunpack.c.h.b16 %v596
    %v2074 = vunpack.c.l.b16 %v597
    %v2075 = vunpack.c.h.b16 %v597
    %v2076 = vunpack.c.l.b16 %v598
    %v2077 = vunpack.c.h.b16 %v598
    %v2078 = vunpack.c.l.b16 %v599
    %v2079 = vunpack.c.h.b16 %v599
    %v2080 = vunpack.c.l.b16 %v600
    %v2081 = vunpack.c.h.b16 %v600
    %v2082 = vunpack.c.l.b16 %v601
    %v2083 = vunpack.c.h.b16 %v601
    %v2084 = vunpack.c.l.b16 %v602
    %v2085 = vunpack.c.h.b16 %v602
    %v2086 = vunpack.c.l.b16 %v603
    %v2087 = vunpack.c.h.b16 %v603
    %v2088 = vunpack.c.l.b16 %v604
    %v2089 = vunpack.c.h.b16 %v604
    %v2090 = vunpack.c.l.b16 %v605
    %v2091 = vunpack.c.h.b16 %v605
    %v2092 = vunpack.c.l.b16 %v606
    %v2093 = vunpack.c.h.b16 %v606
    %v2094 = vunpack.c.l.b16 %v607
    %v2095 = vunpack.c.h.b16 %v607
    %v2096 = vunpack.c.l.b16 %v608
    %v2097 = vunpack.c.h.b16 %v608
    %v2098 = vunpack.c.l.b16 %v609
    %v2099 = vunpack.c.h.b16 %v609
    %v2100 = vunpack.c.l.b16 %v610
    %v2101 = vunpack.c.h.b16 %v610
    %v2102 = vunpack.c.l.b16 %v611
    %v2103 = vunpack.c.h.b16 %v611
    %v2104 = vunpack.c.l.b16 %v612
    %v2105 = vunpack.c.h.b16 %v612
    %v2106 = vunpack.c.l.b16 %v613
    %v2107 = vunpack.c.h.b16 %v613
    %v2108 = vunpack.c.l.b16 %v614
    %v2109 = vunpack.c.h.b16 %v614
    %v2110 = vunpack.c.l.b16 %v615
    %v2111 = vunpack.c.h.b16 %v615
    %v2112 = vunpack.c.l.b16 %v616
    %v2113 = vunpack.c.h.b16 %v616
    %v2114 = vunpack.c.l.b16 %v617
    %v2115 = vunpack.c.h.b16 %v617
    %v2116 = vunpack.c.l.b16 %v618
    %v2117 = vunpack.c.h.b16 %v618
    %v2118 = vunpack.c.l.b16 %v619
    %v2119 = vunpack.c.h.b16 %v619
    %v2120 = vunpack.c.l.b16 %v620
    %v2121 = vunpack.c.h.b16 %v620
    %v2122 = vunpack.c.l.b16 %v621
    %v2123 = vunpack.c.h.b16 %v621
    %v2124 = vunpack.c.l.b16 %v622
    %v2125 = vunpack.c.h.b16 %v622
    %v2126 = vunpack.c.l.b16 %v623
    %v2127 = vunpack.c.h.b16 %v623
    %v2128 = vunpack.c.l.b16 %v624
    %v2129 = vunpack.c.h.b16 %v624
    %v2130 = vunpack.c.l.b16 %v625
    %v2131 = vunpack.c.h.b16 %v625
    %v2132 = vunpack.c.l.b16 %v626
    %v2133 = vunpack.c.h.b16 %v626
    %v2134 = vunpack.c.l.b16 %v627
    %v2135 = vunpack.c.h.b16 %v627
    %v2136 = vunpack.c.l.b16 %v628
    %v2137 = vunpack.c.h.b16 %v628
    %v2138 = vunpack.c.l.b16 %v629
    %v2139 = vunpack.c.h.b16 %v629
    %v2140 = vunpack.c.l.b16 %v630
    %v2141 = vunpack.c.h.b16 %v630
    %v2142 = vunpack.c.l.b16 %v631
    %v2143 = vunpack.c.h.b16 %v631
    %v2144 = vunpack.c.l.b16 %v632
    %v2145 = vunpack.c.h.b16 %v632
    %v2146 = vunpack.c.l.b16 %v633
    %v2147 = vunpack.c.h.b16 %v633
    %v2148 = vunpack.c.l.b16 %v634
    %v2149 = vunpack.c.h.b16 %v634
    %v2150 = vunpack.c.l.b16 %v635
    %v2151 = vunpack.c.h.b16 %v635
    %v2152 = vunpack.c.l.b16 %v636
    %v2153 = vunpack.c.h.b16 %v636
    %v2154 = vunpack.c.l.b16 %v637
    %v2155 = vunpack.c.h.b16 %v637
    %v2156 = vunpack.c.l.b16 %v638
    %v2157 = vunpack.c.h.b16 %v638
    %v2158 = vunpack.c.l.b16 %v639
    %v2159 = vunpack.c.h.b16 %v639
    %v2160 = vunpack.c.l.b16 %v640
    %v2161 = vunpack.c.h.b16 %v640
    %v2162 = vunpack.c.l.b16 %v641
    %v2163 = vunpack.c.h.b16 %v641
    %v2164 = vunpack.c.l.b16 %v642
    %v2165 = vunpack.c.h.b16 %v642
    %v2166 = vunpack.c.l.b16 %v643
    %v2167 = vunpack.c.h.b16 %v643
    %v2168 = vunpack.c.l.b16 %v644
    %v2169 = vunpack.c.h.b16 %v644
    %v2170 = vunpack.c.l.b16 %v645
    %v2171 = vunpack.c.h.b16 %v645
    %v2172 = vunpack.c.l.b16 %v646
    %v2173 = vunpack.c.h.b16 %v646
    %v2174 = vunpack.c.l.b16 %v647
    %v2175 = vunpack.c.h.b16 %v647
    %v2176 = vunpack.c.l.b16 %v648
    %v2177 = vunpack.c.h.b16 %v648
    %v2178 = vunpack.c.l.b16 %v649
    %v2179 = vunpack.c.h.b16 %v649
    %v2180 = vunpack.c.l.b16 %v650
    %v2181 = vunpack.c.h.b16 %v650
    %v2182 = vunpack.c.l.b16 %v651
    %v2183 = vunpack.c.h.b16 %v651
    %v2184 = vunpack.c.l.b16 %v652
    %v2185 = vunpack.c.h.b16 %v652
    %v2186 = vunpack.c.l.b16 %v653
    %v2187 = vunpack.c.h.b16 %v653
    %v2188 = vunpack.c.l.b16 %v654
    %v2189 = vunpack.c.h.b16 %v654
    %v2190 = vunpack.c.l.b16 %v655
    %v2191 = vunpack.c.h.b16 %v655
    %v2192 = vunpack.c.l.b16 %v656
    %v2193 = vunpack.c.h.b16 %v656
    %v2194 = vunpack.c.l.b16 %v657
    %v2195 = vunpack.c.h.b16 %v657
    %v2196 = vunpack.c.l.b16 %v658
    %v2197 = vunpack.c.h.b16 %v658
    %v2198 = vunpack.c.l.b16 %v659
    %v2199 = vunpack.c.h.b16 %v659
    %v2200 = vunpack.c.l.b16 %v660
    %v2201 = vunpack.c.h.b16 %v660
    %v2202 = vunpack.c.l.b16 %v661
    %v2203 = vunpack.c.h.b16 %v661
    %v2204 = vunpack.c.l.b16 %v662
    %v2205 = vunpack.c.h.b16 %v662
    %v2206 = vunpack.c.l.b16 %v663
    %v2207 = vunpack.c.h.b16 %v663
    %v2208 = vunpack.c.l.b16 %v664
    %v2209 = vunpack.c.h.b16 %v664
    %v2210 = vunpack.c.l.b16 %v665
    %v2211 = vunpack.c.h.b16 %v665
    %v2212 = vunpack.c.l.b16 %v666
    %v2213 = vunpack.c.h.b16 %v666
    %v2214 = vunpack.c.l.b16 %v667
    %v2215 = vunpack.c.h.b16 %v667
    %v2216 = vunpack.c.l.b16 %v668
    %v2217 = vunpack.c.h.b16 %v668
    %v2218 = vunpack.c.l.b16 %v669
    %v2219 = vunpack.c.h.b16 %v669
    %v2220 = vunpack.c.l.b16 %v670
    %v2221 = vunpack.c.h.b16 %v670
    %v2222 = vunpack.c.l.b16 %v671
    %v2223 = vunpack.c.h.b16 %v671
    %v2224 = vunpack.c.l.b16 %v672
    %v2225 = vunpack.c.h.b16 %v672
    %v2226 = vunpack.c.l.b16 %v673
    %v2227 = vunpack.c.h.b16 %v673
    %v2228 = vunpack.c.l.b16 %v674
    %v2229 = vunpack.c.h.b16 %v674
    %v2230 = vunpack.c.l.b16 %v675
    %v2231 = vunpack.c.h.b16 %v675
    %v2232 = vunpack.c.l.b16 %v676
    %v2233 = vunpack.c.h.b16 %v676
    %v2234 = vunpack.c.l.b16 %v677
    %v2235 = vunpack.c.h.b16 %v677
    %v2236 = vunpack.c.l.b16 %v678
    %v2237 = vunpack.c.h.b16 %v678
    %v2238 = vunpack.c.l.b16 %v679
    %v2239 = vunpack.c.h.b16 %v679
    %v2240 = vunpack.c.l.b16 %v680
    %v2241 = vunpack.c.h.b16 %v680
    %v2242 = vunpack.c.l.b16 %v681
    %v2243 = vunpack.c.h.b16 %v681
    %v2244 = vunpack.c.l.b16 %v682
    %v2245 = vunpack.c.h.b16 %v682
    %v2246 = vunpack.c.l.b16 %v683
    %v2247 = vunpack.c.h.b16 %v683
    %v2248 = vpack.c.b16 %v1232, %v1224
    %v2249 = vpack.c.b16 %v1233, %v1225
    %v2250 = vpack.c.b16 %v1234, %v1226
    %v2251 = vpack.c.b16 %v1235, %v1227
    %v2252 = vpack.c.b16 %v1236, %v1228
    %v2253 = vpack.c.b16 %v1237, %v1229
    %v2254 = vpack.c.b16 %v1238, %v1230
    %v2255 = vpack.c.b16 %v1239, %v1231
    %v2256 = vpack.c.b16 %v1248, %v1240
    %v2257 = vpack.c.b16 %v1249, %v1241
    %v2258 = vpack.c.b16 %v1250, %v1242
    %v2259 = vpack.c.b16 %v1251, %v1243
    %v2260 = vpack.c.b16 %v1252, %v1244
    %v2261 = vpack.c.b16 %v1253, %v1245
    %v2262 = vpack.c.b16 %v1254, %v1246
    %v2263 = vpack.c.b16 %v1255, %v1247
    %v2264 = vpack.c.b16 %v1264, %v1256
    %v2265 = vpack.c.b16 %v1265, %v1257
    %v2266 = vpack.c.b16 %v1266, %v1258
    %v2267 = vpack.c.b16 %v1267, %v1259
    %v2268 = vpack.c.b16 %v1268, %v1260
    %v2269 = vpack.c.b16 %v1269, %v1261
    %v2270 = vpack.c.b16 %v1270, %v1262
    %v2271 = vpack.c.b16 %v1271, %v1263
    %v2272 = vpack.c.b16 %v1280, %v1272
    %v2273 = vpack.c.b16 %v1281, %v1273
    %v2274 = vpack.c.b16 %v1282, %v1274
    %v2275 = vpack.c.b16 %v1283, %v1275
    %v2276 = vpack.c.b16 %v1284, %v1276
    %v2277 = vpack.c.b16 %v1285, %v1277
    %v2278 = vpack.c.b16 %v1286, %v1278
    %v2279 = vpack.c.b16 %v1287, %v1279
    %v2280 = vpack.c.b16 %v1296, %v1288
    %v2281 = vpack.c.b16 %v1297, %v1289
    %v2282 = vpack.c.b16 %v1298, %v1290
    %v2283 = vpack.c.b16 %v1299, %v1291
    %v2284 = vpack.c.b16 %v1300, %v1292
    %v2285 = vpack.c.b16 %v1301, %v1293
    %v2286 = vpack.c.b16 %v1302, %v1294
    %v2287 = vpack.c.b16 %v1303, %v1295
    %v2288 = vpack.c.b16 %v1312, %v1304
    %v2289 = vpack.c.b16 %v1313, %v1305
    %v2290 = vpack.c.b16 %v1314, %v1306
    %v2291 = vpack.c.b16 %v1315, %v1307
    %v2292 = vpack.c.b16 %v1316, %v1308
    %v2293 = vpack.c.b16 %v1317, %v1309
    %v2294 = vpack.c.b16 %v1318, %v1310
    %v2295 = vpack.c.b16 %v1319, %v1311
    %v2296 = vpack.c.b16 %v1328, %v1320
    %v2297 = vpack.c.b16 %v1329, %v1321
    %v2298 = vpack.c.b16 %v1330, %v1322
    %v2299 = vpack.c.b16 %v1331, %v1323
    %v2300 = vpack.c.b16 %v1332, %v1324
    %v2301 = vpack.c.b16 %v1333, %v1325
    %v2302 = vpack.c.b16 %v1334, %v1326
    %v2303 = vpack.c.b16 %v1335, %v1327
    %v2304 = vpack.c.b16 %v1344, %v1336
    %v2305 = vpack.c.b16 %v1345, %v1337
    %v2306 = vpack.c.b16 %v1346, %v1338
    %v2307 = vpack.c.b16 %v1347, %v1339
    %v2308 = vpack.c.b16 %v1348, %v1340
    %v2309 = vpack.c.b16 %v1349, %v1341
    %v2310 = vpack.c.b16 %v1350, %v1342
    %v2311 = vpack.c.b16 %v1351, %v1343
    %v2312 = vpack.c.b16 %v1360, %v1352
    %v2313 = vpack.c.b16 %v1361, %v1353
    %v2314 = vpack.c.b16 %v1362, %v1354
    %v2315 = vpack.c.b16 %v1363, %v1355
    %v2316 = vpack.c.b16 %v1364, %v1356
    %v2317 = vpack.c.b16 %v1365, %v1357
    %v2318 = vpack.c.b16 %v1366, %v1358
    %v2319 = vpack.c.b16 %v1367, %v1359
    %v2320 = vpack.c.b16 %v1376, %v1368
    %v2321 = vpack.c.b16 %v1377, %v1369
    %v2322 = vpack.c.b16 %v1378, %v1370
    %v2323 = vpack.c.b16 %v1379, %v1371
    %v2324 = vpack.c.b16 %v1380, %v1372
    %v2325 = vpack.c.b16 %v1381, %v1373
    %v2326 = vpack.c.b16 %v1382, %v1374
    %v2327 = vpack.c.b16 %v1383, %v1375
    %v2328 = vpack.c.b16 %v1392, %v1384
    %v2329 = vpack.c.b16 %v1393, %v1385
    %v2330 = vpack.c.b16 %v1394, %v1386
    %v2331 = vpack.c.b16 %v1395, %v1387
    %v2332 = vpack.c.b16 %v1396, %v1388
    %v2333 = vpack.c.b16 %v1397, %v1389
    %v2334 = vpack.c.b16 %v1398, %v1390
    %v2335 = vpack.c.b16 %v1399, %v1391
    %v2336 = vpack.c.b16 %v1408, %v1400
    %v2337 = vpack.c.b16 %v1409, %v1401
    %v2338 = vpack.c.b16 %v1410, %v1402
    %v2339 = vpack.c.b16 %v1411, %v1403
    %v2340 = vpack.c.b16 %v1412, %v1404
    %v2341 = vpack.c.b16 %v1413, %v1405
    %v2342 = vpack.c.b16 %v1414, %v1406
    %v2343 = vpack.c.b16 %v1415, %v1407
    %v2344 = vpack.c.b16 %v1424, %v1416
    %v2345 = vpack.c.b16 %v1425, %v1417
    %v2346 = vpack.c.b16 %v1426, %v1418
    %v2347 = vpack.c.b16 %v1427, %v1419
    %v2348 = vpack.c.b16 %v1428, %v1420
    %v2349 = vpack.c.b16 %v1429, %v1421
    %v2350 = vpack.c.b16 %v1430, %v1422
    %v2351 = vpack.c.b16 %v1431, %v1423
    %v2352 = vpack.c.b16 %v1440, %v1432
    %v2353 = vpack.c.b16 %v1441, %v1433
    %v2354 = vpack.c.b16 %v1442, %v1434
    %v2355 = vpack.c.b16 %v1443, %v1435
    %v2356 = vpack.c.b16 %v1444, %v1436
    %v2357 = vpack.c.b16 %v1445, %v1437
    %v2358 = vpack.c.b16 %v1446, %v1438
    %v2359 = vpack.c.b16 %v1447, %v1439
    %v2360 = vpack.c.b16 %v1456, %v1448
    %v2361 = vpack.c.b16 %v1457, %v1449
    %v2362 = vpack.c.b16 %v1458, %v1450
    %v2363 = vpack.c.b16 %v1459, %v1451
    %v2364 = vpack.c.b16 %v1460, %v1452
    %v2365 = vpack.c.b16 %v1461, %v1453
    %v2366 = vpack.c.b16 %v1462, %v1454
    %v2367 = vpack.c.b16 %v1463, %v1455
    %v2368 = vpack.c.b16 %v1472, %v1464
    %v2369 = vpack.c.b16 %v1473, %v1465
    %v2370 = vpack.c.b16 %v1474, %v1466
    %v2371 = vpack.c.b16 %v1475, %v1467
    %v2372 = vpack.c.b16 %v1476, %v1468
    %v2373 = vpack.c.b16 %v1477, %v1469
    %v2374 = vpack.c.b16 %v1478, %v1470
    %v2375 = vpack.c.b16 %v1479, %v1471
    %v2376 = vpack.c.b16 %v1488, %v1480
    %v2377 = vpack.c.b16 %v1489, %v1481
    %v2378 = vpack.c.b16 %v1490, %v1482
    %v2379 = vpack.c.b16 %v1491, %v1483
    %v2380 = vpack.c.b16 %v1492, %v1484
    %v2381 = vpack.c.b16 %v1493, %v1485
    %v2382 = vpack.c.b16 %v1494, %v1486
    %v2383 = vpack.c.b16 %v1495, %v1487
    %v2384 = vpack.c.b16 %v1504, %v1496
    %v2385 = vpack.c.b16 %v1505, %v1497
    %v2386 = vpack.c.b16 %v1506, %v1498
    %v2387 = vpack.c.b16 %v1507, %v1499
    %v2388 = vpack.c.b16 %v1508, %v1500
    %v2389 = vpack.c.b16 %v1509, %v1501
    %v2390 = vpack.c.b16 %v1510, %v1502
    %v2391 = vpack.c.b16 %v1511, %v1503
    %v2392 = vpack.c.b16 %v1520, %v1512
    %v2393 = vpack.c.b16 %v1521, %v1513
    %v2394 = vpack.c.b16 %v1522, %v1514
    %v2395 = vpack.c.b16 %v1523, %v1515
    %v2396 = vpack.c.b16 %v1524, %v1516
    %v2397 = vpack.c.b16 %v1525, %v1517
    %v2398 = vpack.c.b16 %v1526, %v1518
    %v2399 = vpack.c.b16 %v1527, %v1519
    %v2400 = vpack.c.b16 %v1536, %v1528
    %v2401 = vpack.c.b16 %v1537, %v1529
    %v2402 = vpack.c.b16 %v1538, %v1530
    %v2403 = vpack.c.b16 %v1539, %v1531
    %v2404 = vpack.c.b16 %v1540, %v1532
    %v2405 = vpack.c.b16 %v1541, %v1533
    %v2406 = vpack.c.b16 %v1542, %v1534
    %v2407 = vpack.c.b16 %v1543, %v1535
    %v2408 = vpack.c.b16 %v1552, %v1544
    %v2409 = vpack.c.b16 %v1553, %v1545
    %v2410 = vpack.c.b16 %v1554, %v1546
    %v2411 = vpack.c.b16 %v1555, %v1547
    %v2412 = vpack.c.b16 %v1556, %v1548
    %v2413 = vpack.c.b16 %v1557, %v1549
    %v2414 = vpack.c.b16 %v1558, %v1550
    %v2415 = vpack.c.b16 %v1559, %v1551
    %v2416 = vpack.c.b16 %v1568, %v1560
    %v2417 = vpack.c.b16 %v1569, %v1561
    %v2418 = vpack.c.b16 %v1570, %v1562
    %v2419 = vpack.c.b16 %v1571, %v1563
    %v2420 = vpack.c.b16 %v1572, %v1564
    %v2421 = vpack.c.b16 %v1573, %v1565
    %v2422 = vpack.c.b16 %v1574, %v1566
    %v2423 = vpack.c.b16 %v1575, %v1567
    %v2424 = vpack.c.b16 %v1584, %v1576
    %v2425 = vpack.c.b16 %v1585, %v1577
    %v2426 = vpack.c.b16 %v1586, %v1578
    %v2427 = vpack.c.b16 %v1587, %v1579
    %v2428 = vpack.c.b16 %v1588, %v1580
    %v2429 = vpack.c.b16 %v1589, %v1581
    %v2430 = vpack.c.b16 %v1590, %v1582
    %v2431 = vpack.c.b16 %v1591, %v1583
    %v2432 = vpack.c.b16 %v1600, %v1592
    %v2433 = vpack.c.b16 %v1601, %v1593
    %v2434 = vpack.c.b16 %v1602, %v1594
    %v2435 = vpack.c.b16 %v1603, %v1595
    %v2436 = vpack.c.b16 %v1604, %v1596
    %v2437 = vpack.c.b16 %v1605, %v1597
    %v2438 = vpack.c.b16 %v1606, %v1598
    %v2439 = vpack.c.b16 %v1607, %v1599
    %v2440 = vpack.c.b16 %v1616, %v1608
    %v2441 = vpack.c.b16 %v1617, %v1609
    %v2442 = vpack.c.b16 %v1618, %v1610
    %v2443 = vpack.c.b16 %v1619, %v1611
    %v2444 = vpack.c.b16 %v1620, %v1612
    %v2445 = vpack.c.b16 %v1621, %v1613
    %v2446 = vpack.c.b16 %v1622, %v1614
    %v2447 = vpack.c.b16 %v1623, %v1615
    %v2448 = vpack.c.b16 %v1632, %v1624
    %v2449 = vpack.c.b16 %v1633, %v1625
    %v2450 = vpack.c.b16 %v1634, %v1626
    %v2451 = vpack.c.b16 %v1635, %v1627
    %v2452 = vpack.c.b16 %v1636, %v1628
    %v2453 = vpack.c.b16 %v1637, %v1629
    %v2454 = vpack.c.b16 %v1638, %v1630
    %v2455 = vpack.c.b16 %v1639, %v1631
    %v2456 = vpack.c.b16 %v1648, %v1640
    %v2457 = vpack.c.b16 %v1649, %v1641
    %v2458 = vpack.c.b16 %v1650, %v1642
    %v2459 = vpack.c.b16 %v1651, %v1643
    %v2460 = vpack.c.b16 %v1652, %v1644
    %v2461 = vpack.c.b16 %v1653, %v1645
    %v2462 = vpack.c.b16 %v1654, %v1646
    %v2463 = vpack.c.b16 %v1655, %v1647
    %v2464 = vpack.c.b16 %v1664, %v1656
    %v2465 = vpack.c.b16 %v1665, %v1657
    %v2466 = vpack.c.b16 %v1666, %v1658
    %v2467 = vpack.c.b16 %v1667, %v1659
    %v2468 = vpack.c.b16 %v1668, %v1660
    %v2469 = vpack.c.b16 %v1669, %v1661
    %v2470 = vpack.c.b16 %v1670, %v1662
    %v2471 = vpack.c.b16 %v1671, %v1663
    %v2472 = vpack.c.b16 %v1680, %v1672
    %v2473 = vpack.c.b16 %v1681, %v1673
    %v2474 = vpack.c.b16 %v1682, %v1674
    %v2475 = vpack.c.b16 %v1683, %v1675
    %v2476 = vpack.c.b16 %v1684, %v1676
    %v2477 = vpack.c.b16 %v1685, %v1677
    %v2478 = vpack.c.b16 %v1686, %v1678
    %v2479 = vpack.c.b16 %v1687, %v1679
    %v2480 = vpack.c.b16 %v1696, %v1688
    %v2481 = vpack.c.b16 %v1697, %v1689
    %v2482 = vpack.c.b16 %v1698, %v1690
    %v2483 = vpack.c.b16 %v1699, %v1691
    %v2484 = vpack.c.b16 %v1700, %v1692
    %v2485 = vpack.c.b16 %v1701, %v1693
    %v2486 = vpack.c.b16 %v1702, %v1694
    %v2487 = vpack.c.b16 %v1703, %v1695
    %v2488 = vpack.c.b16 %v1712, %v1704
    %v2489 = vpack.c.b16 %v1713, %v1705
    %v2490 = vpack.c.b16 %v1714, %v1706
    %v2491 = vpack.c.b16 %v1715, %v1707
    %v2492 = vpack.c.b16 %v1716, %v1708
    %v2493 = vpack.c.b16 %v1717, %v1709
    %v2494 = vpack.c.b16 %v1718, %v1710
    %v2495 = vpack.c.b16 %v1719, %v1711
    %v2496 = vpack.c.b16 %v1728, %v1720
    %v2497 = vpack.c.b16 %v1729, %v1721
    %v2498 = vpack.c.b16 %v1730, %v1722
    %v2499 = vpack.c.b16 %v1731, %v1723
    %v2500 = vpack.c.b16 %v1732, %v1724
    %v2501 = vpack.c.b16 %v1733, %v1725
    %v2502 = vpack.c.b16 %v1734, %v1726
    %v2503 = vpack.c.b16 %v1735, %v1727
    %v2504 = vpack.c.b16 %v1744, %v1736
    %v2505 = vpack.c.b16 %v1745, %v1737
    %v2506 = vpack.c.b16 %v1746, %v1738
    %v2507 = vpack.c.b16 %v1747, %v1739
    %v2508 = vpack.c.b16 %v1748, %v1740
    %v2509 = vpack.c.b16 %v1749, %v1741
    %v2510 = vpack.c.b16 %v1750, %v1742
    %v2511 = vpack.c.b16 %v1751, %v1743
    %v2512 = vpack.c.b16 %v1760, %v1752
    %v2513 = vpack.c.b16 %v1761, %v1753
    %v2514 = vpack.c.b16 %v1762, %v1754
    %v2515 = vpack.c.b16 %v1763, %v1755
    %v2516 = vpack.c.b16 %v1764, %v1756
    %v2517 = vpack.c.b16 %v1765, %v1757
    %v2518 = vpack.c.b16 %v1766, %v1758
    %v2519 = vpack.c.b16 %v1767, %v1759
    %v2520 = vpack.c.b16 %v1776, %v1768
    %v2521 = vpack.c.b16 %v1777, %v1769
    %v2522 = vpack.c.b16 %v1778, %v1770
    %v2523 = vpack.c.b16 %v1779, %v1771
    %v2524 = vpack.c.b16 %v1780, %v1772
    %v2525 = vpack.c.b16 %v1781, %v1773
    %v2526 = vpack.c.b16 %v1782, %v1774
    %v2527 = vpack.c.b16 %v1783, %v1775
    %v2528 = vpack.c.b16 %v1792, %v1784
    %v2529 = vpack.c.b16 %v1793, %v1785
    %v2530 = vpack.c.b16 %v1794, %v1786
    %v2531 = vpack.c.b16 %v1795, %v1787
    %v2532 = vpack.c.b16 %v1796, %v1788
    %v2533 = vpack.c.b16 %v1797, %v1789
    %v2534 = vpack.c.b16 %v1798, %v1790
    %v2535 = vpack.c.b16 %v1799, %v1791
    %v2536 = vpack.c.b16 %v1808, %v1800
    %v2537 = vpack.c.b16 %v1809, %v1801
    %v2538 = vpack.c.b16 %v1810, %v1802
    %v2539 = vpack.c.b16 %v1811, %v1803
    %v2540 = vpack.c.b16 %v1812, %v1804
    %v2541 = vpack.c.b16 %v1813, %v1805
    %v2542 = vpack.c.b16 %v1814, %v1806
    %v2543 = vpack.c.b16 %v1815, %v1807
    %v2544 = vpack.c.b16 %v1824, %v1816
    %v2545 = vpack.c.b16 %v1825, %v1817
    %v2546 = vpack.c.b16 %v1826, %v1818
    %v2547 = vpack.c.b16 %v1827, %v1819
    %v2548 = vpack.c.b16 %v1828, %v1820
    %v2549 = vpack.c.b16 %v1829, %v1821
    %v2550 = vpack.c.b16 %v1830, %v1822
    %v2551 = vpack.c.b16 %v1831, %v1823
    %v2552 = vpack.c.b16 %v1840, %v1832
    %v2553 = vpack.c.b16 %v1841, %v1833
    %v2554 = vpack.c.b16 %v1842, %v1834
    %v2555 = vpack.c.b16 %v1843, %v1835
    %v2556 = vpack.c.b16 %v1844, %v1836
    %v2557 = vpack.c.b16 %v1845, %v1837
    %v2558 = vpack.c.b16 %v1846, %v1838
    %v2559 = vpack.c.b16 %v1847, %v1839
    %v2560 = vpack.c.b16 %v1856, %v1848
    %v2561 = vpack.c.b16 %v1857, %v1849
    %v2562 = vpack.c.b16 %v1858, %v1850
    %v2563 = vpack.c.b16 %v1859, %v1851
    %v2564 = vpack.c.b16 %v1860, %v1852
    %v2565 = vpack.c.b16 %v1861, %v1853
    %v2566 = vpack.c.b16 %v1862, %v1854
    %v2567 = vpack.c.b16 %v1863, %v1855
    %v2568 = vpack.c.b16 %v1872, %v1864
    %v2569 = vpack.c.b16 %v1873, %v1865
    %v2570 = vpack.c.b16 %v1874, %v1866
    %v2571 = vpack.c.b16 %v1875, %v1867
    %v2572 = vpack.c.b16 %v1876, %v1868
    %v2573 = vpack.c.b16 %v1877, %v1869
    %v2574 = vpack.c.b16 %v1878, %v1870
    %v2575 = vpack.c.b16 %v1879, %v1871
    %v2576 = vpack.c.b16 %v1888, %v1880
    %v2577 = vpack.c.b16 %v1889, %v1881
    %v2578 = vpack.c.b16 %v1890, %v1882
    %v2579 = vpack.c.b16 %v1891, %v1883
    %v2580 = vpack.c.b16 %v1892, %v1884
    %v2581 = vpack.c.b16 %v1893, %v1885
    %v2582 = vpack.c.b16 %v1894, %v1886
    %v2583 = vpack.c.b16 %v1895, %v1887
    %v2584 = vpack.c.b16 %v1904, %v1896
    %v2585 = vpack.c.b16 %v1905, %v1897
    %v2586 = vpack.c.b16 %v1906, %v1898
    %v2587 = vpack.c.b16 %v1907, %v1899
    %v2588 = vpack.c.b16 %v1908, %v1900
    %v2589 = vpack.c.b16 %v1909, %v1901
    %v2590 = vpack.c.b16 %v1910, %v1902
    %v2591 = vpack.c.b16 %v1911, %v1903
    %v2592 = vpack.c.b16 %v1920, %v1912
    %v2593 = vpack.c.b16 %v1921, %v1913
    %v2594 = vpack.c.b16 %v1922, %v1914
    %v2595 = vpack.c.b16 %v1923, %v1915
    %v2596 = vpack.c.b16 %v1924, %v1916
    %v2597 = vpack.c.b16 %v1925, %v1917
    %v2598 = vpack.c.b16 %v1926, %v1918
    %v2599 = vpack.c.b16 %v1927, %v1919
    %v2600 = vpack.c.b16 %v1936, %v1928
    %v2601 = vpack.c.b16 %v1937, %v1929
    %v2602 = vpack.c.b16 %v1938, %v1930
    %v2603 = vpack.c.b16 %v1939, %v1931
    %v2604 = vpack.c.b16 %v1940, %v1932
    %v2605 = vpack.c.b16 %v1941, %v1933
    %v2606 = vpack.c.b16 %v1942, %v1934
    %v2607 = vpack.c.b16 %v1943, %v1935
    %v2608 = vpack.c.b16 %v1952, %v1944
    %v2609 = vpack.c.b16 %v1953, %v1945
    %v2610 = vpack.c.b16 %v1954, %v1946
    %v2611 = vpack.c.b16 %v1955, %v1947
    %v2612 = vpack.c.b16 %v1956, %v1948
    %v2613 = vpack.c.b16 %v1957, %v1949
    %v2614 = vpack.c.b16 %v1958, %v1950
    %v2615 = vpack.c.b16 %v1959, %v1951
    %v2616 = vpack.c.b16 %v1968, %v1960
    %v2617 = vpack.c.b16 %v1969, %v1961
    %v2618 = vpack.c.b16 %v1970, %v1962
    %v2619 = vpack.c.b16 %v1971, %v1963
    %v2620 = vpack.c.b16 %v1972, %v1964
    %v2621 = vpack.c.b16 %v1973, %v1965
    %v2622 = vpack.c.b16 %v1974, %v1966
    %v2623 = vpack.c.b16 %v1975, %v1967
    %v2624 = vpack.c.b16 %v1984, %v1976
    %v2625 = vpack.c.b16 %v1985, %v1977
    %v2626 = vpack.c.b16 %v1986, %v1978
    %v2627 = vpack.c.b16 %v1987, %v1979
    %v2628 = vpack.c.b16 %v1988, %v1980
    %v2629 = vpack.c.b16 %v1989, %v1981
    %v2630 = vpack.c.b16 %v1990, %v1982
    %v2631 = vpack.c.b16 %v1991, %v1983
    %v2632 = vpack.c.b16 %v2000, %v1992
    %v2633 = vpack.c.b16 %v2001, %v1993
    %v2634 = vpack.c.b16 %v2002, %v1994
    %v2635 = vpack.c.b16 %v2003, %v1995
    %v2636 = vpack.c.b16 %v2004, %v1996
    %v2637 = vpack.c.b16 %v2005, %v1997
    %v2638 = vpack.c.b16 %v2006, %v1998
    %v2639 = vpack.c.b16 %v2007, %v1999
    %v2640 = vpack.c.b16 %v2016, %v2008
    %v2641 = vpack.c.b16 %v2017, %v2009
    %v2642 = vpack.c.b16 %v2018, %v2010
    %v2643 = vpack.c.b16 %v2019, %v2011
    %v2644 = vpack.c.b16 %v2020, %v2012
    %v2645 = vpack.c.b16 %v2021, %v2013
    %v2646 = vpack.c.b16 %v2022, %v2014
    %v2647 = vpack.c.b16 %v2023, %v2015
    %v2648 = vpack.c.b16 %v2032, %v2024
    %v2649 = vpack.c.b16 %v2033, %v2025
    %v2650 = vpack.c.b16 %v2034, %v2026
    %v2651 = vpack.c.b16 %v2035, %v2027
    %v2652 = vpack.c.b16 %v2036, %v2028
    %v2653 = vpack.c.b16 %v2037, %v2029
    %v2654 = vpack.c.b16 %v2038, %v2030
    %v2655 = vpack.c.b16 %v2039, %v2031
    %v2656 = vpack.c.b16 %v2048, %v2040
    %v2657 = vpack.c.b16 %v2049, %v2041
    %v2658 = vpack.c.b16 %v2050, %v2042
    %v2659 = vpack.c.b16 %v2051, %v2043
    %v2660 = vpack.c.b16 %v2052, %v2044
    %v2661 = vpack.c.b16 %v2053, %v2045
    %v2662 = vpack.c.b16 %v2054, %v2046
    %v2663 = vpack.c.b16 %v2055, %v2047
    %v2664 = vpack.c.b16 %v2064, %v2056
    %v2665 = vpack.c.b16 %v2065, %v2057
    %v2666 = vpack.c.b16 %v2066, %v2058
    %v2667 = vpack.c.b16 %v2067, %v2059
    %v2668 = vpack.c.b16 %v2068, %v2060
    %v2669 = vpack.c.b16 %v2069, %v2061
    %v2670 = vpack.c.b16 %v2070, %v2062
    %v2671 = vpack.c.b16 %v2071, %v2063
    %v2672 = vpack.c.b16 %v2080, %v2072
    %v2673 = vpack.c.b16 %v2081, %v2073
    %v2674 = vpack.c.b16 %v2082, %v2074
    %v2675 = vpack.c.b16 %v2083, %v2075
    %v2676 = vpack.c.b16 %v2084, %v2076
    %v2677 = vpack.c.b16 %v2085, %v2077
    %v2678 = vpack.c.b16 %v2086, %v2078
    %v2679 = vpack.c.b16 %v2087, %v2079
    %v2680 = vpack.c.b16 %v2096, %v2088
    %v2681 = vpack.c.b16 %v2097, %v2089
    %v2682 = vpack.c.b16 %v2098, %v2090
    %v2683 = vpack.c.b16 %v2099, %v2091
    %v2684 = vpack.c.b16 %v2100, %v2092
    %v2685 = vpack.c.b16 %v2101, %v2093
    %v2686 = vpack.c.b16 %v2102, %v2094
    %v2687 = vpack.c.b16 %v2103, %v2095
    %v2688 = vpack.c.b16 %v2112, %v2104
    %v2689 = vpack.c.b16 %v2113, %v2105
    %v2690 = vpack.c.b16 %v2114, %v2106
    %v2691 = vpack.c.b16 %v2115, %v2107
    %v2692 = vpack.c.b16 %v2116, %v2108
    %v2693 = vpack.c.b16 %v2117, %v2109
    %v2694 = vpack.c.b16 %v2118, %v2110
    %v2695 = vpack.c.b16 %v2119, %v2111
    %v2696 = vpack.c.b16 %v2128, %v2120
    %v2697 = vpack.c.b16 %v2129, %v2121
    %v2698 = vpack.c.b16 %v2130, %v2122
    %v2699 = vpack.c.b16 %v2131, %v2123
    %v2700 = vpack.c.b16 %v2132, %v2124
    %v2701 = vpack.c.b16 %v2133, %v2125
    %v2702 = vpack.c.b16 %v2134, %v2126
    %v2703 = vpack.c.b16 %v2135, %v2127
    %v2704 = vpack.c.b16 %v2144, %v2136
    %v2705 = vpack.c.b16 %v2145, %v2137
    %v2706 = vpack.c.b16 %v2146, %v2138
    %v2707 = vpack.c.b16 %v2147, %v2139
    %v2708 = vpack.c.b16 %v2148, %v2140
    %v2709 = vpack.c.b16 %v2149, %v2141
    %v2710 = vpack.c.b16 %v2150, %v2142
    %v2711 = vpack.c.b16 %v2151, %v2143
    %v2712 = vpack.c.b16 %v2160, %v2152
    %v2713 = vpack.c.b16 %v2161, %v2153
    %v2714 = vpack.c.b16 %v2162, %v2154
    %v2715 = vpack.c.b16 %v2163, %v2155
    %v2716 = vpack.c.b16 %v2164, %v2156
    %v2717 = vpack.c.b16 %v2165, %v2157
    %v2718 = vpack.c.b16 %v2166, %v2158
    %v2719 = vpack.c.b16 %v2167, %v2159
    %v2720 = vpack.c.b16 %v2176, %v2168
    %v2721 = vpack.c.b16 %v2177, %v2169
    %v2722 = vpack.c.b16 %v2178, %v2170
    %v2723 = vpack.c.b16 %v2179, %v2171
    %v2724 = vpack.c.b16 %v2180, %v2172
    %v2725 = vpack.c.b16 %v2181, %v2173
    %v2726 = vpack.c.b16 %v2182, %v2174
    %v2727 = vpack.c.b16 %v2183, %v2175
    %v2728 = vpack.c.b16 %v2192, %v2184
    %v2729 = vpack.c.b16 %v2193, %v2185
    %v2730 = vpack.c.b16 %v2194, %v2186
    %v2731 = vpack.c.b16 %v2195, %v2187
    %v2732 = vpack.c.b16 %v2196, %v2188
    %v2733 = vpack.c.b16 %v2197, %v2189
    %v2734 = vpack.c.b16 %v2198, %v2190
    %v2735 = vpack.c.b16 %v2199, %v2191
    %v2736 = vpack.c.b16 %v2208, %v2200
    %v2737 = vpack.c.b16 %v2209, %v2201
    %v2738 = vpack.c.b16 %v2210, %v2202
    %v2739 = vpack.c.b16 %v2211, %v2203
    %v2740 = vpack.c.b16 %v2212, %v2204
    %v2741 = vpack.c.b16 %v2213, %v2205
    %v2742 = vpack.c.b16 %v2214, %v2206
    %v2743 = vpack.c.b16 %v2215, %v2207
    %v2744 = vpack.c.b16 %v2224, %v2216
    %v2745 = vpack.c.b16 %v2225, %v2217
    %v2746 = vpack.c.b16 %v2226, %v2218
    %v2747 = vpack.c.b16 %v2227, %v2219
    %v2748 = vpack.c.b16 %v2228, %v2220
    %v2749 = vpack.c.b16 %v2229, %v2221
    %v2750 = vpack.c.b16 %v2230, %v2222
    %v2751 = vpack.c.b16 %v2231, %v2223
    %v2752 = vpack.c.b16 %v2240, %v2232
    %v2753 = vpack.c.b16 %v2241, %v2233
    %v2754 = vpack.c.b16 %v2242, %v2234
    %v2755 = vpack.c.b16 %v2243, %v2235
    %v2756 = vpack.c.b16 %v2244, %v2236
    %v2757 = vpack.c.b16 %v2245, %v2237
    %v2758 = vpack.c.b16 %v2246, %v2238
    %v2759 = vpack.c.b16 %v2247, %v2239
    %3272 = vmatprep.subr.bf16.mxu0 %v2249
    %3273 = vmatpush1.bf16.msra.mxu0 %v2248
    %3274 = vmatprep.subr.bf16.mxu0 %v2257
    %3275 = vmatpush1.bf16.msra.mxu0 %v2256
    %3276 = vmatprep.subr.bf16.mxu0 %v2265
    %3277 = vmatpush1.bf16.msra.mxu0 %v2264
    %3278 = vmatprep.subr.bf16.mxu0 %v2273
    %3279 = vmatpush1.bf16.msra.mxu0 %v2272
    %3280 = vmatprep.subr.bf16.mxu0 %v2281
    %3281 = vmatpush1.bf16.msra.mxu0 %v2280
    %3282 = vmatprep.subr.bf16.mxu0 %v2289
    %3283 = vmatpush1.bf16.msra.mxu0 %v2288
    %3284 = vmatprep.subr.bf16.mxu0 %v2297
    %3285 = vmatpush1.bf16.msra.mxu0 %v2296
    %3286 = vmatprep.subr.bf16.mxu0 %v2305
    %3287 = vmatpush1.bf16.msra.mxu0 %v2304
    %3288 = vmatprep.subr.bf16.mxu0 %v2313
    %3289 = vmatpush1.bf16.msra.mxu0 %v2312
    %3290 = vmatprep.subr.bf16.mxu0 %v2321
    %3291 = vmatpush1.bf16.msra.mxu0 %v2320
    %3292 = vmatprep.subr.bf16.mxu0 %v2329
    %3293 = vmatpush1.bf16.msra.mxu0 %v2328
    %3294 = vmatprep.subr.bf16.mxu0 %v2337
    %3295 = vmatpush1.bf16.msra.mxu0 %v2336
    %3296 = vmatprep.subr.bf16.mxu0 %v2345
    %3297 = vmatpush1.bf16.msra.mxu0 %v2344
    %3298 = vmatprep.subr.bf16.mxu0 %v2353
    %3299 = vmatpush1.bf16.msra.mxu0 %v2352
    %3300 = vmatprep.subr.bf16.mxu0 %v2361
    %3301 = vmatpush1.bf16.msra.mxu0 %v2360
    %3302 = vmatprep.subr.bf16.mxu0 %v2369
    %3303 = vmatpush1.bf16.msra.mxu0 %v2368
    %3304 = vmatprep.mubr.bf16.mxu0 %v697
    %3305 = vmatmul.mubr.bf16.gmra.mrb[0].mxu0 %v696
    %v3306 = vpop.f32.mrb[0].mxu0
    %v3307 = vadd.f32 0.0, %v3306
    %v3308 = vpop.f32.mrb[0].mxu0
    %v3309 = vadd.f32 0.0, %v3308
    %v3310 = vpop.f32.mrb[0].mxu0
    %v3311 = vpop.f32.mrb[0].mxu0
    %3312 = vdwg.mxu0
    %3313 = vmatprep.subr.bf16.mxu0 %v2377
    %3314 = vmatpush1.bf16.msra.mxu0 %v2376
    %3315 = vmatprep.subr.bf16.mxu0 %v2385
    %3316 = vmatpush1.bf16.msra.mxu0 %v2384
    %3317 = vmatprep.subr.bf16.mxu0 %v2393
    %3318 = vmatpush1.bf16.msra.mxu0 %v2392
    %3319 = vmatprep.subr.bf16.mxu0 %v2401
    %3320 = vmatpush1.bf16.msra.mxu0 %v2400
    %3321 = vmatprep.subr.bf16.mxu0 %v2409
    %3322 = vmatpush1.bf16.msra.mxu0 %v2408
    %3323 = vmatprep.subr.bf16.mxu0 %v2417
    %3324 = vmatpush1.bf16.msra.mxu0 %v2416
    %3325 = vmatprep.subr.bf16.mxu0 %v2425
    %3326 = vmatpush1.bf16.msra.mxu0 %v2424
    %3327 = vmatprep.subr.bf16.mxu0 %v2433
    %3328 = vmatpush1.bf16.msra.mxu0 %v2432
    %3329 = vmatprep.subr.bf16.mxu0 %v2441
    %3330 = vmatpush1.bf16.msra.mxu0 %v2440
    %3331 = vmatprep.subr.bf16.mxu0 %v2449
    %3332 = vmatpush1.bf16.msra.mxu0 %v2448
    %3333 = vmatprep.subr.bf16.mxu0 %v2457
    %3334 = vmatpush1.bf16.msra.mxu0 %v2456
    %3335 = vmatprep.subr.bf16.mxu0 %v2465
    %3336 = vmatpush1.bf16.msra.mxu0 %v2464
    %3337 = vmatprep.subr.bf16.mxu0 %v2473
    %3338 = vmatpush1.bf16.msra.mxu0 %v2472
    %3339 = vmatprep.subr.bf16.mxu0 %v2481
    %3340 = vmatpush1.bf16.msra.mxu0 %v2480
    %3341 = vmatprep.subr.bf16.mxu0 %v2489
    %3342 = vmatpush1.bf16.msra.mxu0 %v2488
    %3343 = vmatprep.subr.bf16.mxu0 %v2497
    %3344 = vmatpush1.bf16.msra.mxu0 %v2496
    %3345 = vmatprep.mubr.bf16.mxu0 %v699
    %3346 = vmatmul.mubr.bf16.gmra.mrb[0].mxu0 %v698
    %v3347 = vpop.f32.mrb[0].mxu0
    %v3348 = vadd.f32 %v3307, %v3347
    %v3349 = vpop.f32.mrb[0].mxu0
    %v3350 = vadd.f32 %v3309, %v3349
    %v3351 = vpop.f32.mrb[0].mxu0
    %v3352 = vpop.f32.mrb[0].mxu0
    %3353 = vdwg.mxu0
    %3354 = vmatprep.subr.bf16.mxu0 %v2505
    %3355 = vmatpush1.bf16.msra.mxu0 %v2504
    %3356 = vmatprep.subr.bf16.mxu0 %v2513
    %3357 = vmatpush1.bf16.msra.mxu0 %v2512
    %3358 = vmatprep.subr.bf16.mxu0 %v2521
    %3359 = vmatpush1.bf16.msra.mxu0 %v2520
    %3360 = vmatprep.subr.bf16.mxu0 %v2529
    %3361 = vmatpush1.bf16.msra.mxu0 %v2528
    %3362 = vmatprep.subr.bf16.mxu0 %v2537
    %3363 = vmatpush1.bf16.msra.mxu0 %v2536
    %3364 = vmatprep.subr.bf16.mxu0 %v2545
    %3365 = vmatpush1.bf16.msra.mxu0 %v2544
    %3366 = vmatprep.subr.bf16.mxu0 %v2553
    %3367 = vmatpush1.bf16.msra.mxu0 %v2552
    %3368 = vmatprep.subr.bf16.mxu0 %v2561
    %3369 = vmatpush1.bf16.msra.mxu0 %v2560
    %3370 = vmatprep.subr.bf16.mxu0 %v2569
    %3371 = vmatpush1.bf16.msra.mxu0 %v2568
    %3372 = vmatprep.subr.bf16.mxu0 %v2577
    %3373 = vmatpush1.bf16.msra.mxu0 %v2576
    %3374 = vmatprep.subr.bf16.mxu0 %v2585
    %3375 = vmatpush1.bf16.msra.mxu0 %v2584
    %3376 = vmatprep.subr.bf16.mxu0 %v2593
    %3377 = vmatpush1.bf16.msra.mxu0 %v2592
    %3378 = vmatprep.subr.bf16.mxu0 %v2601
    %3379 = vmatpush1.bf16.msra.mxu0 %v2600
    %3380 = vmatprep.subr.bf16.mxu0 %v2609
    %3381 = vmatpush1.bf16.msra.mxu0 %v2608
    %3382 = vmatprep.subr.bf16.mxu0 %v2617
    %3383 = vmatpush1.bf16.msra.mxu0 %v2616
    %3384 = vmatprep.subr.bf16.mxu0 %v2625
    %3385 = vmatpush1.bf16.msra.mxu0 %v2624
    %3386 = vmatprep.mubr.bf16.mxu0 %v701
    %3387 = vmatmul.mubr.bf16.gmra.mrb[0].mxu0 %v700
    %v3388 = vpop.f32.mrb[0].mxu0
    %v3389 = vadd.f32 %v3348, %v3388
    %v3390 = vpop.f32.mrb[0].mxu0
    %v3391 = vadd.f32 %v3350, %v3390
    %v3392 = vpop.f32.mrb[0].mxu0
    %v3393 = vpop.f32.mrb[0].mxu0
    %3394 = vdwg.mxu0
    %3395 = vmatprep.subr.bf16.mxu0 %v2633
    %3396 = vmatpush1.bf16.msra.mxu0 %v2632
    %3397 = vmatprep.subr.bf16.mxu0 %v2641
    %3398 = vmatpush1.bf16.msra.mxu0 %v2640
    %3399 = vmatprep.subr.bf16.mxu0 %v2649
    %3400 = vmatpush1.bf16.msra.mxu0 %v2648
    %3401 = vmatprep.subr.bf16.mxu0 %v2657
    %3402 = vmatpush1.bf16.msra.mxu0 %v2656
    %3403 = vmatprep.subr.bf16.mxu0 %v2665
    %3404 = vmatpush1.bf16.msra.mxu0 %v2664
    %3405 = vmatprep.subr.bf16.mxu0 %v2673
    %3406 = vmatpush1.bf16.msra.mxu0 %v2672
    %3407 = vmatprep.subr.bf16.mxu0 %v2681
    %3408 = vmatpush1.bf16.msra.mxu0 %v2680
    %3409 = vmatprep.subr.bf16.mxu0 %v2689
    %3410 = vmatpush1.bf16.msra.mxu0 %v2688
    %3411 = vmatprep.subr.bf16.mxu0 %v2697
    %3412 = vmatpush1.bf16.msra.mxu0 %v2696
    %3413 = vmatprep.subr.bf16.mxu0 %v2705
    %3414 = vmatpush1.bf16.msra.mxu0 %v2704
    %3415 = vmatprep.subr.bf16.mxu0 %v2713
    %3416 = vmatpush1.bf16.msra.mxu0 %v2712
    %3417 = vmatprep.subr.bf16.mxu0 %v2721
    %3418 = vmatpush1.bf16.msra.mxu0 %v2720
    %3419 = vmatprep.subr.bf16.mxu0 %v2729
    %3420 = vmatpush1.bf16.msra.mxu0 %v2728
    %3421 = vmatprep.subr.bf16.mxu0 %v2737
    %3422 = vmatpush1.bf16.msra.mxu0 %v2736
    %3423 = vmatprep.subr.bf16.mxu0 %v2745
    %3424 = vmatpush1.bf16.msra.mxu0 %v2744
    %3425 = vmatprep.subr.bf16.mxu0 %v2753
    %3426 = vmatpush1.bf16.msra.mxu0 %v2752
    %3427 = vmatprep.mubr.bf16.mxu0 %v703
    %3428 = vmatmul.mubr.bf16.gmra.mrb[0].mxu0 %v702
    %v3429 = vpop.f32.mrb[0].mxu0
    %v3430 = vadd.f32 %v3389, %v3429
    %v3431 = vpop.f32.mrb[0].mxu0
    %v3432 = vadd.f32 %v3391, %v3431
    %v3433 = vpop.f32.mrb[0].mxu0
    %v3434 = vpop.f32.mrb[0].mxu0
    %3435 = vdwg.mxu0
    %3436 = vmatprep.subr.bf16.mxu0 %v2251
    %3437 = vmatpush1.bf16.msra.mxu0 %v2250
    %3438 = vmatprep.subr.bf16.mxu0 %v2259
    %3439 = vmatpush1.bf16.msra.mxu0 %v2258
    %3440 = vmatprep.subr.bf16.mxu0 %v2267
    %3441 = vmatpush1.bf16.msra.mxu0 %v2266
    %3442 = vmatprep.subr.bf16.mxu0 %v2275
    %3443 = vmatpush1.bf16.msra.mxu0 %v2274
    %3444 = vmatprep.subr.bf16.mxu0 %v2283
    %3445 = vmatpush1.bf16.msra.mxu0 %v2282
    %3446 = vmatprep.subr.bf16.mxu0 %v2291
    %3447 = vmatpush1.bf16.msra.mxu0 %v2290
    %3448 = vmatprep.subr.bf16.mxu0 %v2299
    %3449 = vmatpush1.bf16.msra.mxu0 %v2298
    %3450 = vmatprep.subr.bf16.mxu0 %v2307
    %3451 = vmatpush1.bf16.msra.mxu0 %v2306
    %3452 = vmatprep.subr.bf16.mxu0 %v2315
    %3453 = vmatpush1.bf16.msra.mxu0 %v2314
    %3454 = vmatprep.subr.bf16.mxu0 %v2323
    %3455 = vmatpush1.bf16.msra.mxu0 %v2322
    %3456 = vmatprep.subr.bf16.mxu0 %v2331
    %3457 = vmatpush1.bf16.msra.mxu0 %v2330
    %3458 = vmatprep.subr.bf16.mxu0 %v2339
    %3459 = vmatpush1.bf16.msra.mxu0 %v2338
    %3460 = vmatprep.subr.bf16.mxu0 %v2347
    %3461 = vmatpush1.bf16.msra.mxu0 %v2346
    %3462 = vmatprep.subr.bf16.mxu0 %v2355
    %3463 = vmatpush1.bf16.msra.mxu0 %v2354
    %3464 = vmatprep.subr.bf16.mxu0 %v2363
    %3465 = vmatpush1.bf16.msra.mxu0 %v2362
    %3466 = vmatprep.subr.bf16.mxu0 %v2371
    %3467 = vmatpush1.bf16.msra.mxu0 %v2370
    %3468 = vmatprep.mubr.bf16.mxu0 %v697
    %3469 = vmatmul.mubr.bf16.gmra.mrb[0].mxu0 %v696
    %v3470 = vpop.f32.mrb[0].mxu0
    %v3471 = vadd.f32 0.0, %v3470
    %v3472 = vpop.f32.mrb[0].mxu0
    %v3473 = vadd.f32 0.0, %v3472
    %v3474 = vpop.f32.mrb[0].mxu0
    %v3475 = vpop.f32.mrb[0].mxu0
    %3476 = vdwg.mxu0
    %3477 = vmatprep.subr.bf16.mxu0 %v2379
    %3478 = vmatpush1.bf16.msra.mxu0 %v2378
    %3479 = vmatprep.subr.bf16.mxu0 %v2387
    %3480 = vmatpush1.bf16.msra.mxu0 %v2386
    %3481 = vmatprep.subr.bf16.mxu0 %v2395
    %3482 = vmatpush1.bf16.msra.mxu0 %v2394
    %3483 = vmatprep.subr.bf16.mxu0 %v2403
    %3484 = vmatpush1.bf16.msra.mxu0 %v2402
    %3485 = vmatprep.subr.bf16.mxu0 %v2411
    %3486 = vmatpush1.bf16.msra.mxu0 %v2410
    %3487 = vmatprep.subr.bf16.mxu0 %v2419
    %3488 = vmatpush1.bf16.msra.mxu0 %v2418
    %3489 = vmatprep.subr.bf16.mxu0 %v2427
    %3490 = vmatpush1.bf16.msra.mxu0 %v2426
    %3491 = vmatprep.subr.bf16.mxu0 %v2435
    %3492 = vmatpush1.bf16.msra.mxu0 %v2434
    %3493 = vmatprep.subr.bf16.mxu0 %v2443
    %3494 = vmatpush1.bf16.msra.mxu0 %v2442
    %3495 = vmatprep.subr.bf16.mxu0 %v2451
    %3496 = vmatpush1.bf16.msra.mxu0 %v2450
    %3497 = vmatprep.subr.bf16.mxu0 %v2459
    %3498 = vmatpush1.bf16.msra.mxu0 %v2458
    %3499 = vmatprep.subr.bf16.mxu0 %v2467
    %3500 = vmatpush1.bf16.msra.mxu0 %v2466
    %3501 = vmatprep.subr.bf16.mxu0 %v2475
    %3502 = vmatpush1.bf16.msra.mxu0 %v2474
    %3503 = vmatprep.subr.bf16.mxu0 %v2483
    %3504 = vmatpush1.bf16.msra.mxu0 %v2482
    %3505 = vmatprep.subr.bf16.mxu0 %v2491
    %3506 = vmatpush1.bf16.msra.mxu0 %v2490
    %3507 = vmatprep.subr.bf16.mxu0 %v2499
    %3508 = vmatpush1.bf16.msra.mxu0 %v2498
    %3509 = vmatprep.mubr.bf16.mxu0 %v699
    %3510 = vmatmul.mubr.bf16.gmra.mrb[0].mxu0 %v698
    %v3511 = vpop.f32.mrb[0].mxu0
    %v3512 = vadd.f32 %v3471, %v3511
    %v3513 = vpop.f32.mrb[0].mxu0
    %v3514 = vadd.f32 %v3473, %v3513
    %v3515 = vpop.f32.mrb[0].mxu0
    %v3516 = vpop.f32.mrb[0].mxu0
    %3517 = vdwg.mxu0
    %3518 = vmatprep.subr.bf16.mxu0 %v2507
    %3519 = vmatpush1.bf16.msra.mxu0 %v2506
    %3520 = vmatprep.subr.bf16.mxu0 %v2515
    %3521 = vmatpush1.bf16.msra.mxu0 %v2514
    %3522 = vmatprep.subr.bf16.mxu0 %v2523
    %3523 = vmatpush1.bf16.msra.mxu0 %v2522
    %3524 = vmatprep.subr.bf16.mxu0 %v2531
    %3525 = vmatpush1.bf16.msra.mxu0 %v2530
    %3526 = vmatprep.subr.bf16.mxu0 %v2539
    %3527 = vmatpush1.bf16.msra.mxu0 %v2538
    %3528 = vmatprep.subr.bf16.mxu0 %v2547
    %3529 = vmatpush1.bf16.msra.mxu0 %v2546
    %3530 = vmatprep.subr.bf16.mxu0 %v2555
    %3531 = vmatpush1.bf16.msra.mxu0 %v2554
    %3532 = vmatprep.subr.bf16.mxu0 %v2563
    %3533 = vmatpush1.bf16.msra.mxu0 %v2562
    %3534 = vmatprep.subr.bf16.mxu0 %v2571
    %3535 = vmatpush1.bf16.msra.mxu0 %v2570
    %3536 = vmatprep.subr.bf16.mxu0 %v2579
    %3537 = vmatpush1.bf16.msra.mxu0 %v2578
    %3538 = vmatprep.subr.bf16.mxu0 %v2587
    %3539 = vmatpush1.bf16.msra.mxu0 %v2586
    %3540 = vmatprep.subr.bf16.mxu0 %v2595
    %3541 = vmatpush1.bf16.msra.mxu0 %v2594
    %3542 = vmatprep.subr.bf16.mxu0 %v2603
    %3543 = vmatpush1.bf16.msra.mxu0 %v2602
    %3544 = vmatprep.subr.bf16.mxu0 %v2611
    %3545 = vmatpush1.bf16.msra.mxu0 %v2610
    %3546 = vmatprep.subr.bf16.mxu0 %v2619
    %3547 = vmatpush1.bf16.msra.mxu0 %v2618
    %3548 = vmatprep.subr.bf16.mxu0 %v2627
    %3549 = vmatpush1.bf16.msra.mxu0 %v2626
    %3550 = vmatprep.mubr.bf16.mxu0 %v701
    %3551 = vmatmul.mubr.bf16.gmra.mrb[0].mxu0 %v700
    %v3552 = vpop.f32.mrb[0].mxu0
    %v3553 = vadd.f32 %v3512, %v3552
    %v3554 = vpop.f32.mrb[0].mxu0
    %v3555 = vadd.f32 %v3514, %v3554
    %v3556 = vpop.f32.mrb[0].mxu0
    %v3557 = vpop.f32.mrb[0].mxu0
    %3558 = vdwg.mxu0
    %3559 = vmatprep.subr.bf16.mxu0 %v2635
    %3560 = vmatpush1.bf16.msra.mxu0 %v2634
    %3561 = vmatprep.subr.bf16.mxu0 %v2643
    %3562 = vmatpush1.bf16.msra.mxu0 %v2642
    %3563 = vmatprep.subr.bf16.mxu0 %v2651
    %3564 = vmatpush1.bf16.msra.mxu0 %v2650
    %3565 = vmatprep.subr.bf16.mxu0 %v2659
    %3566 = vmatpush1.bf16.msra.mxu0 %v2658
    %3567 = vmatprep.subr.bf16.mxu0 %v2667
    %3568 = vmatpush1.bf16.msra.mxu0 %v2666
    %3569 = vmatprep.subr.bf16.mxu0 %v2675
    %3570 = vmatpush1.bf16.msra.mxu0 %v2674
    %3571 = vmatprep.subr.bf16.mxu0 %v2683
    %3572 = vmatpush1.bf16.msra.mxu0 %v2682
    %3573 = vmatprep.subr.bf16.mxu0 %v2691
    %3574 = vmatpush1.bf16.msra.mxu0 %v2690
    %3575 = vmatprep.subr.bf16.mxu0 %v2699
    %3576 = vmatpush1.bf16.msra.mxu0 %v2698
    %3577 = vmatprep.subr.bf16.mxu0 %v2707
    %3578 = vmatpush1.bf16.msra.mxu0 %v2706
    %3579 = vmatprep.subr.bf16.mxu0 %v2715
    %3580 = vmatpush1.bf16.msra.mxu0 %v2714
    %3581 = vmatprep.subr.bf16.mxu0 %v2723
    %3582 = vmatpush1.bf16.msra.mxu0 %v2722
    %3583 = vmatprep.subr.bf16.mxu0 %v2731
    %3584 = vmatpush1.bf16.msra.mxu0 %v2730
    %3585 = vmatprep.subr.bf16.mxu0 %v2739
    %3586 = vmatpush1.bf16.msra.mxu0 %v2738
    %3587 = vmatprep.subr.bf16.mxu0 %v2747
    %3588 = vmatpush1.bf16.msra.mxu0 %v2746
    %3589 = vmatprep.subr.bf16.mxu0 %v2755
    %3590 = vmatpush1.bf16.msra.mxu0 %v2754
    %3591 = vmatprep.mubr.bf16.mxu0 %v703
    %3592 = vmatmul.mubr.bf16.gmra.mrb[0].mxu0 %v702
    %v3593 = vpop.f32.mrb[0].mxu0
    %v3594 = vadd.f32 %v3553, %v3593
    %v3595 = vpop.f32.mrb[0].mxu0
    %v3596 = vadd.f32 %v3555, %v3595
    %v3597 = vpop.f32.mrb[0].mxu0
    %v3598 = vpop.f32.mrb[0].mxu0
    %3599 = vdwg.mxu0
    %3600 = vmatprep.subr.bf16.mxu0 %v2253
    %3601 = vmatpush1.bf16.msra.mxu0 %v2252
    %3602 = vmatprep.subr.bf16.mxu0 %v2261
    %3603 = vmatpush1.bf16.msra.mxu0 %v2260
    %3604 = vmatprep.subr.bf16.mxu0 %v2269
    %3605 = vmatpush1.bf16.msra.mxu0 %v2268
    %3606 = vmatprep.subr.bf16.mxu0 %v2277
    %3607 = vmatpush1.bf16.msra.mxu0 %v2276
    %3608 = vmatprep.subr.bf16.mxu0 %v2285
    %3609 = vmatpush1.bf16.msra.mxu0 %v2284
    %3610 = vmatprep.subr.bf16.mxu0 %v2293
    %3611 = vmatpush1.bf16.msra.mxu0 %v2292
    %3612 = vmatprep.subr.bf16.mxu0 %v2301
    %3613 = vmatpush1.bf16.msra.mxu0 %v2300
    %3614 = vmatprep.subr.bf16.mxu0 %v2309
    %3615 = vmatpush1.bf16.msra.mxu0 %v2308
    %3616 = vmatprep.subr.bf16.mxu0 %v2317
    %3617 = vmatpush1.bf16.msra.mxu0 %v2316
    %3618 = vmatprep.subr.bf16.mxu0 %v2325
    %3619 = vmatpush1.bf16.msra.mxu0 %v2324
    %3620 = vmatprep.subr.bf16.mxu0 %v2333
    %3621 = vmatpush1.bf16.msra.mxu0 %v2332
    %3622 = vmatprep.subr.bf16.mxu0 %v2341
    %3623 = vmatpush1.bf16.msra.mxu0 %v2340
    %3624 = vmatprep.subr.bf16.mxu0 %v2349
    %3625 = vmatpush1.bf16.msra.mxu0 %v2348
    %3626 = vmatprep.subr.bf16.mxu0 %v2357
    %3627 = vmatpush1.bf16.msra.mxu0 %v2356
    %3628 = vmatprep.subr.bf16.mxu0 %v2365
    %3629 = vmatpush1.bf16.msra.mxu0 %v2364
    %3630 = vmatprep.subr.bf16.mxu0 %v2373
    %3631 = vmatpush1.bf16.msra.mxu0 %v2372
    %3632 = vmatprep.mubr.bf16.mxu0 %v697
    %3633 = vmatmul.mubr.bf16.gmra.mrb[0].mxu0 %v696
    %v3634 = vpop.f32.mrb[0].mxu0
    %v3635 = vadd.f32 0.0, %v3634
    %v3636 = vpop.f32.mrb[0].mxu0
    %v3637 = vadd.f32 0.0, %v3636
    %v3638 = vpop.f32.mrb[0].mxu0
    %v3639 = vpop.f32.mrb[0].mxu0
    %3640 = vdwg.mxu0
    %3641 = vmatprep.subr.bf16.mxu0 %v2381
    %3642 = vmatpush1.bf16.msra.mxu0 %v2380
    %3643 = vmatprep.subr.bf16.mxu0 %v2389
    %3644 = vmatpush1.bf16.msra.mxu0 %v2388
    %3645 = vmatprep.subr.bf16.mxu0 %v2397
    %3646 = vmatpush1.bf16.msra.mxu0 %v2396
    %3647 = vmatprep.subr.bf16.mxu0 %v2405
    %3648 = vmatpush1.bf16.msra.mxu0 %v2404
    %3649 = vmatprep.subr.bf16.mxu0 %v2413
    %3650 = vmatpush1.bf16.msra.mxu0 %v2412
    %3651 = vmatprep.subr.bf16.mxu0 %v2421
    %3652 = vmatpush1.bf16.msra.mxu0 %v2420
    %3653 = vmatprep.subr.bf16.mxu0 %v2429
    %3654 = vmatpush1.bf16.msra.mxu0 %v2428
    %3655 = vmatprep.subr.bf16.mxu0 %v2437
    %3656 = vmatpush1.bf16.msra.mxu0 %v2436
    %3657 = vmatprep.subr.bf16.mxu0 %v2445
    %3658 = vmatpush1.bf16.msra.mxu0 %v2444
    %3659 = vmatprep.subr.bf16.mxu0 %v2453
    %3660 = vmatpush1.bf16.msra.mxu0 %v2452
    %3661 = vmatprep.subr.bf16.mxu0 %v2461
    %3662 = vmatpush1.bf16.msra.mxu0 %v2460
    %3663 = vmatprep.subr.bf16.mxu0 %v2469
    %3664 = vmatpush1.bf16.msra.mxu0 %v2468
    %3665 = vmatprep.subr.bf16.mxu0 %v2477
    %3666 = vmatpush1.bf16.msra.mxu0 %v2476
    %3667 = vmatprep.subr.bf16.mxu0 %v2485
    %3668 = vmatpush1.bf16.msra.mxu0 %v2484
    %3669 = vmatprep.subr.bf16.mxu0 %v2493
    %3670 = vmatpush1.bf16.msra.mxu0 %v2492
    %3671 = vmatprep.subr.bf16.mxu0 %v2501
    %3672 = vmatpush1.bf16.msra.mxu0 %v2500
    %3673 = vmatprep.mubr.bf16.mxu0 %v699
    %3674 = vmatmul.mubr.bf16.gmra.mrb[0].mxu0 %v698
    %v3675 = vpop.f32.mrb[0].mxu0
    %v3676 = vadd.f32 %v3635, %v3675
    %v3677 = vpop.f32.mrb[0].mxu0
    %v3678 = vadd.f32 %v3637, %v3677
    %v3679 = vpop.f32.mrb[0].mxu0
    %v3680 = vpop.f32.mrb[0].mxu0
    %3681 = vdwg.mxu0
    %3682 = vmatprep.subr.bf16.mxu0 %v2509
    %3683 = vmatpush1.bf16.msra.mxu0 %v2508
    %3684 = vmatprep.subr.bf16.mxu0 %v2517
    %3685 = vmatpush1.bf16.msra.mxu0 %v2516
    %3686 = vmatprep.subr.bf16.mxu0 %v2525
    %3687 = vmatpush1.bf16.msra.mxu0 %v2524
    %3688 = vmatprep.subr.bf16.mxu0 %v2533
    %3689 = vmatpush1.bf16.msra.mxu0 %v2532
    %3690 = vmatprep.subr.bf16.mxu0 %v2541
    %3691 = vmatpush1.bf16.msra.mxu0 %v2540
    %3692 = vmatprep.subr.bf16.mxu0 %v2549
    %3693 = vmatpush1.bf16.msra.mxu0 %v2548
    %3694 = vmatprep.subr.bf16.mxu0 %v2557
    %3695 = vmatpush1.bf16.msra.mxu0 %v2556
    %3696 = vmatprep.subr.bf16.mxu0 %v2565
    %3697 = vmatpush1.bf16.msra.mxu0 %v2564
    %3698 = vmatprep.subr.bf16.mxu0 %v2573
    %3699 = vmatpush1.bf16.msra.mxu0 %v2572
    %3700 = vmatprep.subr.bf16.mxu0 %v2581
    %3701 = vmatpush1.bf16.msra.mxu0 %v2580
    %3702 = vmatprep.subr.bf16.mxu0 %v2589
    %3703 = vmatpush1.bf16.msra.mxu0 %v2588
    %3704 = vmatprep.subr.bf16.mxu0 %v2597
    %3705 = vmatpush1.bf16.msra.mxu0 %v2596
    %3706 = vmatprep.subr.bf16.mxu0 %v2605
    %3707 = vmatpush1.bf16.msra.mxu0 %v2604
    %3708 = vmatprep.subr.bf16.mxu0 %v2613
    %3709 = vmatpush1.bf16.msra.mxu0 %v2612
    %3710 = vmatprep.subr.bf16.mxu0 %v2621
    %3711 = vmatpush1.bf16.msra.mxu0 %v2620
    %3712 = vmatprep.subr.bf16.mxu0 %v2629
    %3713 = vmatpush1.bf16.msra.mxu0 %v2628
    %3714 = vmatprep.mubr.bf16.mxu0 %v701
    %3715 = vmatmul.mubr.bf16.gmra.mrb[0].mxu0 %v700
    %v3716 = vpop.f32.mrb[0].mxu0
    %v3717 = vadd.f32 %v3676, %v3716
    %v3718 = vpop.f32.mrb[0].mxu0
    %v3719 = vadd.f32 %v3678, %v3718
    %v3720 = vpop.f32.mrb[0].mxu0
    %v3721 = vpop.f32.mrb[0].mxu0
    %3722 = vdwg.mxu0
    %3723 = vmatprep.subr.bf16.mxu0 %v2637
    %3724 = vmatpush1.bf16.msra.mxu0 %v2636
    %3725 = vmatprep.subr.bf16.mxu0 %v2645
    %3726 = vmatpush1.bf16.msra.mxu0 %v2644
    %3727 = vmatprep.subr.bf16.mxu0 %v2653
    %3728 = vmatpush1.bf16.msra.mxu0 %v2652
    %3729 = vmatprep.subr.bf16.mxu0 %v2661
    %3730 = vmatpush1.bf16.msra.mxu0 %v2660
    %3731 = vmatprep.subr.bf16.mxu0 %v2669
    %3732 = vmatpush1.bf16.msra.mxu0 %v2668
    %3733 = vmatprep.subr.bf16.mxu0 %v2677
    %3734 = vmatpush1.bf16.msra.mxu0 %v2676
    %3735 = vmatprep.subr.bf16.mxu0 %v2685
    %3736 = vmatpush1.bf16.msra.mxu0 %v2684
    %3737 = vmatprep.subr.bf16.mxu0 %v2693
    %3738 = vmatpush1.bf16.msra.mxu0 %v2692
    %3739 = vmatprep.subr.bf16.mxu0 %v2701
    %3740 = vmatpush1.bf16.msra.mxu0 %v2700
    %3741 = vmatprep.subr.bf16.mxu0 %v2709
    %3742 = vmatpush1.bf16.msra.mxu0 %v2708
    %3743 = vmatprep.subr.bf16.mxu0 %v2717
    %3744 = vmatpush1.bf16.msra.mxu0 %v2716
    %3745 = vmatprep.subr.bf16.mxu0 %v2725
    %3746 = vmatpush1.bf16.msra.mxu0 %v2724
    %3747 = vmatprep.subr.bf16.mxu0 %v2733
    %3748 = vmatpush1.bf16.msra.mxu0 %v2732
    %3749 = vmatprep.subr.bf16.mxu0 %v2741
    %3750 = vmatpush1.bf16.msra.mxu0 %v2740
    %3751 = vmatprep.subr.bf16.mxu0 %v2749
    %3752 = vmatpush1.bf16.msra.mxu0 %v2748
    %3753 = vmatprep.subr.bf16.mxu0 %v2757
    %3754 = vmatpush1.bf16.msra.mxu0 %v2756
    %3755 = vmatprep.mubr.bf16.mxu0 %v703
    %3756 = vmatmul.mubr.bf16.gmra.mrb[0].mxu0 %v702
    %v3757 = vpop.f32.mrb[0].mxu0
    %v3758 = vadd.f32 %v3717, %v3757
    %v3759 = vpop.f32.mrb[0].mxu0
    %v3760 = vadd.f32 %v3719, %v3759
    %v3761 = vpop.f32.mrb[0].mxu0
    %v3762 = vpop.f32.mrb[0].mxu0
    %3763 = vdwg.mxu0
    %3764 = vmatprep.subr.bf16.mxu0 %v2255
    %3765 = vmatpush1.bf16.msra.mxu0 %v2254
    %3766 = vmatprep.subr.bf16.mxu0 %v2263
    %3767 = vmatpush1.bf16.msra.mxu0 %v2262
    %3768 = vmatprep.subr.bf16.mxu0 %v2271
    %3769 = vmatpush1.bf16.msra.mxu0 %v2270
    %3770 = vmatprep.subr.bf16.mxu0 %v2279
    %3771 = vmatpush1.bf16.msra.mxu0 %v2278
    %3772 = vmatprep.subr.bf16.mxu0 %v2287
    %3773 = vmatpush1.bf16.msra.mxu0 %v2286
    %3774 = vmatprep.subr.bf16.mxu0 %v2295
    %3775 = vmatpush1.bf16.msra.mxu0 %v2294
    %3776 = vmatprep.subr.bf16.mxu0 %v2303
    %3777 = vmatpush1.bf16.msra.mxu0 %v2302
    %3778 = vmatprep.subr.bf16.mxu0 %v2311
    %3779 = vmatpush1.bf16.msra.mxu0 %v2310
    %3780 = vmatprep.subr.bf16.mxu0 %v2319
    %3781 = vmatpush1.bf16.msra.mxu0 %v2318
    %3782 = vmatprep.subr.bf16.mxu0 %v2327
    %3783 = vmatpush1.bf16.msra.mxu0 %v2326
    %3784 = vmatprep.subr.bf16.mxu0 %v2335
    %3785 = vmatpush1.bf16.msra.mxu0 %v2334
    %3786 = vmatprep.subr.bf16.mxu0 %v2343
    %3787 = vmatpush1.bf16.msra.mxu0 %v2342
    %3788 = vmatprep.subr.bf16.mxu0 %v2351
    %3789 = vmatpush1.bf16.msra.mxu0 %v2350
    %3790 = vmatprep.subr.bf16.mxu0 %v2359
    %3791 = vmatpush1.bf16.msra.mxu0 %v2358
    %3792 = vmatprep.subr.bf16.mxu0 %v2367
    %3793 = vmatpush1.bf16.msra.mxu0 %v2366
    %3794 = vmatprep.subr.bf16.mxu0 %v2375
    %3795 = vmatpush1.bf16.msra.mxu0 %v2374
    %3796 = vmatprep.mubr.bf16.mxu0 %v697
    %3797 = vmatmul.mubr.bf16.gmra.mrb[0].mxu0 %v696
    %v3798 = vpop.f32.mrb[0].mxu0
    %v3799 = vadd.f32 0.0, %v3798
    %v3800 = vpop.f32.mrb[0].mxu0
    %v3801 = vadd.f32 0.0, %v3800
    %v3802 = vpop.f32.mrb[0].mxu0
    %v3803 = vpop.f32.mrb[0].mxu0
    %3804 = vdwg.mxu0
    %3805 = vmatprep.subr.bf16.mxu0 %v2383
    %3806 = vmatpush1.bf16.msra.mxu0 %v2382
    %3807 = vmatprep.subr.bf16.mxu0 %v2391
    %3808 = vmatpush1.bf16.msra.mxu0 %v2390
    %3809 = vmatprep.subr.bf16.mxu0 %v2399
    %3810 = vmatpush1.bf16.msra.mxu0 %v2398
    %3811 = vmatprep.subr.bf16.mxu0 %v2407
    %3812 = vmatpush1.bf16.msra.mxu0 %v2406
    %3813 = vmatprep.subr.bf16.mxu0 %v2415
    %3814 = vmatpush1.bf16.msra.mxu0 %v2414
    %3815 = vmatprep.subr.bf16.mxu0 %v2423
    %3816 = vmatpush1.bf16.msra.mxu0 %v2422
    %3817 = vmatprep.subr.bf16.mxu0 %v2431
    %3818 = vmatpush1.bf16.msra.mxu0 %v2430
    %3819 = vmatprep.subr.bf16.mxu0 %v2439
    %3820 = vmatpush1.bf16.msra.mxu0 %v2438
    %3821 = vmatprep.subr.bf16.mxu0 %v2447
    %3822 = vmatpush1.bf16.msra.mxu0 %v2446
    %3823 = vmatprep.subr.bf16.mxu0 %v2455
    %3824 = vmatpush1.bf16.msra.mxu0 %v2454
    %3825 = vmatprep.subr.bf16.mxu0 %v2463
    %3826 = vmatpush1.bf16.msra.mxu0 %v2462
    %3827 = vmatprep.subr.bf16.mxu0 %v2471
    %3828 = vmatpush1.bf16.msra.mxu0 %v2470
    %3829 = vmatprep.subr.bf16.mxu0 %v2479
    %3830 = vmatpush1.bf16.msra.mxu0 %v2478
    %3831 = vmatprep.subr.bf16.mxu0 %v2487
    %3832 = vmatpush1.bf16.msra.mxu0 %v2486
    %3833 = vmatprep.subr.bf16.mxu0 %v2495
    %3834 = vmatpush1.bf16.msra.mxu0 %v2494
    %3835 = vmatprep.subr.bf16.mxu0 %v2503
    %3836 = vmatpush1.bf16.msra.mxu0 %v2502
    %3837 = vmatprep.mubr.bf16.mxu0 %v699
    %3838 = vmatmul.mubr.bf16.gmra.mrb[0].mxu0 %v698
    %v3839 = vpop.f32.mrb[0].mxu0
    %v3840 = vadd.f32 %v3799, %v3839
    %v3841 = vpop.f32.mrb[0].mxu0
    %v3842 = vadd.f32 %v3801, %v3841
    %v3843 = vpop.f32.mrb[0].mxu0
    %v3844 = vpop.f32.mrb[0].mxu0
    %3845 = vdwg.mxu0
    %3846 = vmatprep.subr.bf16.mxu0 %v2511
    %3847 = vmatpush1.bf16.msra.mxu0 %v2510
    %3848 = vmatprep.subr.bf16.mxu0 %v2519
    %3849 = vmatpush1.bf16.msra.mxu0 %v2518
    %3850 = vmatprep.subr.bf16.mxu0 %v2527
    %3851 = vmatpush1.bf16.msra.mxu0 %v2526
    %3852 = vmatprep.subr.bf16.mxu0 %v2535
    %3853 = vmatpush1.bf16.msra.mxu0 %v2534
    %3854 = vmatprep.subr.bf16.mxu0 %v2543
    %3855 = vmatpush1.bf16.msra.mxu0 %v2542
    %3856 = vmatprep.subr.bf16.mxu0 %v2551
    %3857 = vmatpush1.bf16.msra.mxu0 %v2550
    %3858 = vmatprep.subr.bf16.mxu0 %v2559
    %3859 = vmatpush1.bf16.msra.mxu0 %v2558
    %3860 = vmatprep.subr.bf16.mxu0 %v2567
    %3861 = vmatpush1.bf16.msra.mxu0 %v2566
    %3862 = vmatprep.subr.bf16.mxu0 %v2575
    %3863 = vmatpush1.bf16.msra.mxu0 %v2574
    %3864 = vmatprep.subr.bf16.mxu0 %v2583
    %3865 = vmatpush1.bf16.msra.mxu0 %v2582
    %3866 = vmatprep.subr.bf16.mxu0 %v2591
    %3867 = vmatpush1.bf16.msra.mxu0 %v2590
    %3868 = vmatprep.subr.bf16.mxu0 %v2599
    %3869 = vmatpush1.bf16.msra.mxu0 %v2598
    %3870 = vmatprep.subr.bf16.mxu0 %v2607
    %3871 = vmatpush1.bf16.msra.mxu0 %v2606
    %3872 = vmatprep.subr.bf16.mxu0 %v2615
    %3873 = vmatpush1.bf16.msra.mxu0 %v2614
    %3874 = vmatprep.subr.bf16.mxu0 %v2623
    %3875 = vmatpush1.bf16.msra.mxu0 %v2622
    %3876 = vmatprep.subr.bf16.mxu0 %v2631
    %3877 = vmatpush1.bf16.msra.mxu0 %v2630
    %3878 = vmatprep.mubr.bf16.mxu0 %v701
    %3879 = vmatmul.mubr.bf16.gmra.mrb[0].mxu0 %v700
    %v3880 = vpop.f32.mrb[0].mxu0
    %v3881 = vadd.f32 %v3840, %v3880
    %v3882 = vpop.f32.mrb[0].mxu0
    %v3883 = vadd.f32 %v3842, %v3882
    %v3884 = vpop.f32.mrb[0].mxu0
    %v3885 = vpop.f32.mrb[0].mxu0
    %3886 = vdwg.mxu0
    %3887 = vmatprep.subr.bf16.mxu0 %v2639
    %3888 = vmatpush1.bf16.msra.mxu0 %v2638
    %3889 = vmatprep.subr.bf16.mxu0 %v2647
    %3890 = vmatpush1.bf16.msra.mxu0 %v2646
    %3891 = vmatprep.subr.bf16.mxu0 %v2655
    %3892 = vmatpush1.bf16.msra.mxu0 %v2654
    %3893 = vmatprep.subr.bf16.mxu0 %v2663
    %3894 = vmatpush1.bf16.msra.mxu0 %v2662
    %3895 = vmatprep.subr.bf16.mxu0 %v2671
    %3896 = vmatpush1.bf16.msra.mxu0 %v2670
    %3897 = vmatprep.subr.bf16.mxu0 %v2679
    %3898 = vmatpush1.bf16.msra.mxu0 %v2678
    %3899 = vmatprep.subr.bf16.mxu0 %v2687
    %3900 = vmatpush1.bf16.msra.mxu0 %v2686
    %3901 = vmatprep.subr.bf16.mxu0 %v2695
    %3902 = vmatpush1.bf16.msra.mxu0 %v2694
    %3903 = vmatprep.subr.bf16.mxu0 %v2703
    %3904 = vmatpush1.bf16.msra.mxu0 %v2702
    %3905 = vmatprep.subr.bf16.mxu0 %v2711
    %3906 = vmatpush1.bf16.msra.mxu0 %v2710
    %3907 = vmatprep.subr.bf16.mxu0 %v2719
    %3908 = vmatpush1.bf16.msra.mxu0 %v2718
    %3909 = vmatprep.subr.bf16.mxu0 %v2727
    %3910 = vmatpush1.bf16.msra.mxu0 %v2726
    %3911 = vmatprep.subr.bf16.mxu0 %v2735
    %3912 = vmatpush1.bf16.msra.mxu0 %v2734
    %3913 = vmatprep.subr.bf16.mxu0 %v2743
    %3914 = vmatpush1.bf16.msra.mxu0 %v2742
    %3915 = vmatprep.subr.bf16.mxu0 %v2751
    %3916 = vmatpush1.bf16.msra.mxu0 %v2750
    %3917 = vmatprep.subr.bf16.mxu0 %v2759
    %3918 = vmatpush1.bf16.msra.mxu0 %v2758
    %3919 = vmatprep.mubr.bf16.mxu0 %v703
    %3920 = vmatmul.mubr.bf16.gmra.mrb[0].mxu0 %v702
    %v3921 = vpop.f32.mrb[0].mxu0
    %v3922 = vadd.f32 %v3881, %v3921
    %v3923 = vpop.f32.mrb[0].mxu0
    %v3924 = vadd.f32 %v3883, %v3923
    %v3925 = vpop.f32.mrb[0].mxu0
    %v3926 = vpop.f32.mrb[0].mxu0
    %3927 = vdwg.mxu0
    %v3928 = vadd.f32 %v160, %v3430
    %v3929 = vadd.f32 %v161, %v3432
    %v3930 = vadd.f32 %v162, %v3594
    %v3931 = vadd.f32 %v163, %v3596
    %v3932 = vadd.f32 %v164, %v3758
    %v3933 = vadd.f32 %v165, %v3760
    %v3934 = vadd.f32 %v166, %v3922
    %v3935 = vadd.f32 %v167, %v3924
    %3936 = vst [vmem:[#allocation17] sm:$0xff] %v3928
    %3937 = vst [vmem:[#allocation17 + $0x8] sm:$0xff] %v3929
    %3938 = vst [vmem:[#allocation17 + $0x10] sm:$0xff] %v3930
    %3939 = vst [vmem:[#allocation17 + $0x18] sm:$0xff] %v3931
    %3940 = vst [vmem:[#allocation17 + $0x20] sm:$0xff] %v3932
    %3941 = vst [vmem:[#allocation17 + $0x28] sm:$0xff] %v3933
    %3942 = vst [vmem:[#allocation17 + $0x30] sm:$0xff] %v3934
    %3943 = vst [vmem:[#allocation17 + $0x38] sm:$0xff] %v3935
    // Predicated region
    $region78: #{tpu_custom_call.1} parent=1 // pred_check
      %p3944 = pneg %p148
    $region79: #{tpu_custom_call.1} parent=1 // pred_check_branch
      %3946 = sbr.rel (%p3944) target = $region81
    $region80: #{tpu_custom_call.1} parent=1 // pred_region
      %v3947 = vld [vmem:[#allocation17] sm:$0xff]
      %v3948 = vld [vmem:[#allocation17 + $0x8] sm:$0xff]
      %v3949 = vld [vmem:[#allocation17 + $0x10] sm:$0xff]
      %v3950 = vld [vmem:[#allocation17 + $0x18] sm:$0xff]
      %v3951 = vld [vmem:[#allocation17 + $0x20] sm:$0xff]
      %v3952 = vld [vmem:[#allocation17 + $0x28] sm:$0xff]
      %v3953 = vld [vmem:[#allocation17 + $0x30] sm:$0xff]
      %v3954 = vld [vmem:[#allocation17 + $0x38] sm:$0xff]
      %v3955 = vld [vmem:[#allocation7] sm:$0xff]
      %v3957 = vlaneseq
      %v3958 = vshrl.u32 %v3957, 7
      %v3959 = vsub.s32 0, %v3958
      %v3960 = vrot.slane %v3955, %v3959
      %v3961 = vlaneseq
      %v3962 = vshrl.u32 %v3961, 7
      %v3963 = vsub.s32 1, %v3962
      %v3964 = vrot.slane %v3955, %v3963
      %v3965 = vlaneseq
      %v3966 = vshrl.u32 %v3965, 7
      %v3967 = vsub.s32 2, %v3966
      %v3968 = vrot.slane %v3955, %v3967
      %v3969 = vlaneseq
      %v3970 = vshrl.u32 %v3969, 7
      %v3971 = vsub.s32 3, %v3970
      %v3972 = vrot.slane %v3955, %v3971
      %v3973 = vlaneseq
      %v3974 = vshrl.u32 %v3973, 7
      %v3975 = vsub.s32 4, %v3974
      %v3976 = vrot.slane %v3955, %v3975
      %v3977 = vlaneseq
      %v3978 = vshrl.u32 %v3977, 7
      %v3979 = vsub.s32 5, %v3978
      %v3980 = vrot.slane %v3955, %v3979
      %v3981 = vlaneseq
      %v3982 = vshrl.u32 %v3981, 7
      %v3983 = vsub.s32 6, %v3982
      %v3984 = vrot.slane %v3955, %v3983
      %v3985 = vlaneseq
      %v3986 = vshrl.u32 %v3985, 7
      %v3987 = vsub.s32 7, %v3986
      %v3988 = vrot.slane %v3955, %v3987
      %v3997 = vadd.f32 %v3947, %v3960
      %v3998 = vadd.f32 %v3948, %v3964
      %v3999 = vadd.f32 %v3949, %v3968
      %v4000 = vadd.f32 %v3950, %v3972
      %v4001 = vadd.f32 %v3951, %v3976
      %v4002 = vadd.f32 %v3952, %v3980
      %v4003 = vadd.f32 %v3953, %v3984
      %v4004 = vadd.f32 %v3954, %v3988
      %v4005 = vpack.c.bf16 %v3997, %v3997
      %v4006 = vpack.c.bf16 %v3998, %v3998
      %v4007 = vpack.c.bf16 %v3999, %v3999
      %v4008 = vpack.c.bf16 %v4000, %v4000
      %v4009 = vpack.c.bf16 %v4001, %v4001
      %v4010 = vpack.c.bf16 %v4002, %v4002
      %v4011 = vpack.c.bf16 %v4003, %v4003
      %v4012 = vpack.c.bf16 %v4004, %v4004
      %v4013 = vld [vmem:[#allocation10] sm:$0xff]
      %v4014 = vld [vmem:[#allocation10 + $0x8] sm:$0xff]
      %v4015 = vld [vmem:[#allocation10 + $0x10] sm:$0xff]
      %v4016 = vld [vmem:[#allocation10 + $0x18] sm:$0xff]
      %v4017 = vld [vmem:[#allocation10 + $0x20] sm:$0xff]
      %v4018 = vld [vmem:[#allocation10 + $0x28] sm:$0xff]
      %v4019 = vld [vmem:[#allocation10 + $0x30] sm:$0xff]
      %v4020 = vld [vmem:[#allocation10 + $0x38] sm:$0xff]
      %v4021 = vld [vmem:[#allocation10 + $0x40] sm:$0xff]
      %v4022 = vld [vmem:[#allocation10 + $0x48] sm:$0xff]
      %v4023 = vld [vmem:[#allocation10 + $0x50] sm:$0xff]
      %v4024 = vld [vmem:[#allocation10 + $0x58] sm:$0xff]
      %v4025 = vld [vmem:[#allocation10 + $0x60] sm:$0xff]
      %v4026 = vld [vmem:[#allocation10 + $0x68] sm:$0xff]
      %v4027 = vld [vmem:[#allocation10 + $0x70] sm:$0xff]
      %v4028 = vld [vmem:[#allocation10 + $0x78] sm:$0xff]
      %v4029 = vld [vmem:[#allocation10 + $0x80] sm:$0xff]
      %v4030 = vld [vmem:[#allocation10 + $0x88] sm:$0xff]
      %v4031 = vld [vmem:[#allocation10 + $0x90] sm:$0xff]
      %v4032 = vld [vmem:[#allocation10 + $0x98] sm:$0xff]
      %v4033 = vld [vmem:[#allocation10 + $0xa0] sm:$0xff]
      %v4034 = vld [vmem:[#allocation10 + $0xa8] sm:$0xff]
      %v4035 = vld [vmem:[#allocation10 + $0xb0] sm:$0xff]
      %v4036 = vld [vmem:[#allocation10 + $0xb8] sm:$0xff]
      %v4037 = vld [vmem:[#allocation10 + $0xc0] sm:$0xff]
      %v4038 = vld [vmem:[#allocation10 + $0xc8] sm:$0xff]
      %v4039 = vld [vmem:[#allocation10 + $0xd0] sm:$0xff]
      %v4040 = vld [vmem:[#allocation10 + $0xd8] sm:$0xff]
      %v4041 = vld [vmem:[#allocation10 + $0xe0] sm:$0xff]
      %v4042 = vld [vmem:[#allocation10 + $0xe8] sm:$0xff]
      %v4043 = vld [vmem:[#allocation10 + $0xf0] sm:$0xff]
      %v4044 = vld [vmem:[#allocation10 + $0xf8] sm:$0xff]
      %v4045 = vld [vmem:[#allocation10 + $0x100] sm:$0xff]
      %v4046 = vld [vmem:[#allocation10 + $0x108] sm:$0xff]
      %v4047 = vld [vmem:[#allocation10 + $0x110] sm:$0xff]
      %v4048 = vld [vmem:[#allocation10 + $0x118] sm:$0xff]
      %v4049 = vld [vmem:[#allocation10 + $0x120] sm:$0xff]
      %v4050 = vld [vmem:[#allocation10 + $0x128] sm:$0xff]
      %v4051 = vld [vmem:[#allocation10 + $0x130] sm:$0xff]
      %v4052 = vld [vmem:[#allocation10 + $0x138] sm:$0xff]
      %v4053 = vld [vmem:[#allocation10 + $0x140] sm:$0xff]
      %v4054 = vld [vmem:[#allocation10 + $0x148] sm:$0xff]
      %v4055 = vld [vmem:[#allocation10 + $0x150] sm:$0xff]
      %v4056 = vld [vmem:[#allocation10 + $0x158] sm:$0xff]
      %v4057 = vld [vmem:[#allocation10 + $0x160] sm:$0xff]
      %v4058 = vld [vmem:[#allocation10 + $0x168] sm:$0xff]
      %v4059 = vld [vmem:[#allocation10 + $0x170] sm:$0xff]
      %v4060 = vld [vmem:[#allocation10 + $0x178] sm:$0xff]
      %v4061 = vld [vmem:[#allocation10 + $0x180] sm:$0xff]
      %v4062 = vld [vmem:[#allocation10 + $0x188] sm:$0xff]
      %v4063 = vld [vmem:[#allocation10 + $0x190] sm:$0xff]
      %v4064 = vld [vmem:[#allocation10 + $0x198] sm:$0xff]
      %v4065 = vld [vmem:[#allocation10 + $0x1a0] sm:$0xff]
      %v4066 = vld [vmem:[#allocation10 + $0x1a8] sm:$0xff]
      %v4067 = vld [vmem:[#allocation10 + $0x1b0] sm:$0xff]
      %v4068 = vld [vmem:[#allocation10 + $0x1b8] sm:$0xff]
      %v4069 = vld [vmem:[#allocation10 + $0x1c0] sm:$0xff]
      %v4070 = vld [vmem:[#allocation10 + $0x1c8] sm:$0xff]
      %v4071 = vld [vmem:[#allocation10 + $0x1d0] sm:$0xff]
      %v4072 = vld [vmem:[#allocation10 + $0x1d8] sm:$0xff]
      %v4073 = vld [vmem:[#allocation10 + $0x1e0] sm:$0xff]
      %v4074 = vld [vmem:[#allocation10 + $0x1e8] sm:$0xff]
      %v4075 = vld [vmem:[#allocation10 + $0x1f0] sm:$0xff]
      %v4076 = vld [vmem:[#allocation10 + $0x1f8] sm:$0xff]
      %v4077 = vld [vmem:[#allocation10 + $0x200] sm:$0xff]
      %v4078 = vld [vmem:[#allocation10 + $0x208] sm:$0xff]
      %v4079 = vld [vmem:[#allocation10 + $0x210] sm:$0xff]
      %v4080 = vld [vmem:[#allocation10 + $0x218] sm:$0xff]
      %v4081 = vld [vmem:[#allocation10 + $0x220] sm:$0xff]
      %v4082 = vld [vmem:[#allocation10 + $0x228] sm:$0xff]
      %v4083 = vld [vmem:[#allocation10 + $0x230] sm:$0xff]
      %v4084 = vld [vmem:[#allocation10 + $0x238] sm:$0xff]
      %v4085 = vld [vmem:[#allocation10 + $0x240] sm:$0xff]
      %v4086 = vld [vmem:[#allocation10 + $0x248] sm:$0xff]
      %v4087 = vld [vmem:[#allocation10 + $0x250] sm:$0xff]
      %v4088 = vld [vmem:[#allocation10 + $0x258] sm:$0xff]
      %v4089 = vld [vmem:[#allocation10 + $0x260] sm:$0xff]
      %v4090 = vld [vmem:[#allocation10 + $0x268] sm:$0xff]
      %v4091 = vld [vmem:[#allocation10 + $0x270] sm:$0xff]
      %v4092 = vld [vmem:[#allocation10 + $0x278] sm:$0xff]
      %v4093 = vld [vmem:[#allocation10 + $0x280] sm:$0xff]
      %v4094 = vld [vmem:[#allocation10 + $0x288] sm:$0xff]
      %v4095 = vld [vmem:[#allocation10 + $0x290] sm:$0xff]
      %v4096 = vld [vmem:[#allocation10 + $0x298] sm:$0xff]
      %v4097 = vld [vmem:[#allocation10 + $0x2a0] sm:$0xff]
      %v4098 = vld [vmem:[#allocation10 + $0x2a8] sm:$0xff]
      %v4099 = vld [vmem:[#allocation10 + $0x2b0] sm:$0xff]
      %v4100 = vld [vmem:[#allocation10 + $0x2b8] sm:$0xff]
      %v4101 = vld [vmem:[#allocation10 + $0x2c0] sm:$0xff]
      %v4102 = vld [vmem:[#allocation10 + $0x2c8] sm:$0xff]
      %v4103 = vld [vmem:[#allocation10 + $0x2d0] sm:$0xff]
      %v4104 = vld [vmem:[#allocation10 + $0x2d8] sm:$0xff]
      %v4105 = vld [vmem:[#allocation10 + $0x2e0] sm:$0xff]
      %v4106 = vld [vmem:[#allocation10 + $0x2e8] sm:$0xff]
      %v4107 = vld [vmem:[#allocation10 + $0x2f0] sm:$0xff]
      %v4108 = vld [vmem:[#allocation10 + $0x2f8] sm:$0xff]
      %v4109 = vld [vmem:[#allocation10 + $0x300] sm:$0xff]
      %v4110 = vld [vmem:[#allocation10 + $0x308] sm:$0xff]
      %v4111 = vld [vmem:[#allocation10 + $0x310] sm:$0xff]
      %v4112 = vld [vmem:[#allocation10 + $0x318] sm:$0xff]
      %v4113 = vld [vmem:[#allocation10 + $0x320] sm:$0xff]
      %v4114 = vld [vmem:[#allocation10 + $0x328] sm:$0xff]
      %v4115 = vld [vmem:[#allocation10 + $0x330] sm:$0xff]
      %v4116 = vld [vmem:[#allocation10 + $0x338] sm:$0xff]
      %v4117 = vld [vmem:[#allocation10 + $0x340] sm:$0xff]
      %v4118 = vld [vmem:[#allocation10 + $0x348] sm:$0xff]
      %v4119 = vld [vmem:[#allocation10 + $0x350] sm:$0xff]
      %v4120 = vld [vmem:[#allocation10 + $0x358] sm:$0xff]
      %v4121 = vld [vmem:[#allocation10 + $0x360] sm:$0xff]
      %v4122 = vld [vmem:[#allocation10 + $0x368] sm:$0xff]
      %v4123 = vld [vmem:[#allocation10 + $0x370] sm:$0xff]
      %v4124 = vld [vmem:[#allocation10 + $0x378] sm:$0xff]
      %v4125 = vld [vmem:[#allocation10 + $0x380] sm:$0xff]
      %v4126 = vld [vmem:[#allocation10 + $0x388] sm:$0xff]
      %v4127 = vld [vmem:[#allocation10 + $0x390] sm:$0xff]
      %v4128 = vld [vmem:[#allocation10 + $0x398] sm:$0xff]
      %v4129 = vld [vmem:[#allocation10 + $0x3a0] sm:$0xff]
      %v4130 = vld [vmem:[#allocation10 + $0x3a8] sm:$0xff]
      %v4131 = vld [vmem:[#allocation10 + $0x3b0] sm:$0xff]
      %v4132 = vld [vmem:[#allocation10 + $0x3b8] sm:$0xff]
      %v4133 = vld [vmem:[#allocation10 + $0x3c0] sm:$0xff]
      %v4134 = vld [vmem:[#allocation10 + $0x3c8] sm:$0xff]
      %v4135 = vld [vmem:[#allocation10 + $0x3d0] sm:$0xff]
      %v4136 = vld [vmem:[#allocation10 + $0x3d8] sm:$0xff]
      %v4137 = vld [vmem:[#allocation10 + $0x3e0] sm:$0xff]
      %v4138 = vld [vmem:[#allocation10 + $0x3e8] sm:$0xff]
      %v4139 = vld [vmem:[#allocation10 + $0x3f0] sm:$0xff]
      %v4140 = vld [vmem:[#allocation10 + $0x3f8] sm:$0xff]
      %v4269 = vunpack.c.l.b16 %v4013
      %v4270 = vunpack.c.h.b16 %v4013
      %v4271 = vunpack.c.l.b16 %v4014
      %v4272 = vunpack.c.h.b16 %v4014
      %v4273 = vunpack.c.l.b16 %v4015
      %v4274 = vunpack.c.h.b16 %v4015
      %v4275 = vunpack.c.l.b16 %v4016
      %v4276 = vunpack.c.h.b16 %v4016
      %v4277 = vunpack.c.l.b16 %v4017
      %v4278 = vunpack.c.h.b16 %v4017
      %v4279 = vunpack.c.l.b16 %v4018
      %v4280 = vunpack.c.h.b16 %v4018
      %v4281 = vunpack.c.l.b16 %v4019
      %v4282 = vunpack.c.h.b16 %v4019
      %v4283 = vunpack.c.l.b16 %v4020
      %v4284 = vunpack.c.h.b16 %v4020
      %v4285 = vunpack.c.l.b16 %v4021
      %v4286 = vunpack.c.h.b16 %v4021
      %v4287 = vunpack.c.l.b16 %v4022
      %v4288 = vunpack.c.h.b16 %v4022
      %v4289 = vunpack.c.l.b16 %v4023
      %v4290 = vunpack.c.h.b16 %v4023
      %v4291 = vunpack.c.l.b16 %v4024
      %v4292 = vunpack.c.h.b16 %v4024
      %v4293 = vunpack.c.l.b16 %v4025
      %v4294 = vunpack.c.h.b16 %v4025
      %v4295 = vunpack.c.l.b16 %v4026
      %v4296 = vunpack.c.h.b16 %v4026
      %v4297 = vunpack.c.l.b16 %v4027
      %v4298 = vunpack.c.h.b16 %v4027
      %v4299 = vunpack.c.l.b16 %v4028
      %v4300 = vunpack.c.h.b16 %v4028
      %v4301 = vunpack.c.l.b16 %v4029
      %v4302 = vunpack.c.h.b16 %v4029
      %v4303 = vunpack.c.l.b16 %v4030
      %v4304 = vunpack.c.h.b16 %v4030
      %v4305 = vunpack.c.l.b16 %v4031
      %v4306 = vunpack.c.h.b16 %v4031
      %v4307 = vunpack.c.l.b16 %v4032
      %v4308 = vunpack.c.h.b16 %v4032
      %v4309 = vunpack.c.l.b16 %v4033
      %v4310 = vunpack.c.h.b16 %v4033
      %v4311 = vunpack.c.l.b16 %v4034
      %v4312 = vunpack.c.h.b16 %v4034
      %v4313 = vunpack.c.l.b16 %v4035
      %v4314 = vunpack.c.h.b16 %v4035
      %v4315 = vunpack.c.l.b16 %v4036
      %v4316 = vunpack.c.h.b16 %v4036
      %v4317 = vunpack.c.l.b16 %v4037
      %v4318 = vunpack.c.h.b16 %v4037
      %v4319 = vunpack.c.l.b16 %v4038
      %v4320 = vunpack.c.h.b16 %v4038
      %v4321 = vunpack.c.l.b16 %v4039
      %v4322 = vunpack.c.h.b16 %v4039
      %v4323 = vunpack.c.l.b16 %v4040
      %v4324 = vunpack.c.h.b16 %v4040
      %v4325 = vunpack.c.l.b16 %v4041
      %v4326 = vunpack.c.h.b16 %v4041
      %v4327 = vunpack.c.l.b16 %v4042
      %v4328 = vunpack.c.h.b16 %v4042
      %v4329 = vunpack.c.l.b16 %v4043
      %v4330 = vunpack.c.h.b16 %v4043
      %v4331 = vunpack.c.l.b16 %v4044
      %v4332 = vunpack.c.h.b16 %v4044
      %v4333 = vunpack.c.l.b16 %v4045
      %v4334 = vunpack.c.h.b16 %v4045
      %v4335 = vunpack.c.l.b16 %v4046
      %v4336 = vunpack.c.h.b16 %v4046
      %v4337 = vunpack.c.l.b16 %v4047
      %v4338 = vunpack.c.h.b16 %v4047
      %v4339 = vunpack.c.l.b16 %v4048
      %v4340 = vunpack.c.h.b16 %v4048
      %v4341 = vunpack.c.l.b16 %v4049
      %v4342 = vunpack.c.h.b16 %v4049
      %v4343 = vunpack.c.l.b16 %v4050
      %v4344 = vunpack.c.h.b16 %v4050
      %v4345 = vunpack.c.l.b16 %v4051
      %v4346 = vunpack.c.h.b16 %v4051
      %v4347 = vunpack.c.l.b16 %v4052
      %v4348 = vunpack.c.h.b16 %v4052
      %v4349 = vunpack.c.l.b16 %v4053
      %v4350 = vunpack.c.h.b16 %v4053
      %v4351 = vunpack.c.l.b16 %v4054
      %v4352 = vunpack.c.h.b16 %v4054
      %v4353 = vunpack.c.l.b16 %v4055
      %v4354 = vunpack.c.h.b16 %v4055
      %v4355 = vunpack.c.l.b16 %v4056
      %v4356 = vunpack.c.h.b16 %v4056
      %v4357 = vunpack.c.l.b16 %v4057
      %v4358 = vunpack.c.h.b16 %v4057
      %v4359 = vunpack.c.l.b16 %v4058
      %v4360 = vunpack.c.h.b16 %v4058
      %v4361 = vunpack.c.l.b16 %v4059
      %v4362 = vunpack.c.h.b16 %v4059
      %v4363 = vunpack.c.l.b16 %v4060
      %v4364 = vunpack.c.h.b16 %v4060
      %v4365 = vunpack.c.l.b16 %v4061
      %v4366 = vunpack.c.h.b16 %v4061
      %v4367 = vunpack.c.l.b16 %v4062
      %v4368 = vunpack.c.h.b16 %v4062
      %v4369 = vunpack.c.l.b16 %v4063
      %v4370 = vunpack.c.h.b16 %v4063
      %v4371 = vunpack.c.l.b16 %v4064
      %v4372 = vunpack.c.h.b16 %v4064
      %v4373 = vunpack.c.l.b16 %v4065
      %v4374 = vunpack.c.h.b16 %v4065
      %v4375 = vunpack.c.l.b16 %v4066
      %v4376 = vunpack.c.h.b16 %v4066
      %v4377 = vunpack.c.l.b16 %v4067
      %v4378 = vunpack.c.h.b16 %v4067
      %v4379 = vunpack.c.l.b16 %v4068
      %v4380 = vunpack.c.h.b16 %v4068
      %v4381 = vunpack.c.l.b16 %v4069
      %v4382 = vunpack.c.h.b16 %v4069
      %v4383 = vunpack.c.l.b16 %v4070
      %v4384 = vunpack.c.h.b16 %v4070
      %v4385 = vunpack.c.l.b16 %v4071
      %v4386 = vunpack.c.h.b16 %v4071
      %v4387 = vunpack.c.l.b16 %v4072
      %v4388 = vunpack.c.h.b16 %v4072
      %v4389 = vunpack.c.l.b16 %v4073
      %v4390 = vunpack.c.h.b16 %v4073
      %v4391 = vunpack.c.l.b16 %v4074
      %v4392 = vunpack.c.h.b16 %v4074
      %v4393 = vunpack.c.l.b16 %v4075
      %v4394 = vunpack.c.h.b16 %v4075
      %v4395 = vunpack.c.l.b16 %v4076
      %v4396 = vunpack.c.h.b16 %v4076
      %v4397 = vunpack.c.l.b16 %v4077
      %v4398 = vunpack.c.h.b16 %v4077
      %v4399 = vunpack.c.l.b16 %v4078
      %v4400 = vunpack.c.h.b16 %v4078
      %v4401 = vunpack.c.l.b16 %v4079
      %v4402 = vunpack.c.h.b16 %v4079
      %v4403 = vunpack.c.l.b16 %v4080
      %v4404 = vunpack.c.h.b16 %v4080
      %v4405 = vunpack.c.l.b16 %v4081
      %v4406 = vunpack.c.h.b16 %v4081
      %v4407 = vunpack.c.l.b16 %v4082
      %v4408 = vunpack.c.h.b16 %v4082
      %v4409 = vunpack.c.l.b16 %v4083
      %v4410 = vunpack.c.h.b16 %v4083
      %v4411 = vunpack.c.l.b16 %v4084
      %v4412 = vunpack.c.h.b16 %v4084
      %v4413 = vunpack.c.l.b16 %v4085
      %v4414 = vunpack.c.h.b16 %v4085
      %v4415 = vunpack.c.l.b16 %v4086
      %v4416 = vunpack.c.h.b16 %v4086
      %v4417 = vunpack.c.l.b16 %v4087
      %v4418 = vunpack.c.h.b16 %v4087
      %v4419 = vunpack.c.l.b16 %v4088
      %v4420 = vunpack.c.h.b16 %v4088
      %v4421 = vunpack.c.l.b16 %v4089
      %v4422 = vunpack.c.h.b16 %v4089
      %v4423 = vunpack.c.l.b16 %v4090
      %v4424 = vunpack.c.h.b16 %v4090
      %v4425 = vunpack.c.l.b16 %v4091
      %v4426 = vunpack.c.h.b16 %v4091
      %v4427 = vunpack.c.l.b16 %v4092
      %v4428 = vunpack.c.h.b16 %v4092
      %v4429 = vunpack.c.l.b16 %v4093
      %v4430 = vunpack.c.h.b16 %v4093
      %v4431 = vunpack.c.l.b16 %v4094
      %v4432 = vunpack.c.h.b16 %v4094
      %v4433 = vunpack.c.l.b16 %v4095
      %v4434 = vunpack.c.h.b16 %v4095
      %v4435 = vunpack.c.l.b16 %v4096
      %v4436 = vunpack.c.h.b16 %v4096
      %v4437 = vunpack.c.l.b16 %v4097
      %v4438 = vunpack.c.h.b16 %v4097
      %v4439 = vunpack.c.l.b16 %v4098
      %v4440 = vunpack.c.h.b16 %v4098
      %v4441 = vunpack.c.l.b16 %v4099
      %v4442 = vunpack.c.h.b16 %v4099
      %v4443 = vunpack.c.l.b16 %v4100
      %v4444 = vunpack.c.h.b16 %v4100
      %v4445 = vunpack.c.l.b16 %v4101
      %v4446 = vunpack.c.h.b16 %v4101
      %v4447 = vunpack.c.l.b16 %v4102
      %v4448 = vunpack.c.h.b16 %v4102
      %v4449 = vunpack.c.l.b16 %v4103
      %v4450 = vunpack.c.h.b16 %v4103
      %v4451 = vunpack.c.l.b16 %v4104
      %v4452 = vunpack.c.h.b16 %v4104
      %v4453 = vunpack.c.l.b16 %v4105
      %v4454 = vunpack.c.h.b16 %v4105
      %v4455 = vunpack.c.l.b16 %v4106
      %v4456 = vunpack.c.h.b16 %v4106
      %v4457 = vunpack.c.l.b16 %v4107
      %v4458 = vunpack.c.h.b16 %v4107
      %v4459 = vunpack.c.l.b16 %v4108
      %v4460 = vunpack.c.h.b16 %v4108
      %v4461 = vunpack.c.l.b16 %v4109
      %v4462 = vunpack.c.h.b16 %v4109
      %v4463 = vunpack.c.l.b16 %v4110
      %v4464 = vunpack.c.h.b16 %v4110
      %v4465 = vunpack.c.l.b16 %v4111
      %v4466 = vunpack.c.h.b16 %v4111
      %v4467 = vunpack.c.l.b16 %v4112
      %v4468 = vunpack.c.h.b16 %v4112
      %v4469 = vunpack.c.l.b16 %v4113
      %v4470 = vunpack.c.h.b16 %v4113
      %v4471 = vunpack.c.l.b16 %v4114
      %v4472 = vunpack.c.h.b16 %v4114
      %v4473 = vunpack.c.l.b16 %v4115
      %v4474 = vunpack.c.h.b16 %v4115
      %v4475 = vunpack.c.l.b16 %v4116
      %v4476 = vunpack.c.h.b16 %v4116
      %v4477 = vunpack.c.l.b16 %v4117
      %v4478 = vunpack.c.h.b16 %v4117
      %v4479 = vunpack.c.l.b16 %v4118
      %v4480 = vunpack.c.h.b16 %v4118
      %v4481 = vunpack.c.l.b16 %v4119
      %v4482 = vunpack.c.h.b16 %v4119
      %v4483 = vunpack.c.l.b16 %v4120
      %v4484 = vunpack.c.h.b16 %v4120
      %v4485 = vunpack.c.l.b16 %v4121
      %v4486 = vunpack.c.h.b16 %v4121
      %v4487 = vunpack.c.l.b16 %v4122
      %v4488 = vunpack.c.h.b16 %v4122
      %v4489 = vunpack.c.l.b16 %v4123
      %v4490 = vunpack.c.h.b16 %v4123
      %v4491 = vunpack.c.l.b16 %v4124
      %v4492 = vunpack.c.h.b16 %v4124
      %v4493 = vunpack.c.l.b16 %v4125
      %v4494 = vunpack.c.h.b16 %v4125
      %v4495 = vunpack.c.l.b16 %v4126
      %v4496 = vunpack.c.h.b16 %v4126
      %v4497 = vunpack.c.l.b16 %v4127
      %v4498 = vunpack.c.h.b16 %v4127
      %v4499 = vunpack.c.l.b16 %v4128
      %v4500 = vunpack.c.h.b16 %v4128
      %v4501 = vunpack.c.l.b16 %v4129
      %v4502 = vunpack.c.h.b16 %v4129
      %v4503 = vunpack.c.l.b16 %v4130
      %v4504 = vunpack.c.h.b16 %v4130
      %v4505 = vunpack.c.l.b16 %v4131
      %v4506 = vunpack.c.h.b16 %v4131
      %v4507 = vunpack.c.l.b16 %v4132
      %v4508 = vunpack.c.h.b16 %v4132
      %v4509 = vunpack.c.l.b16 %v4133
      %v4510 = vunpack.c.h.b16 %v4133
      %v4511 = vunpack.c.l.b16 %v4134
      %v4512 = vunpack.c.h.b16 %v4134
      %v4513 = vunpack.c.l.b16 %v4135
      %v4514 = vunpack.c.h.b16 %v4135
      %v4515 = vunpack.c.l.b16 %v4136
      %v4516 = vunpack.c.h.b16 %v4136
      %v4517 = vunpack.c.l.b16 %v4137
      %v4518 = vunpack.c.h.b16 %v4137
      %v4519 = vunpack.c.l.b16 %v4138
      %v4520 = vunpack.c.h.b16 %v4138
      %v4521 = vunpack.c.l.b16 %v4139
      %v4522 = vunpack.c.h.b16 %v4139
      %v4523 = vunpack.c.l.b16 %v4140
      %v4524 = vunpack.c.h.b16 %v4140
      %v4525 = vpack.c.b16 %v4271, %v4269
      %v4526 = vpack.c.b16 %v4272, %v4270
      %v4527 = vpack.c.b16 %v4275, %v4273
      %v4528 = vpack.c.b16 %v4276, %v4274
      %v4529 = vpack.c.b16 %v4279, %v4277
      %v4530 = vpack.c.b16 %v4280, %v4278
      %v4531 = vpack.c.b16 %v4283, %v4281
      %v4532 = vpack.c.b16 %v4284, %v4282
      %v4533 = vpack.c.b16 %v4287, %v4285
      %v4534 = vpack.c.b16 %v4288, %v4286
      %v4535 = vpack.c.b16 %v4291, %v4289
      %v4536 = vpack.c.b16 %v4292, %v4290
      %v4537 = vpack.c.b16 %v4295, %v4293
      %v4538 = vpack.c.b16 %v4296, %v4294
      %v4539 = vpack.c.b16 %v4299, %v4297
      %v4540 = vpack.c.b16 %v4300, %v4298
      %v4541 = vpack.c.b16 %v4303, %v4301
      %v4542 = vpack.c.b16 %v4304, %v4302
      %v4543 = vpack.c.b16 %v4307, %v4305
      %v4544 = vpack.c.b16 %v4308, %v4306
      %v4545 = vpack.c.b16 %v4311, %v4309
      %v4546 = vpack.c.b16 %v4312, %v4310
      %v4547 = vpack.c.b16 %v4315, %v4313
      %v4548 = vpack.c.b16 %v4316, %v4314
      %v4549 = vpack.c.b16 %v4319, %v4317
      %v4550 = vpack.c.b16 %v4320, %v4318
      %v4551 = vpack.c.b16 %v4323, %v4321
      %v4552 = vpack.c.b16 %v4324, %v4322
      %v4553 = vpack.c.b16 %v4327, %v4325
      %v4554 = vpack.c.b16 %v4328, %v4326
      %v4555 = vpack.c.b16 %v4331, %v4329
      %v4556 = vpack.c.b16 %v4332, %v4330
      %v4557 = vpack.c.b16 %v4335, %v4333
      %v4558 = vpack.c.b16 %v4336, %v4334
      %v4559 = vpack.c.b16 %v4339, %v4337
      %v4560 = vpack.c.b16 %v4340, %v4338
      %v4561 = vpack.c.b16 %v4343, %v4341
      %v4562 = vpack.c.b16 %v4344, %v4342
      %v4563 = vpack.c.b16 %v4347, %v4345
      %v4564 = vpack.c.b16 %v4348, %v4346
      %v4565 = vpack.c.b16 %v4351, %v4349
      %v4566 = vpack.c.b16 %v4352, %v4350
      %v4567 = vpack.c.b16 %v4355, %v4353
      %v4568 = vpack.c.b16 %v4356, %v4354
      %v4569 = vpack.c.b16 %v4359, %v4357
      %v4570 = vpack.c.b16 %v4360, %v4358
      %v4571 = vpack.c.b16 %v4363, %v4361
      %v4572 = vpack.c.b16 %v4364, %v4362
      %v4573 = vpack.c.b16 %v4367, %v4365
      %v4574 = vpack.c.b16 %v4368, %v4366
      %v4575 = vpack.c.b16 %v4371, %v4369
      %v4576 = vpack.c.b16 %v4372, %v4370
      %v4577 = vpack.c.b16 %v4375, %v4373
      %v4578 = vpack.c.b16 %v4376, %v4374
      %v4579 = vpack.c.b16 %v4379, %v4377
      %v4580 = vpack.c.b16 %v4380, %v4378
      %v4581 = vpack.c.b16 %v4383, %v4381
      %v4582 = vpack.c.b16 %v4384, %v4382
      %v4583 = vpack.c.b16 %v4387, %v4385
      %v4584 = vpack.c.b16 %v4388, %v4386
      %v4585 = vpack.c.b16 %v4391, %v4389
      %v4586 = vpack.c.b16 %v4392, %v4390
      %v4587 = vpack.c.b16 %v4395, %v4393
      %v4588 = vpack.c.b16 %v4396, %v4394
      %v4589 = vpack.c.b16 %v4399, %v4397
      %v4590 = vpack.c.b16 %v4400, %v4398
      %v4591 = vpack.c.b16 %v4403, %v4401
      %v4592 = vpack.c.b16 %v4404, %v4402
      %v4593 = vpack.c.b16 %v4407, %v4405
      %v4594 = vpack.c.b16 %v4408, %v4406
      %v4595 = vpack.c.b16 %v4411, %v4409
      %v4596 = vpack.c.b16 %v4412, %v4410
      %v4597 = vpack.c.b16 %v4415, %v4413
      %v4598 = vpack.c.b16 %v4416, %v4414
      %v4599 = vpack.c.b16 %v4419, %v4417
      %v4600 = vpack.c.b16 %v4420, %v4418
      %v4601 = vpack.c.b16 %v4423, %v4421
      %v4602 = vpack.c.b16 %v4424, %v4422
      %v4603 = vpack.c.b16 %v4427, %v4425
      %v4604 = vpack.c.b16 %v4428, %v4426
      %v4605 = vpack.c.b16 %v4431, %v4429
      %v4606 = vpack.c.b16 %v4432, %v4430
      %v4607 = vpack.c.b16 %v4435, %v4433
      %v4608 = vpack.c.b16 %v4436, %v4434
      %v4609 = vpack.c.b16 %v4439, %v4437
      %v4610 = vpack.c.b16 %v4440, %v4438
      %v4611 = vpack.c.b16 %v4443, %v4441
      %v4612 = vpack.c.b16 %v4444, %v4442
      %v4613 = vpack.c.b16 %v4447, %v4445
      %v4614 = vpack.c.b16 %v4448, %v4446
      %v4615 = vpack.c.b16 %v4451, %v4449
      %v4616 = vpack.c.b16 %v4452, %v4450
      %v4617 = vpack.c.b16 %v4455, %v4453
      %v4618 = vpack.c.b16 %v4456, %v4454
      %v4619 = vpack.c.b16 %v4459, %v4457
      %v4620 = vpack.c.b16 %v4460, %v4458
      %v4621 = vpack.c.b16 %v4463, %v4461
      %v4622 = vpack.c.b16 %v4464, %v4462
      %v4623 = vpack.c.b16 %v4467, %v4465
      %v4624 = vpack.c.b16 %v4468, %v4466
      %v4625 = vpack.c.b16 %v4471, %v4469
      %v4626 = vpack.c.b16 %v4472, %v4470
      %v4627 = vpack.c.b16 %v4475, %v4473
      %v4628 = vpack.c.b16 %v4476, %v4474
      %v4629 = vpack.c.b16 %v4479, %v4477
      %v4630 = vpack.c.b16 %v4480, %v4478
      %v4631 = vpack.c.b16 %v4483, %v4481
      %v4632 = vpack.c.b16 %v4484, %v4482
      %v4633 = vpack.c.b16 %v4487, %v4485
      %v4634 = vpack.c.b16 %v4488, %v4486
      %v4635 = vpack.c.b16 %v4491, %v4489
      %v4636 = vpack.c.b16 %v4492, %v4490
      %v4637 = vpack.c.b16 %v4495, %v4493
      %v4638 = vpack.c.b16 %v4496, %v4494
      %v4639 = vpack.c.b16 %v4499, %v4497
      %v4640 = vpack.c.b16 %v4500, %v4498
      %v4641 = vpack.c.b16 %v4503, %v4501
      %v4642 = vpack.c.b16 %v4504, %v4502
      %v4643 = vpack.c.b16 %v4507, %v4505
      %v4644 = vpack.c.b16 %v4508, %v4506
      %v4645 = vpack.c.b16 %v4511, %v4509
      %v4646 = vpack.c.b16 %v4512, %v4510
      %v4647 = vpack.c.b16 %v4515, %v4513
      %v4648 = vpack.c.b16 %v4516, %v4514
      %v4649 = vpack.c.b16 %v4519, %v4517
      %v4650 = vpack.c.b16 %v4520, %v4518
      %v4651 = vpack.c.b16 %v4523, %v4521
      %v4652 = vpack.c.b16 %v4524, %v4522
      %4781 = vmatprep.subr.bf16.mxu0 %v4526
      %4782 = vmatpush1.bf16.msra.mxu0 %v4525
      %4783 = vmatprep.subr.bf16.mxu0 %v4528
      %4784 = vmatpush1.bf16.msra.mxu0 %v4527
      %4785 = vmatprep.subr.bf16.mxu0 %v4530
      %4786 = vmatpush1.bf16.msra.mxu0 %v4529
      %4787 = vmatprep.subr.bf16.mxu0 %v4532
      %4788 = vmatpush1.bf16.msra.mxu0 %v4531
      %4789 = vmatprep.subr.bf16.mxu0 %v4534
      %4790 = vmatpush1.bf16.msra.mxu0 %v4533
      %4791 = vmatprep.subr.bf16.mxu0 %v4536
      %4792 = vmatpush1.bf16.msra.mxu0 %v4535
      %4793 = vmatprep.subr.bf16.mxu0 %v4538
      %4794 = vmatpush1.bf16.msra.mxu0 %v4537
      %4795 = vmatprep.subr.bf16.mxu0 %v4540
      %4796 = vmatpush1.bf16.msra.mxu0 %v4539
      %4797 = vmatprep.subr.bf16.mxu0 %v4542
      %4798 = vmatpush1.bf16.msra.mxu0 %v4541
      %4799 = vmatprep.subr.bf16.mxu0 %v4544
      %4800 = vmatpush1.bf16.msra.mxu0 %v4543
      %4801 = vmatprep.subr.bf16.mxu0 %v4546
      %4802 = vmatpush1.bf16.msra.mxu0 %v4545
      %4803 = vmatprep.subr.bf16.mxu0 %v4548
      %4804 = vmatpush1.bf16.msra.mxu0 %v4547
      %4805 = vmatprep.subr.bf16.mxu0 %v4550
      %4806 = vmatpush1.bf16.msra.mxu0 %v4549
      %4807 = vmatprep.subr.bf16.mxu0 %v4552
      %4808 = vmatpush1.bf16.msra.mxu0 %v4551
      %4809 = vmatprep.subr.bf16.mxu0 %v4554
      %4810 = vmatpush1.bf16.msra.mxu0 %v4553
      %4811 = vmatprep.subr.bf16.mxu0 %v4556
      %4812 = vmatpush1.bf16.msra.mxu0 %v4555
      %4813 = vmatprep.mubr.bf16.mxu0 %v4006
      %4814 = vmatmul.mubr.bf16.gmra.mrb[0].mxu0 %v4005
      %v4815 = vpop.f32.mrb[0].mxu0
      %v4816 = vadd.f32 0.0, %v4815
      %v4817 = vpop.f32.mrb[0].mxu0
      %v4818 = vadd.f32 0.0, %v4817
      %v4819 = vpop.f32.mrb[0].mxu0
      %v4820 = vpop.f32.mrb[0].mxu0
      %4821 = vdwg.mxu0
      %4822 = vmatprep.subr.bf16.mxu0 %v4558
      %4823 = vmatpush1.bf16.msra.mxu0 %v4557
      %4824 = vmatprep.subr.bf16.mxu0 %v4560
      %4825 = vmatpush1.bf16.msra.mxu0 %v4559
      %4826 = vmatprep.subr.bf16.mxu0 %v4562
      %4827 = vmatpush1.bf16.msra.mxu0 %v4561
      %4828 = vmatprep.subr.bf16.mxu0 %v4564
      %4829 = vmatpush1.bf16.msra.mxu0 %v4563
      %4830 = vmatprep.subr.bf16.mxu0 %v4566
      %4831 = vmatpush1.bf16.msra.mxu0 %v4565
      %4832 = vmatprep.subr.bf16.mxu0 %v4568
      %4833 = vmatpush1.bf16.msra.mxu0 %v4567
      %4834 = vmatprep.subr.bf16.mxu0 %v4570
      %4835 = vmatpush1.bf16.msra.mxu0 %v4569
      %4836 = vmatprep.subr.bf16.mxu0 %v4572
      %4837 = vmatpush1.bf16.msra.mxu0 %v4571
      %4838 = vmatprep.subr.bf16.mxu0 %v4574
      %4839 = vmatpush1.bf16.msra.mxu0 %v4573
      %4840 = vmatprep.subr.bf16.mxu0 %v4576
      %4841 = vmatpush1.bf16.msra.mxu0 %v4575
      %4842 = vmatprep.subr.bf16.mxu0 %v4578
      %4843 = vmatpush1.bf16.msra.mxu0 %v4577
      %4844 = vmatprep.subr.bf16.mxu0 %v4580
      %4845 = vmatpush1.bf16.msra.mxu0 %v4579
      %4846 = vmatprep.subr.bf16.mxu0 %v4582
      %4847 = vmatpush1.bf16.msra.mxu0 %v4581
      %4848 = vmatprep.subr.bf16.mxu0 %v4584
      %4849 = vmatpush1.bf16.msra.mxu0 %v4583
      %4850 = vmatprep.subr.bf16.mxu0 %v4586
      %4851 = vmatpush1.bf16.msra.mxu0 %v4585
      %4852 = vmatprep.subr.bf16.mxu0 %v4588
      %4853 = vmatpush1.bf16.msra.mxu0 %v4587
      %4854 = vmatprep.mubr.bf16.mxu0 %v4008
      %4855 = vmatmul.mubr.bf16.gmra.mrb[0].mxu0 %v4007
      %v4856 = vpop.f32.mrb[0].mxu0
      %v4857 = vadd.f32 %v4816, %v4856
      %v4858 = vpop.f32.mrb[0].mxu0
      %v4859 = vadd.f32 %v4818, %v4858
      %v4860 = vpop.f32.mrb[0].mxu0
      %v4861 = vpop.f32.mrb[0].mxu0
      %4862 = vdwg.mxu0
      %4863 = vmatprep.subr.bf16.mxu0 %v4590
      %4864 = vmatpush1.bf16.msra.mxu0 %v4589
      %4865 = vmatprep.subr.bf16.mxu0 %v4592
      %4866 = vmatpush1.bf16.msra.mxu0 %v4591
      %4867 = vmatprep.subr.bf16.mxu0 %v4594
      %4868 = vmatpush1.bf16.msra.mxu0 %v4593
      %4869 = vmatprep.subr.bf16.mxu0 %v4596
      %4870 = vmatpush1.bf16.msra.mxu0 %v4595
      %4871 = vmatprep.subr.bf16.mxu0 %v4598
      %4872 = vmatpush1.bf16.msra.mxu0 %v4597
      %4873 = vmatprep.subr.bf16.mxu0 %v4600
      %4874 = vmatpush1.bf16.msra.mxu0 %v4599
      %4875 = vmatprep.subr.bf16.mxu0 %v4602
      %4876 = vmatpush1.bf16.msra.mxu0 %v4601
      %4877 = vmatprep.subr.bf16.mxu0 %v4604
      %4878 = vmatpush1.bf16.msra.mxu0 %v4603
      %4879 = vmatprep.subr.bf16.mxu0 %v4606
      %4880 = vmatpush1.bf16.msra.mxu0 %v4605
      %4881 = vmatprep.subr.bf16.mxu0 %v4608
      %4882 = vmatpush1.bf16.msra.mxu0 %v4607
      %4883 = vmatprep.subr.bf16.mxu0 %v4610
      %4884 = vmatpush1.bf16.msra.mxu0 %v4609
      %4885 = vmatprep.subr.bf16.mxu0 %v4612
      %4886 = vmatpush1.bf16.msra.mxu0 %v4611
      %4887 = vmatprep.subr.bf16.mxu0 %v4614
      %4888 = vmatpush1.bf16.msra.mxu0 %v4613
      %4889 = vmatprep.subr.bf16.mxu0 %v4616
      %4890 = vmatpush1.bf16.msra.mxu0 %v4615
      %4891 = vmatprep.subr.bf16.mxu0 %v4618
      %4892 = vmatpush1.bf16.msra.mxu0 %v4617
      %4893 = vmatprep.subr.bf16.mxu0 %v4620
      %4894 = vmatpush1.bf16.msra.mxu0 %v4619
      %4895 = vmatprep.mubr.bf16.mxu0 %v4010
      %4896 = vmatmul.mubr.bf16.gmra.mrb[0].mxu0 %v4009
      %v4897 = vpop.f32.mrb[0].mxu0
      %v4898 = vadd.f32 %v4857, %v4897
      %v4899 = vpop.f32.mrb[0].mxu0
      %v4900 = vadd.f32 %v4859, %v4899
      %v4901 = vpop.f32.mrb[0].mxu0
      %v4902 = vpop.f32.mrb[0].mxu0
      %4903 = vdwg.mxu0
      %4904 = vmatprep.subr.bf16.mxu0 %v4622
      %4905 = vmatpush1.bf16.msra.mxu0 %v4621
      %4906 = vmatprep.subr.bf16.mxu0 %v4624
      %4907 = vmatpush1.bf16.msra.mxu0 %v4623
      %4908 = vmatprep.subr.bf16.mxu0 %v4626
      %4909 = vmatpush1.bf16.msra.mxu0 %v4625
      %4910 = vmatprep.subr.bf16.mxu0 %v4628
      %4911 = vmatpush1.bf16.msra.mxu0 %v4627
      %4912 = vmatprep.subr.bf16.mxu0 %v4630
      %4913 = vmatpush1.bf16.msra.mxu0 %v4629
      %4914 = vmatprep.subr.bf16.mxu0 %v4632
      %4915 = vmatpush1.bf16.msra.mxu0 %v4631
      %4916 = vmatprep.subr.bf16.mxu0 %v4634
      %4917 = vmatpush1.bf16.msra.mxu0 %v4633
      %4918 = vmatprep.subr.bf16.mxu0 %v4636
      %4919 = vmatpush1.bf16.msra.mxu0 %v4635
      %4920 = vmatprep.subr.bf16.mxu0 %v4638
      %4921 = vmatpush1.bf16.msra.mxu0 %v4637
      %4922 = vmatprep.subr.bf16.mxu0 %v4640
      %4923 = vmatpush1.bf16.msra.mxu0 %v4639
      %4924 = vmatprep.subr.bf16.mxu0 %v4642
      %4925 = vmatpush1.bf16.msra.mxu0 %v4641
      %4926 = vmatprep.subr.bf16.mxu0 %v4644
      %4927 = vmatpush1.bf16.msra.mxu0 %v4643
      %4928 = vmatprep.subr.bf16.mxu0 %v4646
      %4929 = vmatpush1.bf16.msra.mxu0 %v4645
      %4930 = vmatprep.subr.bf16.mxu0 %v4648
      %4931 = vmatpush1.bf16.msra.mxu0 %v4647
      %4932 = vmatprep.subr.bf16.mxu0 %v4650
      %4933 = vmatpush1.bf16.msra.mxu0 %v4649
      %4934 = vmatprep.subr.bf16.mxu0 %v4652
      %4935 = vmatpush1.bf16.msra.mxu0 %v4651
      %4936 = vmatprep.mubr.bf16.mxu0 %v4012
      %4937 = vmatmul.mubr.bf16.gmra.mrb[0].mxu0 %v4011
      %v4938 = vpop.f32.mrb[0].mxu0
      %v4939 = vadd.f32 %v4898, %v4938
      %v4940 = vpop.f32.mrb[0].mxu0
      %v4941 = vadd.f32 %v4900, %v4940
      %v4942 = vpop.f32.mrb[0].mxu0
      %v4943 = vpop.f32.mrb[0].mxu0
      %4944 = vdwg.mxu0
      %v4945 = vld [vmem:[#allocation8] sm:$0xf]
      %v4946 = vld [vmem:[#allocation8 + $0x4] sm:$0xf]
      %v4947 = vld [vmem:[#allocation8 + $0x8] sm:$0xf]
      %v4948 = vld [vmem:[#allocation8 + $0xc] sm:$0xf]
      %v4949 = vld [vmem:[#allocation11] sm:$0xff]
      %v4950 = vld [vmem:[#allocation11 + $0x8] sm:$0xff]
      %v4951 = vld [vmem:[#allocation11 + $0x10] sm:$0xff]
      %v4952 = vld [vmem:[#allocation11 + $0x18] sm:$0xff]
      %v4953 = vld [vmem:[#allocation11 + $0x20] sm:$0xff]
      %v4954 = vld [vmem:[#allocation11 + $0x28] sm:$0xff]
      %v4955 = vld [vmem:[#allocation11 + $0x30] sm:$0xff]
      %v4956 = vld [vmem:[#allocation11 + $0x38] sm:$0xff]
      %v4957 = vld [vmem:[#allocation11 + $0x40] sm:$0xff]
      %v4958 = vld [vmem:[#allocation11 + $0x48] sm:$0xff]
      %v4959 = vld [vmem:[#allocation11 + $0x50] sm:$0xff]
      %v4960 = vld [vmem:[#allocation11 + $0x58] sm:$0xff]
      %v4961 = vld [vmem:[#allocation11 + $0x60] sm:$0xff]
      %v4962 = vld [vmem:[#allocation11 + $0x68] sm:$0xff]
      %v4963 = vld [vmem:[#allocation11 + $0x70] sm:$0xff]
      %v4964 = vld [vmem:[#allocation11 + $0x78] sm:$0xff]
      %v4969 = vunpack.c.l.b16 %v4945
      %v4970 = vunpack.c.l.b16 %v4946
      %v4971 = vunpack.c.l.b16 %v4947
      %v4972 = vunpack.c.l.b16 %v4948
      %v4973 = vpack.c.b16 %v4970, %v4969
      %v4974 = vpack.c.b16 %v4972, %v4971
      %v4993 = vunpack.c.l.b16 %v4949
      %v4994 = vunpack.c.h.b16 %v4949
      %v4995 = vunpack.c.l.b16 %v4950
      %v4996 = vunpack.c.h.b16 %v4950
      %v4997 = vunpack.c.l.b16 %v4951
      %v4998 = vunpack.c.h.b16 %v4951
      %v4999 = vunpack.c.l.b16 %v4952
      %v5000 = vunpack.c.h.b16 %v4952
      %v5001 = vunpack.c.l.b16 %v4953
      %v5002 = vunpack.c.h.b16 %v4953
      %v5003 = vunpack.c.l.b16 %v4954
      %v5004 = vunpack.c.h.b16 %v4954
      %v5005 = vunpack.c.l.b16 %v4955
      %v5006 = vunpack.c.h.b16 %v4955
      %v5007 = vunpack.c.l.b16 %v4956
      %v5008 = vunpack.c.h.b16 %v4956
      %v5009 = vunpack.c.l.b16 %v4957
      %v5010 = vunpack.c.h.b16 %v4957
      %v5011 = vunpack.c.l.b16 %v4958
      %v5012 = vunpack.c.h.b16 %v4958
      %v5013 = vunpack.c.l.b16 %v4959
      %v5014 = vunpack.c.h.b16 %v4959
      %v5015 = vunpack.c.l.b16 %v4960
      %v5016 = vunpack.c.h.b16 %v4960
      %v5017 = vunpack.c.l.b16 %v4961
      %v5018 = vunpack.c.h.b16 %v4961
      %v5019 = vunpack.c.l.b16 %v4962
      %v5020 = vunpack.c.h.b16 %v4962
      %v5021 = vunpack.c.l.b16 %v4963
      %v5022 = vunpack.c.h.b16 %v4963
      %v5023 = vunpack.c.l.b16 %v4964
      %v5024 = vunpack.c.h.b16 %v4964
      %v5025 = vpack.c.b16 %v4995, %v4993
      %v5026 = vpack.c.b16 %v4996, %v4994
      %v5027 = vpack.c.b16 %v4999, %v4997
      %v5028 = vpack.c.b16 %v5000, %v4998
      %v5029 = vpack.c.b16 %v5003, %v5001
      %v5030 = vpack.c.b16 %v5004, %v5002
      %v5031 = vpack.c.b16 %v5007, %v5005
      %v5032 = vpack.c.b16 %v5008, %v5006
      %v5033 = vpack.c.b16 %v5011, %v5009
      %v5034 = vpack.c.b16 %v5012, %v5010
      %v5035 = vpack.c.b16 %v5015, %v5013
      %v5036 = vpack.c.b16 %v5016, %v5014
      %v5037 = vpack.c.b16 %v5019, %v5017
      %v5038 = vpack.c.b16 %v5020, %v5018
      %v5039 = vpack.c.b16 %v5023, %v5021
      %v5040 = vpack.c.b16 %v5024, %v5022
      %5057 = vmatprep.subr.bf16.mxu0 %v5026
      %5058 = vmatpush1.bf16.msra.mxu0 %v5025
      %5059 = vmatprep.subr.bf16.mxu0 %v5028
      %5060 = vmatpush1.bf16.msra.mxu0 %v5027
      %5061 = vmatprep.subr.bf16.mxu0 %v5030
      %5062 = vmatpush1.bf16.msra.mxu0 %v5029
      %5063 = vmatprep.subr.bf16.mxu0 %v5032
      %5064 = vmatpush1.bf16.msra.mxu0 %v5031
      %5065 = vmatprep.subr.bf16.mxu0 %v5034
      %5066 = vmatpush1.bf16.msra.mxu0 %v5033
      %5067 = vmatprep.subr.bf16.mxu0 %v5036
      %5068 = vmatpush1.bf16.msra.mxu0 %v5035
      %5069 = vmatprep.subr.bf16.mxu0 %v5038
      %5070 = vmatpush1.bf16.msra.mxu0 %v5037
      %5071 = vmatprep.subr.bf16.mxu0 %v5040
      %5072 = vmatpush1.bf16.msra.mxu0 %v5039
      %5073 = vmatprep.subr.bf16.mxu0 0
      %5074 = vmatpush1.bf16.msra.mxu0 0
      %5075 = vmatprep.subr.bf16.mxu0 0
      %5076 = vmatpush1.bf16.msra.mxu0 0
      %5077 = vmatprep.subr.bf16.mxu0 0
      %5078 = vmatpush1.bf16.msra.mxu0 0
      %5079 = vmatprep.subr.bf16.mxu0 0
      %5080 = vmatpush1.bf16.msra.mxu0 0
      %5081 = vmatprep.subr.bf16.mxu0 0
      %5082 = vmatpush1.bf16.msra.mxu0 0
      %5083 = vmatprep.subr.bf16.mxu0 0
      %5084 = vmatpush1.bf16.msra.mxu0 0
      %5085 = vmatprep.subr.bf16.mxu0 0
      %5086 = vmatpush1.bf16.msra.mxu0 0
      %5087 = vmatprep.subr.bf16.mxu0 0
      %5088 = vmatpush1.bf16.msra.mxu0 0
      %5089 = vmatprep.mubr.bf16.mxu0 0
      %5090 = vmatmul.mubr.bf16.gmra.mrb[0].mxu0 %v4973
      %v5091 = vpop.f32.mrb[0].mxu0
      %v5092 = vadd.f32 0.0, %v5091
      %v5093 = vpop.f32.mrb[0].mxu0
      %v5094 = vadd.f32 0.0, %v5093
      %v5095 = vpop.f32.mrb[0].mxu0
      %v5096 = vadd.f32 0.0, %v5095
      %v5097 = vpop.f32.mrb[0].mxu0
      %v5098 = vadd.f32 0.0, %v5097
      %5099 = vmatprep.mubr.bf16.mxu0 0
      %5100 = vmatmul.mubr.bf16.gmra.mrb[0].mxu0 %v4974
      %v5101 = vpop.f32.mrb[0].mxu0
      %v5102 = vadd.f32 0.0, %v5101
      %v5103 = vpop.f32.mrb[0].mxu0
      %v5104 = vadd.f32 0.0, %v5103
      %v5105 = vpop.f32.mrb[0].mxu0
      %v5106 = vadd.f32 0.0, %v5105
      %v5107 = vpop.f32.mrb[0].mxu0
      %v5108 = vadd.f32 0.0, %v5107
      %5109 = vdwg.mxu0
      %v5110 = vadd.f32 %v4939, %v5092
      %v5111 = vadd.f32 %v4941, %v5094
      %v5112 = vld [vmem:[#allocation13] sm:$0x3]
      %v5114 = vlaneseq
      %v5115 = vshrl.u32 %v5114, 7
      %v5116 = vsub.s32 0, %v5115
      %v5117 = vrot.slane %v5112, %v5116
      %v5118 = vlaneseq
      %v5119 = vshrl.u32 %v5118, 7
      %v5120 = vsub.s32 1, %v5119
      %v5121 = vrot.slane %v5112, %v5120
      %v5124 = vadd.f32 %v5110, %v5117
      %v5125 = vadd.f32 %v5111, %v5121
      %v5126 = vmax.f32 %v5124, 0.0
      %v5127 = vmax.f32 %v5125, 0.0
      %v5128 = vadd.f32 %v5126, 0.0
      %v5129 = vadd.f32 %v5127, 0.0
      %v5130 = vadd.f32 %v4939, %v5096
      %v5131 = vadd.f32 %v4941, %v5098
      %v5132 = vadd.f32 %v5130, %v5117
      %v5133 = vadd.f32 %v5131, %v5121
      %v5134 = vmax.f32 %v5132, 0.0
      %v5135 = vmax.f32 %v5133, 0.0
      %v5136 = vadd.f32 %v5128, %v5134
      %v5137 = vadd.f32 %v5129, %v5135
      %v5138 = vadd.f32 %v4939, %v5102
      %v5139 = vadd.f32 %v4941, %v5104
      %v5140 = vadd.f32 %v5138, %v5117
      %v5141 = vadd.f32 %v5139, %v5121
      %v5142 = vmax.f32 %v5140, 0.0
      %v5143 = vmax.f32 %v5141, 0.0
      %v5144 = vadd.f32 %v5136, %v5142
      %v5145 = vadd.f32 %v5137, %v5143
      %v5146 = vadd.f32 %v4939, %v5106
      %v5147 = vadd.f32 %v4941, %v5108
      %v5148 = vadd.f32 %v5146, %v5117
      %v5149 = vadd.f32 %v5147, %v5121
      %v5150 = vmax.f32 %v5148, 0.0
      %v5151 = vmax.f32 %v5149, 0.0
      %v5152 = vadd.f32 %v5144, %v5150
      %v5153 = vadd.f32 %v5145, %v5151
      %v5154 = vpack.c.bf16 %v5152, %v5152
      %v5155 = vpack.c.bf16 %v5153, %v5153
      %v5156 = vld [vmem:[#allocation14] sm:$0xff]
      %v5157 = vld [vmem:[#allocation14 + $0x8] sm:$0xff]
      %v5158 = vld [vmem:[#allocation14 + $0x10] sm:$0xff]
      %v5159 = vld [vmem:[#allocation14 + $0x18] sm:$0xff]
      %v5160 = vld [vmem:[#allocation14 + $0x20] sm:$0xff]
      %v5161 = vld [vmem:[#allocation14 + $0x28] sm:$0xff]
      %v5162 = vld [vmem:[#allocation14 + $0x30] sm:$0xff]
      %v5163 = vld [vmem:[#allocation14 + $0x38] sm:$0xff]
      %v5164 = vld [vmem:[#allocation14 + $0x40] sm:$0xff]
      %v5165 = vld [vmem:[#allocation14 + $0x48] sm:$0xff]
      %v5166 = vld [vmem:[#allocation14 + $0x50] sm:$0xff]
      %v5167 = vld [vmem:[#allocation14 + $0x58] sm:$0xff]
      %v5168 = vld [vmem:[#allocation14 + $0x60] sm:$0xff]
      %v5169 = vld [vmem:[#allocation14 + $0x68] sm:$0xff]
      %v5170 = vld [vmem:[#allocation14 + $0x70] sm:$0xff]
      %v5171 = vld [vmem:[#allocation14 + $0x78] sm:$0xff]
      %v5172 = vld [vmem:[#allocation14 + $0x80] sm:$0xff]
      %v5173 = vld [vmem:[#allocation14 + $0x88] sm:$0xff]
      %v5174 = vld [vmem:[#allocation14 + $0x90] sm:$0xff]
      %v5175 = vld [vmem:[#allocation14 + $0x98] sm:$0xff]
      %v5176 = vld [vmem:[#allocation14 + $0xa0] sm:$0xff]
      %v5177 = vld [vmem:[#allocation14 + $0xa8] sm:$0xff]
      %v5178 = vld [vmem:[#allocation14 + $0xb0] sm:$0xff]
      %v5179 = vld [vmem:[#allocation14 + $0xb8] sm:$0xff]
      %v5180 = vld [vmem:[#allocation14 + $0xc0] sm:$0xff]
      %v5181 = vld [vmem:[#allocation14 + $0xc8] sm:$0xff]
      %v5182 = vld [vmem:[#allocation14 + $0xd0] sm:$0xff]
      %v5183 = vld [vmem:[#allocation14 + $0xd8] sm:$0xff]
      %v5184 = vld [vmem:[#allocation14 + $0xe0] sm:$0xff]
      %v5185 = vld [vmem:[#allocation14 + $0xe8] sm:$0xff]
      %v5186 = vld [vmem:[#allocation14 + $0xf0] sm:$0xff]
      %v5187 = vld [vmem:[#allocation14 + $0xf8] sm:$0xff]
      %v5188 = vld [vmem:[#allocation14 + $0x100] sm:$0xff]
      %v5189 = vld [vmem:[#allocation14 + $0x108] sm:$0xff]
      %v5190 = vld [vmem:[#allocation14 + $0x110] sm:$0xff]
      %v5191 = vld [vmem:[#allocation14 + $0x118] sm:$0xff]
      %v5192 = vld [vmem:[#allocation14 + $0x120] sm:$0xff]
      %v5193 = vld [vmem:[#allocation14 + $0x128] sm:$0xff]
      %v5194 = vld [vmem:[#allocation14 + $0x130] sm:$0xff]
      %v5195 = vld [vmem:[#allocation14 + $0x138] sm:$0xff]
      %v5196 = vld [vmem:[#allocation14 + $0x140] sm:$0xff]
      %v5197 = vld [vmem:[#allocation14 + $0x148] sm:$0xff]
      %v5198 = vld [vmem:[#allocation14 + $0x150] sm:$0xff]
      %v5199 = vld [vmem:[#allocation14 + $0x158] sm:$0xff]
      %v5200 = vld [vmem:[#allocation14 + $0x160] sm:$0xff]
      %v5201 = vld [vmem:[#allocation14 + $0x168] sm:$0xff]
      %v5202 = vld [vmem:[#allocation14 + $0x170] sm:$0xff]
      %v5203 = vld [vmem:[#allocation14 + $0x178] sm:$0xff]
      %v5204 = vld [vmem:[#allocation14 + $0x180] sm:$0xff]
      %v5205 = vld [vmem:[#allocation14 + $0x188] sm:$0xff]
      %v5206 = vld [vmem:[#allocation14 + $0x190] sm:$0xff]
      %v5207 = vld [vmem:[#allocation14 + $0x198] sm:$0xff]
      %v5208 = vld [vmem:[#allocation14 + $0x1a0] sm:$0xff]
      %v5209 = vld [vmem:[#allocation14 + $0x1a8] sm:$0xff]
      %v5210 = vld [vmem:[#allocation14 + $0x1b0] sm:$0xff]
      %v5211 = vld [vmem:[#allocation14 + $0x1b8] sm:$0xff]
      %v5212 = vld [vmem:[#allocation14 + $0x1c0] sm:$0xff]
      %v5213 = vld [vmem:[#allocation14 + $0x1c8] sm:$0xff]
      %v5214 = vld [vmem:[#allocation14 + $0x1d0] sm:$0xff]
      %v5215 = vld [vmem:[#allocation14 + $0x1d8] sm:$0xff]
      %v5216 = vld [vmem:[#allocation14 + $0x1e0] sm:$0xff]
      %v5217 = vld [vmem:[#allocation14 + $0x1e8] sm:$0xff]
      %v5218 = vld [vmem:[#allocation14 + $0x1f0] sm:$0xff]
      %v5219 = vld [vmem:[#allocation14 + $0x1f8] sm:$0xff]
      %v5220 = vld [vmem:[#allocation14 + $0x200] sm:$0xff]
      %v5221 = vld [vmem:[#allocation14 + $0x208] sm:$0xff]
      %v5222 = vld [vmem:[#allocation14 + $0x210] sm:$0xff]
      %v5223 = vld [vmem:[#allocation14 + $0x218] sm:$0xff]
      %v5224 = vld [vmem:[#allocation14 + $0x220] sm:$0xff]
      %v5225 = vld [vmem:[#allocation14 + $0x228] sm:$0xff]
      %v5226 = vld [vmem:[#allocation14 + $0x230] sm:$0xff]
      %v5227 = vld [vmem:[#allocation14 + $0x238] sm:$0xff]
      %v5228 = vld [vmem:[#allocation14 + $0x240] sm:$0xff]
      %v5229 = vld [vmem:[#allocation14 + $0x248] sm:$0xff]
      %v5230 = vld [vmem:[#allocation14 + $0x250] sm:$0xff]
      %v5231 = vld [vmem:[#allocation14 + $0x258] sm:$0xff]
      %v5232 = vld [vmem:[#allocation14 + $0x260] sm:$0xff]
      %v5233 = vld [vmem:[#allocation14 + $0x268] sm:$0xff]
      %v5234 = vld [vmem:[#allocation14 + $0x270] sm:$0xff]
      %v5235 = vld [vmem:[#allocation14 + $0x278] sm:$0xff]
      %v5236 = vld [vmem:[#allocation14 + $0x280] sm:$0xff]
      %v5237 = vld [vmem:[#allocation14 + $0x288] sm:$0xff]
      %v5238 = vld [vmem:[#allocation14 + $0x290] sm:$0xff]
      %v5239 = vld [vmem:[#allocation14 + $0x298] sm:$0xff]
      %v5240 = vld [vmem:[#allocation14 + $0x2a0] sm:$0xff]
      %v5241 = vld [vmem:[#allocation14 + $0x2a8] sm:$0xff]
      %v5242 = vld [vmem:[#allocation14 + $0x2b0] sm:$0xff]
      %v5243 = vld [vmem:[#allocation14 + $0x2b8] sm:$0xff]
      %v5244 = vld [vmem:[#allocation14 + $0x2c0] sm:$0xff]
      %v5245 = vld [vmem:[#allocation14 + $0x2c8] sm:$0xff]
      %v5246 = vld [vmem:[#allocation14 + $0x2d0] sm:$0xff]
      %v5247 = vld [vmem:[#allocation14 + $0x2d8] sm:$0xff]
      %v5248 = vld [vmem:[#allocation14 + $0x2e0] sm:$0xff]
      %v5249 = vld [vmem:[#allocation14 + $0x2e8] sm:$0xff]
      %v5250 = vld [vmem:[#allocation14 + $0x2f0] sm:$0xff]
      %v5251 = vld [vmem:[#allocation14 + $0x2f8] sm:$0xff]
      %v5252 = vld [vmem:[#allocation14 + $0x300] sm:$0xff]
      %v5253 = vld [vmem:[#allocation14 + $0x308] sm:$0xff]
      %v5254 = vld [vmem:[#allocation14 + $0x310] sm:$0xff]
      %v5255 = vld [vmem:[#allocation14 + $0x318] sm:$0xff]
      %v5256 = vld [vmem:[#allocation14 + $0x320] sm:$0xff]
      %v5257 = vld [vmem:[#allocation14 + $0x328] sm:$0xff]
      %v5258 = vld [vmem:[#allocation14 + $0x330] sm:$0xff]
      %v5259 = vld [vmem:[#allocation14 + $0x338] sm:$0xff]
      %v5260 = vld [vmem:[#allocation14 + $0x340] sm:$0xff]
      %v5261 = vld [vmem:[#allocation14 + $0x348] sm:$0xff]
      %v5262 = vld [vmem:[#allocation14 + $0x350] sm:$0xff]
      %v5263 = vld [vmem:[#allocation14 + $0x358] sm:$0xff]
      %v5264 = vld [vmem:[#allocation14 + $0x360] sm:$0xff]
      %v5265 = vld [vmem:[#allocation14 + $0x368] sm:$0xff]
      %v5266 = vld [vmem:[#allocation14 + $0x370] sm:$0xff]
      %v5267 = vld [vmem:[#allocation14 + $0x378] sm:$0xff]
      %v5268 = vld [vmem:[#allocation14 + $0x380] sm:$0xff]
      %v5269 = vld [vmem:[#allocation14 + $0x388] sm:$0xff]
      %v5270 = vld [vmem:[#allocation14 + $0x390] sm:$0xff]
      %v5271 = vld [vmem:[#allocation14 + $0x398] sm:$0xff]
      %v5272 = vld [vmem:[#allocation14 + $0x3a0] sm:$0xff]
      %v5273 = vld [vmem:[#allocation14 + $0x3a8] sm:$0xff]
      %v5274 = vld [vmem:[#allocation14 + $0x3b0] sm:$0xff]
      %v5275 = vld [vmem:[#allocation14 + $0x3b8] sm:$0xff]
      %v5276 = vld [vmem:[#allocation14 + $0x3c0] sm:$0xff]
      %v5277 = vld [vmem:[#allocation14 + $0x3c8] sm:$0xff]
      %v5278 = vld [vmem:[#allocation14 + $0x3d0] sm:$0xff]
      %v5279 = vld [vmem:[#allocation14 + $0x3d8] sm:$0xff]
      %v5280 = vld [vmem:[#allocation14 + $0x3e0] sm:$0xff]
      %v5281 = vld [vmem:[#allocation14 + $0x3e8] sm:$0xff]
      %v5282 = vld [vmem:[#allocation14 + $0x3f0] sm:$0xff]
      %v5283 = vld [vmem:[#allocation14 + $0x3f8] sm:$0xff]
      %v5284 = vld [vmem:[#allocation16] sm:$0xff]
      %v5285 = vmul.f32 %v5284, 4.0
      %v5287 = vlaneseq
      %v5288 = vshrl.u32 %v5287, 7
      %v5289 = vsub.s32 0, %v5288
      %v5290 = vrot.slane %v5285, %v5289
      %v5291 = vlaneseq
      %v5292 = vshrl.u32 %v5291, 7
      %v5293 = vsub.s32 1, %v5292
      %v5294 = vrot.slane %v5285, %v5293
      %v5295 = vlaneseq
      %v5296 = vshrl.u32 %v5295, 7
      %v5297 = vsub.s32 2, %v5296
      %v5298 = vrot.slane %v5285, %v5297
      %v5299 = vlaneseq
      %v5300 = vshrl.u32 %v5299, 7
      %v5301 = vsub.s32 3, %v5300
      %v5302 = vrot.slane %v5285, %v5301
      %v5303 = vlaneseq
      %v5304 = vshrl.u32 %v5303, 7
      %v5305 = vsub.s32 4, %v5304
      %v5306 = vrot.slane %v5285, %v5305
      %v5307 = vlaneseq
      %v5308 = vshrl.u32 %v5307, 7
      %v5309 = vsub.s32 5, %v5308
      %v5310 = vrot.slane %v5285, %v5309
      %v5311 = vlaneseq
      %v5312 = vshrl.u32 %v5311, 7
      %v5313 = vsub.s32 6, %v5312
      %v5314 = vrot.slane %v5285, %v5313
      %v5315 = vlaneseq
      %v5316 = vshrl.u32 %v5315, 7
      %v5317 = vsub.s32 7, %v5316
      %v5318 = vrot.slane %v5285, %v5317
      %v5455 = vunpack.c.l.b16 %v5156
      %v5456 = vunpack.c.h.b16 %v5156
      %v5457 = vunpack.c.l.b16 %v5157
      %v5458 = vunpack.c.h.b16 %v5157
      %v5459 = vunpack.c.l.b16 %v5158
      %v5460 = vunpack.c.h.b16 %v5158
      %v5461 = vunpack.c.l.b16 %v5159
      %v5462 = vunpack.c.h.b16 %v5159
      %v5463 = vunpack.c.l.b16 %v5160
      %v5464 = vunpack.c.h.b16 %v5160
      %v5465 = vunpack.c.l.b16 %v5161
      %v5466 = vunpack.c.h.b16 %v5161
      %v5467 = vunpack.c.l.b16 %v5162
      %v5468 = vunpack.c.h.b16 %v5162
      %v5469 = vunpack.c.l.b16 %v5163
      %v5470 = vunpack.c.h.b16 %v5163
      %v5471 = vunpack.c.l.b16 %v5164
      %v5472 = vunpack.c.h.b16 %v5164
      %v5473 = vunpack.c.l.b16 %v5165
      %v5474 = vunpack.c.h.b16 %v5165
      %v5475 = vunpack.c.l.b16 %v5166
      %v5476 = vunpack.c.h.b16 %v5166
      %v5477 = vunpack.c.l.b16 %v5167
      %v5478 = vunpack.c.h.b16 %v5167
      %v5479 = vunpack.c.l.b16 %v5168
      %v5480 = vunpack.c.h.b16 %v5168
      %v5481 = vunpack.c.l.b16 %v5169
      %v5482 = vunpack.c.h.b16 %v5169
      %v5483 = vunpack.c.l.b16 %v5170
      %v5484 = vunpack.c.h.b16 %v5170
      %v5485 = vunpack.c.l.b16 %v5171
      %v5486 = vunpack.c.h.b16 %v5171
      %v5487 = vunpack.c.l.b16 %v5172
      %v5488 = vunpack.c.h.b16 %v5172
      %v5489 = vunpack.c.l.b16 %v5173
      %v5490 = vunpack.c.h.b16 %v5173
      %v5491 = vunpack.c.l.b16 %v5174
      %v5492 = vunpack.c.h.b16 %v5174
      %v5493 = vunpack.c.l.b16 %v5175
      %v5494 = vunpack.c.h.b16 %v5175
      %v5495 = vunpack.c.l.b16 %v5176
      %v5496 = vunpack.c.h.b16 %v5176
      %v5497 = vunpack.c.l.b16 %v5177
      %v5498 = vunpack.c.h.b16 %v5177
      %v5499 = vunpack.c.l.b16 %v5178
      %v5500 = vunpack.c.h.b16 %v5178
      %v5501 = vunpack.c.l.b16 %v5179
      %v5502 = vunpack.c.h.b16 %v5179
      %v5503 = vunpack.c.l.b16 %v5180
      %v5504 = vunpack.c.h.b16 %v5180
      %v5505 = vunpack.c.l.b16 %v5181
      %v5506 = vunpack.c.h.b16 %v5181
      %v5507 = vunpack.c.l.b16 %v5182
      %v5508 = vunpack.c.h.b16 %v5182
      %v5509 = vunpack.c.l.b16 %v5183
      %v5510 = vunpack.c.h.b16 %v5183
      %v5511 = vunpack.c.l.b16 %v5184
      %v5512 = vunpack.c.h.b16 %v5184
      %v5513 = vunpack.c.l.b16 %v5185
      %v5514 = vunpack.c.h.b16 %v5185
      %v5515 = vunpack.c.l.b16 %v5186
      %v5516 = vunpack.c.h.b16 %v5186
      %v5517 = vunpack.c.l.b16 %v5187
      %v5518 = vunpack.c.h.b16 %v5187
      %v5519 = vunpack.c.l.b16 %v5188
      %v5520 = vunpack.c.h.b16 %v5188
      %v5521 = vunpack.c.l.b16 %v5189
      %v5522 = vunpack.c.h.b16 %v5189
      %v5523 = vunpack.c.l.b16 %v5190
      %v5524 = vunpack.c.h.b16 %v5190
      %v5525 = vunpack.c.l.b16 %v5191
      %v5526 = vunpack.c.h.b16 %v5191
      %v5527 = vunpack.c.l.b16 %v5192
      %v5528 = vunpack.c.h.b16 %v5192
      %v5529 = vunpack.c.l.b16 %v5193
      %v5530 = vunpack.c.h.b16 %v5193
      %v5531 = vunpack.c.l.b16 %v5194
      %v5532 = vunpack.c.h.b16 %v5194
      %v5533 = vunpack.c.l.b16 %v5195
      %v5534 = vunpack.c.h.b16 %v5195
      %v5535 = vunpack.c.l.b16 %v5196
      %v5536 = vunpack.c.h.b16 %v5196
      %v5537 = vunpack.c.l.b16 %v5197
      %v5538 = vunpack.c.h.b16 %v5197
      %v5539 = vunpack.c.l.b16 %v5198
      %v5540 = vunpack.c.h.b16 %v5198
      %v5541 = vunpack.c.l.b16 %v5199
      %v5542 = vunpack.c.h.b16 %v5199
      %v5543 = vunpack.c.l.b16 %v5200
      %v5544 = vunpack.c.h.b16 %v5200
      %v5545 = vunpack.c.l.b16 %v5201
      %v5546 = vunpack.c.h.b16 %v5201
      %v5547 = vunpack.c.l.b16 %v5202
      %v5548 = vunpack.c.h.b16 %v5202
      %v5549 = vunpack.c.l.b16 %v5203
      %v5550 = vunpack.c.h.b16 %v5203
      %v5551 = vunpack.c.l.b16 %v5204
      %v5552 = vunpack.c.h.b16 %v5204
      %v5553 = vunpack.c.l.b16 %v5205
      %v5554 = vunpack.c.h.b16 %v5205
      %v5555 = vunpack.c.l.b16 %v5206
      %v5556 = vunpack.c.h.b16 %v5206
      %v5557 = vunpack.c.l.b16 %v5207
      %v5558 = vunpack.c.h.b16 %v5207
      %v5559 = vunpack.c.l.b16 %v5208
      %v5560 = vunpack.c.h.b16 %v5208
      %v5561 = vunpack.c.l.b16 %v5209
      %v5562 = vunpack.c.h.b16 %v5209
      %v5563 = vunpack.c.l.b16 %v5210
      %v5564 = vunpack.c.h.b16 %v5210
      %v5565 = vunpack.c.l.b16 %v5211
      %v5566 = vunpack.c.h.b16 %v5211
      %v5567 = vunpack.c.l.b16 %v5212
      %v5568 = vunpack.c.h.b16 %v5212
      %v5569 = vunpack.c.l.b16 %v5213
      %v5570 = vunpack.c.h.b16 %v5213
      %v5571 = vunpack.c.l.b16 %v5214
      %v5572 = vunpack.c.h.b16 %v5214
      %v5573 = vunpack.c.l.b16 %v5215
      %v5574 = vunpack.c.h.b16 %v5215
      %v5575 = vunpack.c.l.b16 %v5216
      %v5576 = vunpack.c.h.b16 %v5216
      %v5577 = vunpack.c.l.b16 %v5217
      %v5578 = vunpack.c.h.b16 %v5217
      %v5579 = vunpack.c.l.b16 %v5218
      %v5580 = vunpack.c.h.b16 %v5218
      %v5581 = vunpack.c.l.b16 %v5219
      %v5582 = vunpack.c.h.b16 %v5219
      %v5583 = vunpack.c.l.b16 %v5220
      %v5584 = vunpack.c.h.b16 %v5220
      %v5585 = vunpack.c.l.b16 %v5221
      %v5586 = vunpack.c.h.b16 %v5221
      %v5587 = vunpack.c.l.b16 %v5222
      %v5588 = vunpack.c.h.b16 %v5222
      %v5589 = vunpack.c.l.b16 %v5223
      %v5590 = vunpack.c.h.b16 %v5223
      %v5591 = vunpack.c.l.b16 %v5224
      %v5592 = vunpack.c.h.b16 %v5224
      %v5593 = vunpack.c.l.b16 %v5225
      %v5594 = vunpack.c.h.b16 %v5225
      %v5595 = vunpack.c.l.b16 %v5226
      %v5596 = vunpack.c.h.b16 %v5226
      %v5597 = vunpack.c.l.b16 %v5227
      %v5598 = vunpack.c.h.b16 %v5227
      %v5599 = vunpack.c.l.b16 %v5228
      %v5600 = vunpack.c.h.b16 %v5228
      %v5601 = vunpack.c.l.b16 %v5229
      %v5602 = vunpack.c.h.b16 %v5229
      %v5603 = vunpack.c.l.b16 %v5230
      %v5604 = vunpack.c.h.b16 %v5230
      %v5605 = vunpack.c.l.b16 %v5231
      %v5606 = vunpack.c.h.b16 %v5231
      %v5607 = vunpack.c.l.b16 %v5232
      %v5608 = vunpack.c.h.b16 %v5232
      %v5609 = vunpack.c.l.b16 %v5233
      %v5610 = vunpack.c.h.b16 %v5233
      %v5611 = vunpack.c.l.b16 %v5234
      %v5612 = vunpack.c.h.b16 %v5234
      %v5613 = vunpack.c.l.b16 %v5235
      %v5614 = vunpack.c.h.b16 %v5235
      %v5615 = vunpack.c.l.b16 %v5236
      %v5616 = vunpack.c.h.b16 %v5236
      %v5617 = vunpack.c.l.b16 %v5237
      %v5618 = vunpack.c.h.b16 %v5237
      %v5619 = vunpack.c.l.b16 %v5238
      %v5620 = vunpack.c.h.b16 %v5238
      %v5621 = vunpack.c.l.b16 %v5239
      %v5622 = vunpack.c.h.b16 %v5239
      %v5623 = vunpack.c.l.b16 %v5240
      %v5624 = vunpack.c.h.b16 %v5240
      %v5625 = vunpack.c.l.b16 %v5241
      %v5626 = vunpack.c.h.b16 %v5241
      %v5627 = vunpack.c.l.b16 %v5242
      %v5628 = vunpack.c.h.b16 %v5242
      %v5629 = vunpack.c.l.b16 %v5243
      %v5630 = vunpack.c.h.b16 %v5243
      %v5631 = vunpack.c.l.b16 %v5244
      %v5632 = vunpack.c.h.b16 %v5244
      %v5633 = vunpack.c.l.b16 %v5245
      %v5634 = vunpack.c.h.b16 %v5245
      %v5635 = vunpack.c.l.b16 %v5246
      %v5636 = vunpack.c.h.b16 %v5246
      %v5637 = vunpack.c.l.b16 %v5247
      %v5638 = vunpack.c.h.b16 %v5247
      %v5639 = vunpack.c.l.b16 %v5248
      %v5640 = vunpack.c.h.b16 %v5248
      %v5641 = vunpack.c.l.b16 %v5249
      %v5642 = vunpack.c.h.b16 %v5249
      %v5643 = vunpack.c.l.b16 %v5250
      %v5644 = vunpack.c.h.b16 %v5250
      %v5645 = vunpack.c.l.b16 %v5251
      %v5646 = vunpack.c.h.b16 %v5251
      %v5647 = vunpack.c.l.b16 %v5252
      %v5648 = vunpack.c.h.b16 %v5252
      %v5649 = vunpack.c.l.b16 %v5253
      %v5650 = vunpack.c.h.b16 %v5253
      %v5651 = vunpack.c.l.b16 %v5254
      %v5652 = vunpack.c.h.b16 %v5254
      %v5653 = vunpack.c.l.b16 %v5255
      %v5654 = vunpack.c.h.b16 %v5255
      %v5655 = vunpack.c.l.b16 %v5256
      %v5656 = vunpack.c.h.b16 %v5256
      %v5657 = vunpack.c.l.b16 %v5257
      %v5658 = vunpack.c.h.b16 %v5257
      %v5659 = vunpack.c.l.b16 %v5258
      %v5660 = vunpack.c.h.b16 %v5258
      %v5661 = vunpack.c.l.b16 %v5259
      %v5662 = vunpack.c.h.b16 %v5259
      %v5663 = vunpack.c.l.b16 %v5260
      %v5664 = vunpack.c.h.b16 %v5260
      %v5665 = vunpack.c.l.b16 %v5261
      %v5666 = vunpack.c.h.b16 %v5261
      %v5667 = vunpack.c.l.b16 %v5262
      %v5668 = vunpack.c.h.b16 %v5262
      %v5669 = vunpack.c.l.b16 %v5263
      %v5670 = vunpack.c.h.b16 %v5263
      %v5671 = vunpack.c.l.b16 %v5264
      %v5672 = vunpack.c.h.b16 %v5264
      %v5673 = vunpack.c.l.b16 %v5265
      %v5674 = vunpack.c.h.b16 %v5265
      %v5675 = vunpack.c.l.b16 %v5266
      %v5676 = vunpack.c.h.b16 %v5266
      %v5677 = vunpack.c.l.b16 %v5267
      %v5678 = vunpack.c.h.b16 %v5267
      %v5679 = vunpack.c.l.b16 %v5268
      %v5680 = vunpack.c.h.b16 %v5268
      %v5681 = vunpack.c.l.b16 %v5269
      %v5682 = vunpack.c.h.b16 %v5269
      %v5683 = vunpack.c.l.b16 %v5270
      %v5684 = vunpack.c.h.b16 %v5270
      %v5685 = vunpack.c.l.b16 %v5271
      %v5686 = vunpack.c.h.b16 %v5271
      %v5687 = vunpack.c.l.b16 %v5272
      %v5688 = vunpack.c.h.b16 %v5272
      %v5689 = vunpack.c.l.b16 %v5273
      %v5690 = vunpack.c.h.b16 %v5273
      %v5691 = vunpack.c.l.b16 %v5274
      %v5692 = vunpack.c.h.b16 %v5274
      %v5693 = vunpack.c.l.b16 %v5275
      %v5694 = vunpack.c.h.b16 %v5275
      %v5695 = vunpack.c.l.b16 %v5276
      %v5696 = vunpack.c.h.b16 %v5276
      %v5697 = vunpack.c.l.b16 %v5277
      %v5698 = vunpack.c.h.b16 %v5277
      %v5699 = vunpack.c.l.b16 %v5278
      %v5700 = vunpack.c.h.b16 %v5278
      %v5701 = vunpack.c.l.b16 %v5279
      %v5702 = vunpack.c.h.b16 %v5279
      %v5703 = vunpack.c.l.b16 %v5280
      %v5704 = vunpack.c.h.b16 %v5280
      %v5705 = vunpack.c.l.b16 %v5281
      %v5706 = vunpack.c.h.b16 %v5281
      %v5707 = vunpack.c.l.b16 %v5282
      %v5708 = vunpack.c.h.b16 %v5282
      %v5709 = vunpack.c.l.b16 %v5283
      %v5710 = vunpack.c.h.b16 %v5283
      %v5711 = vpack.c.b16 %v5463, %v5455
      %v5712 = vpack.c.b16 %v5464, %v5456
      %v5713 = vpack.c.b16 %v5465, %v5457
      %v5714 = vpack.c.b16 %v5466, %v5458
      %v5715 = vpack.c.b16 %v5467, %v5459
      %v5716 = vpack.c.b16 %v5468, %v5460
      %v5717 = vpack.c.b16 %v5469, %v5461
      %v5718 = vpack.c.b16 %v5470, %v5462
      %v5719 = vpack.c.b16 %v5479, %v5471
      %v5720 = vpack.c.b16 %v5480, %v5472
      %v5721 = vpack.c.b16 %v5481, %v5473
      %v5722 = vpack.c.b16 %v5482, %v5474
      %v5723 = vpack.c.b16 %v5483, %v5475
      %v5724 = vpack.c.b16 %v5484, %v5476
      %v5725 = vpack.c.b16 %v5485, %v5477
      %v5726 = vpack.c.b16 %v5486, %v5478
      %v5727 = vpack.c.b16 %v5495, %v5487
      %v5728 = vpack.c.b16 %v5496, %v5488
      %v5729 = vpack.c.b16 %v5497, %v5489
      %v5730 = vpack.c.b16 %v5498, %v5490
      %v5731 = vpack.c.b16 %v5499, %v5491
      %v5732 = vpack.c.b16 %v5500, %v5492
      %v5733 = vpack.c.b16 %v5501, %v5493
      %v5734 = vpack.c.b16 %v5502, %v5494
      %v5735 = vpack.c.b16 %v5511, %v5503
      %v5736 = vpack.c.b16 %v5512, %v5504
      %v5737 = vpack.c.b16 %v5513, %v5505
      %v5738 = vpack.c.b16 %v5514, %v5506
      %v5739 = vpack.c.b16 %v5515, %v5507
      %v5740 = vpack.c.b16 %v5516, %v5508
      %v5741 = vpack.c.b16 %v5517, %v5509
      %v5742 = vpack.c.b16 %v5518, %v5510
      %v5743 = vpack.c.b16 %v5527, %v5519
      %v5744 = vpack.c.b16 %v5528, %v5520
      %v5745 = vpack.c.b16 %v5529, %v5521
      %v5746 = vpack.c.b16 %v5530, %v5522
      %v5747 = vpack.c.b16 %v5531, %v5523
      %v5748 = vpack.c.b16 %v5532, %v5524
      %v5749 = vpack.c.b16 %v5533, %v5525
      %v5750 = vpack.c.b16 %v5534, %v5526
      %v5751 = vpack.c.b16 %v5543, %v5535
      %v5752 = vpack.c.b16 %v5544, %v5536
      %v5753 = vpack.c.b16 %v5545, %v5537
      %v5754 = vpack.c.b16 %v5546, %v5538
      %v5755 = vpack.c.b16 %v5547, %v5539
      %v5756 = vpack.c.b16 %v5548, %v5540
      %v5757 = vpack.c.b16 %v5549, %v5541
      %v5758 = vpack.c.b16 %v5550, %v5542
      %v5759 = vpack.c.b16 %v5559, %v5551
      %v5760 = vpack.c.b16 %v5560, %v5552
      %v5761 = vpack.c.b16 %v5561, %v5553
      %v5762 = vpack.c.b16 %v5562, %v5554
      %v5763 = vpack.c.b16 %v5563, %v5555
      %v5764 = vpack.c.b16 %v5564, %v5556
      %v5765 = vpack.c.b16 %v5565, %v5557
      %v5766 = vpack.c.b16 %v5566, %v5558
      %v5767 = vpack.c.b16 %v5575, %v5567
      %v5768 = vpack.c.b16 %v5576, %v5568
      %v5769 = vpack.c.b16 %v5577, %v5569
      %v5770 = vpack.c.b16 %v5578, %v5570
      %v5771 = vpack.c.b16 %v5579, %v5571
      %v5772 = vpack.c.b16 %v5580, %v5572
      %v5773 = vpack.c.b16 %v5581, %v5573
      %v5774 = vpack.c.b16 %v5582, %v5574
      %v5775 = vpack.c.b16 %v5591, %v5583
      %v5776 = vpack.c.b16 %v5592, %v5584
      %v5777 = vpack.c.b16 %v5593, %v5585
      %v5778 = vpack.c.b16 %v5594, %v5586
      %v5779 = vpack.c.b16 %v5595, %v5587
      %v5780 = vpack.c.b16 %v5596, %v5588
      %v5781 = vpack.c.b16 %v5597, %v5589
      %v5782 = vpack.c.b16 %v5598, %v5590
      %v5783 = vpack.c.b16 %v5607, %v5599
      %v5784 = vpack.c.b16 %v5608, %v5600
      %v5785 = vpack.c.b16 %v5609, %v5601
      %v5786 = vpack.c.b16 %v5610, %v5602
      %v5787 = vpack.c.b16 %v5611, %v5603
      %v5788 = vpack.c.b16 %v5612, %v5604
      %v5789 = vpack.c.b16 %v5613, %v5605
      %v5790 = vpack.c.b16 %v5614, %v5606
      %v5791 = vpack.c.b16 %v5623, %v5615
      %v5792 = vpack.c.b16 %v5624, %v5616
      %v5793 = vpack.c.b16 %v5625, %v5617
      %v5794 = vpack.c.b16 %v5626, %v5618
      %v5795 = vpack.c.b16 %v5627, %v5619
      %v5796 = vpack.c.b16 %v5628, %v5620
      %v5797 = vpack.c.b16 %v5629, %v5621
      %v5798 = vpack.c.b16 %v5630, %v5622
      %v5799 = vpack.c.b16 %v5639, %v5631
      %v5800 = vpack.c.b16 %v5640, %v5632
      %v5801 = vpack.c.b16 %v5641, %v5633
      %v5802 = vpack.c.b16 %v5642, %v5634
      %v5803 = vpack.c.b16 %v5643, %v5635
      %v5804 = vpack.c.b16 %v5644, %v5636
      %v5805 = vpack.c.b16 %v5645, %v5637
      %v5806 = vpack.c.b16 %v5646, %v5638
      %v5807 = vpack.c.b16 %v5655, %v5647
      %v5808 = vpack.c.b16 %v5656, %v5648
      %v5809 = vpack.c.b16 %v5657, %v5649
      %v5810 = vpack.c.b16 %v5658, %v5650
      %v5811 = vpack.c.b16 %v5659, %v5651
      %v5812 = vpack.c.b16 %v5660, %v5652
      %v5813 = vpack.c.b16 %v5661, %v5653
      %v5814 = vpack.c.b16 %v5662, %v5654
      %v5815 = vpack.c.b16 %v5671, %v5663
      %v5816 = vpack.c.b16 %v5672, %v5664
      %v5817 = vpack.c.b16 %v5673, %v5665
      %v5818 = vpack.c.b16 %v5674, %v5666
      %v5819 = vpack.c.b16 %v5675, %v5667
      %v5820 = vpack.c.b16 %v5676, %v5668
      %v5821 = vpack.c.b16 %v5677, %v5669
      %v5822 = vpack.c.b16 %v5678, %v5670
      %v5823 = vpack.c.b16 %v5687, %v5679
      %v5824 = vpack.c.b16 %v5688, %v5680
      %v5825 = vpack.c.b16 %v5689, %v5681
      %v5826 = vpack.c.b16 %v5690, %v5682
      %v5827 = vpack.c.b16 %v5691, %v5683
      %v5828 = vpack.c.b16 %v5692, %v5684
      %v5829 = vpack.c.b16 %v5693, %v5685
      %v5830 = vpack.c.b16 %v5694, %v5686
      %v5831 = vpack.c.b16 %v5703, %v5695
      %v5832 = vpack.c.b16 %v5704, %v5696
      %v5833 = vpack.c.b16 %v5705, %v5697
      %v5834 = vpack.c.b16 %v5706, %v5698
      %v5835 = vpack.c.b16 %v5707, %v5699
      %v5836 = vpack.c.b16 %v5708, %v5700
      %v5837 = vpack.c.b16 %v5709, %v5701
      %v5838 = vpack.c.b16 %v5710, %v5702
      %5967 = vmatprep.subr.bf16.mxu0 %v5712
      %5968 = vmatpush1.bf16.msra.mxu0 %v5711
      %5969 = vmatprep.subr.bf16.mxu0 %v5720
      %5970 = vmatpush1.bf16.msra.mxu0 %v5719
      %5971 = vmatprep.subr.bf16.mxu0 %v5728
      %5972 = vmatpush1.bf16.msra.mxu0 %v5727
      %5973 = vmatprep.subr.bf16.mxu0 %v5736
      %5974 = vmatpush1.bf16.msra.mxu0 %v5735
      %5975 = vmatprep.subr.bf16.mxu0 %v5744
      %5976 = vmatpush1.bf16.msra.mxu0 %v5743
      %5977 = vmatprep.subr.bf16.mxu0 %v5752
      %5978 = vmatpush1.bf16.msra.mxu0 %v5751
      %5979 = vmatprep.subr.bf16.mxu0 %v5760
      %5980 = vmatpush1.bf16.msra.mxu0 %v5759
      %5981 = vmatprep.subr.bf16.mxu0 %v5768
      %5982 = vmatpush1.bf16.msra.mxu0 %v5767
      %5983 = vmatprep.subr.bf16.mxu0 %v5776
      %5984 = vmatpush1.bf16.msra.mxu0 %v5775
      %5985 = vmatprep.subr.bf16.mxu0 %v5784
      %5986 = vmatpush1.bf16.msra.mxu0 %v5783
      %5987 = vmatprep.subr.bf16.mxu0 %v5792
      %5988 = vmatpush1.bf16.msra.mxu0 %v5791
      %5989 = vmatprep.subr.bf16.mxu0 %v5800
      %5990 = vmatpush1.bf16.msra.mxu0 %v5799
      %5991 = vmatprep.subr.bf16.mxu0 %v5808
      %5992 = vmatpush1.bf16.msra.mxu0 %v5807
      %5993 = vmatprep.subr.bf16.mxu0 %v5816
      %5994 = vmatpush1.bf16.msra.mxu0 %v5815
      %5995 = vmatprep.subr.bf16.mxu0 %v5824
      %5996 = vmatpush1.bf16.msra.mxu0 %v5823
      %5997 = vmatprep.subr.bf16.mxu0 %v5832
      %5998 = vmatpush1.bf16.msra.mxu0 %v5831
      %5999 = vmatprep.mubr.bf16.mxu0 %v5155
      %6000 = vmatmul.mubr.bf16.gmra.mrb[0].mxu0 %v5154
      %v6001 = vpop.f32.mrb[0].mxu0
      %v6002 = vadd.f32 %v5290, %v6001
      %v6003 = vpop.f32.mrb[0].mxu0
      %v6004 = vadd.f32 %v5294, %v6003
      %v6005 = vpop.f32.mrb[0].mxu0
      %v6006 = vpop.f32.mrb[0].mxu0
      %6007 = vdwg.mxu0
      %6008 = vmatprep.subr.bf16.mxu0 %v5714
      %6009 = vmatpush1.bf16.msra.mxu0 %v5713
      %6010 = vmatprep.subr.bf16.mxu0 %v5722
      %6011 = vmatpush1.bf16.msra.mxu0 %v5721
      %6012 = vmatprep.subr.bf16.mxu0 %v5730
      %6013 = vmatpush1.bf16.msra.mxu0 %v5729
      %6014 = vmatprep.subr.bf16.mxu0 %v5738
      %6015 = vmatpush1.bf16.msra.mxu0 %v5737
      %6016 = vmatprep.subr.bf16.mxu0 %v5746
      %6017 = vmatpush1.bf16.msra.mxu0 %v5745
      %6018 = vmatprep.subr.bf16.mxu0 %v5754
      %6019 = vmatpush1.bf16.msra.mxu0 %v5753
      %6020 = vmatprep.subr.bf16.mxu0 %v5762
      %6021 = vmatpush1.bf16.msra.mxu0 %v5761
      %6022 = vmatprep.subr.bf16.mxu0 %v5770
      %6023 = vmatpush1.bf16.msra.mxu0 %v5769
      %6024 = vmatprep.subr.bf16.mxu0 %v5778
      %6025 = vmatpush1.bf16.msra.mxu0 %v5777
      %6026 = vmatprep.subr.bf16.mxu0 %v5786
      %6027 = vmatpush1.bf16.msra.mxu0 %v5785
      %6028 = vmatprep.subr.bf16.mxu0 %v5794
      %6029 = vmatpush1.bf16.msra.mxu0 %v5793
      %6030 = vmatprep.subr.bf16.mxu0 %v5802
      %6031 = vmatpush1.bf16.msra.mxu0 %v5801
      %6032 = vmatprep.subr.bf16.mxu0 %v5810
      %6033 = vmatpush1.bf16.msra.mxu0 %v5809
      %6034 = vmatprep.subr.bf16.mxu0 %v5818
      %6035 = vmatpush1.bf16.msra.mxu0 %v5817
      %6036 = vmatprep.subr.bf16.mxu0 %v5826
      %6037 = vmatpush1.bf16.msra.mxu0 %v5825
      %6038 = vmatprep.subr.bf16.mxu0 %v5834
      %6039 = vmatpush1.bf16.msra.mxu0 %v5833
      %6040 = vmatprep.mubr.bf16.mxu0 %v5155
      %6041 = vmatmul.mubr.bf16.gmra.mrb[0].mxu0 %v5154
      %v6042 = vpop.f32.mrb[0].mxu0
      %v6043 = vadd.f32 %v5298, %v6042
      %v6044 = vpop.f32.mrb[0].mxu0
      %v6045 = vadd.f32 %v5302, %v6044
      %v6046 = vpop.f32.mrb[0].mxu0
      %v6047 = vpop.f32.mrb[0].mxu0
      %6048 = vdwg.mxu0
      %6049 = vmatprep.subr.bf16.mxu0 %v5716
      %6050 = vmatpush1.bf16.msra.mxu0 %v5715
      %6051 = vmatprep.subr.bf16.mxu0 %v5724
      %6052 = vmatpush1.bf16.msra.mxu0 %v5723
      %6053 = vmatprep.subr.bf16.mxu0 %v5732
      %6054 = vmatpush1.bf16.msra.mxu0 %v5731
      %6055 = vmatprep.subr.bf16.mxu0 %v5740
      %6056 = vmatpush1.bf16.msra.mxu0 %v5739
      %6057 = vmatprep.subr.bf16.mxu0 %v5748
      %6058 = vmatpush1.bf16.msra.mxu0 %v5747
      %6059 = vmatprep.subr.bf16.mxu0 %v5756
      %6060 = vmatpush1.bf16.msra.mxu0 %v5755
      %6061 = vmatprep.subr.bf16.mxu0 %v5764
      %6062 = vmatpush1.bf16.msra.mxu0 %v5763
      %6063 = vmatprep.subr.bf16.mxu0 %v5772
      %6064 = vmatpush1.bf16.msra.mxu0 %v5771
      %6065 = vmatprep.subr.bf16.mxu0 %v5780
      %6066 = vmatpush1.bf16.msra.mxu0 %v5779
      %6067 = vmatprep.subr.bf16.mxu0 %v5788
      %6068 = vmatpush1.bf16.msra.mxu0 %v5787
      %6069 = vmatprep.subr.bf16.mxu0 %v5796
      %6070 = vmatpush1.bf16.msra.mxu0 %v5795
      %6071 = vmatprep.subr.bf16.mxu0 %v5804
      %6072 = vmatpush1.bf16.msra.mxu0 %v5803
      %6073 = vmatprep.subr.bf16.mxu0 %v5812
      %6074 = vmatpush1.bf16.msra.mxu0 %v5811
      %6075 = vmatprep.subr.bf16.mxu0 %v5820
      %6076 = vmatpush1.bf16.msra.mxu0 %v5819
      %6077 = vmatprep.subr.bf16.mxu0 %v5828
      %6078 = vmatpush1.bf16.msra.mxu0 %v5827
      %6079 = vmatprep.subr.bf16.mxu0 %v5836
      %6080 = vmatpush1.bf16.msra.mxu0 %v5835
      %6081 = vmatprep.mubr.bf16.mxu0 %v5155
      %6082 = vmatmul.mubr.bf16.gmra.mrb[0].mxu0 %v5154
      %v6083 = vpop.f32.mrb[0].mxu0
      %v6084 = vadd.f32 %v5306, %v6083
      %v6085 = vpop.f32.mrb[0].mxu0
      %v6086 = vadd.f32 %v5310, %v6085
      %v6087 = vpop.f32.mrb[0].mxu0
      %v6088 = vpop.f32.mrb[0].mxu0
      %6089 = vdwg.mxu0
      %6090 = vmatprep.subr.bf16.mxu0 %v5718
      %6091 = vmatpush1.bf16.msra.mxu0 %v5717
      %6092 = vmatprep.subr.bf16.mxu0 %v5726
      %6093 = vmatpush1.bf16.msra.mxu0 %v5725
      %6094 = vmatprep.subr.bf16.mxu0 %v5734
      %6095 = vmatpush1.bf16.msra.mxu0 %v5733
      %6096 = vmatprep.subr.bf16.mxu0 %v5742
      %6097 = vmatpush1.bf16.msra.mxu0 %v5741
      %6098 = vmatprep.subr.bf16.mxu0 %v5750
      %6099 = vmatpush1.bf16.msra.mxu0 %v5749
      %6100 = vmatprep.subr.bf16.mxu0 %v5758
      %6101 = vmatpush1.bf16.msra.mxu0 %v5757
      %6102 = vmatprep.subr.bf16.mxu0 %v5766
      %6103 = vmatpush1.bf16.msra.mxu0 %v5765
      %6104 = vmatprep.subr.bf16.mxu0 %v5774
      %6105 = vmatpush1.bf16.msra.mxu0 %v5773
      %6106 = vmatprep.subr.bf16.mxu0 %v5782
      %6107 = vmatpush1.bf16.msra.mxu0 %v5781
      %6108 = vmatprep.subr.bf16.mxu0 %v5790
      %6109 = vmatpush1.bf16.msra.mxu0 %v5789
      %6110 = vmatprep.subr.bf16.mxu0 %v5798
      %6111 = vmatpush1.bf16.msra.mxu0 %v5797
      %6112 = vmatprep.subr.bf16.mxu0 %v5806
      %6113 = vmatpush1.bf16.msra.mxu0 %v5805
      %6114 = vmatprep.subr.bf16.mxu0 %v5814
      %6115 = vmatpush1.bf16.msra.mxu0 %v5813
      %6116 = vmatprep.subr.bf16.mxu0 %v5822
      %6117 = vmatpush1.bf16.msra.mxu0 %v5821
      %6118 = vmatprep.subr.bf16.mxu0 %v5830
      %6119 = vmatpush1.bf16.msra.mxu0 %v5829
      %6120 = vmatprep.subr.bf16.mxu0 %v5838
      %6121 = vmatpush1.bf16.msra.mxu0 %v5837
      %6122 = vmatprep.mubr.bf16.mxu0 %v5155
      %6123 = vmatmul.mubr.bf16.gmra.mrb[0].mxu0 %v5154
      %v6124 = vpop.f32.mrb[0].mxu0
      %v6125 = vadd.f32 %v5314, %v6124
      %v6126 = vpop.f32.mrb[0].mxu0
      %v6127 = vadd.f32 %v5318, %v6126
      %v6128 = vpop.f32.mrb[0].mxu0
      %v6129 = vpop.f32.mrb[0].mxu0
      %6130 = vdwg.mxu0
      %v6131 = vadd.f32 %v3997, %v6002
      %v6132 = vadd.f32 %v3998, %v6004
      %v6133 = vadd.f32 %v3999, %v6043
      %v6134 = vadd.f32 %v4000, %v6045
      %v6135 = vadd.f32 %v4001, %v6084
      %v6136 = vadd.f32 %v4002, %v6086
      %v6137 = vadd.f32 %v4003, %v6125
      %v6138 = vadd.f32 %v4004, %v6127
      %v6139 = vmul.f32 %v6131, 0.2
      %v6140 = vmul.f32 %v6132, 0.2
      %v6141 = vmul.f32 %v6133, 0.2
      %v6142 = vmul.f32 %v6134, 0.2
      %v6143 = vmul.f32 %v6135, 0.2
      %v6144 = vmul.f32 %v6136, 0.2
      %v6145 = vmul.f32 %v6137, 0.2
      %v6146 = vmul.f32 %v6138, 0.2
      %v6147 = vmul.f32 %v6139, %v6139
      %v6148 = vmul.f32 %v6140, %v6140
      %v6149 = vmul.f32 %v6141, %v6141
      %v6150 = vmul.f32 %v6142, %v6142
      %v6151 = vmul.f32 %v6143, %v6143
      %v6152 = vmul.f32 %v6144, %v6144
      %v6153 = vmul.f32 %v6145, %v6145
      %v6154 = vmul.f32 %v6146, %v6146
      %v6155 = vadd.f32 %v6147, %v6148
      %v6156 = vadd.f32 %v6155, %v6149
      %v6157 = vadd.f32 %v6156, %v6150
      %v6158 = vadd.f32 %v6157, %v6151
      %v6159 = vadd.f32 %v6158, %v6152
      %v6160 = vadd.f32 %v6159, %v6153
      %v6161 = vadd.f32 %v6160, %v6154
      %6162 = vadd.xlane.f32.xlu0 %v6161
      %v6163 = vpop.xlane.xlu0 %6162
      %v6164 = vrsqrt.pop %v6163
      %v6165 = vmul.f32 %v6163, %v6164
      %vm6166 = vcmp.eq.f32.partialorder %v6163, inf
      %v6167 = vsel %vm6166, %v6163, %v6165
      %vm6168 = vcmp.eq.f32.partialorder %v6163, 0.0
      %v6169 = vand.u32 %v6163, 2147483648
      %v6170 = vsel %vm6168, %v6169, %v6167
      %v6171 = vmax.f32 %v6170, 1e-12
      %v6172 = vmul.f32 %v6171, 2.0
      %v6173 = vrsqrt.pop %v6172
      %v6174 = vmul.f32 %v6139, %v6173
      %v6175 = vmul.f32 %v6140, %v6173
      %v6176 = vmul.f32 %v6141, %v6173
      %v6177 = vmul.f32 %v6142, %v6173
      %v6178 = vmul.f32 %v6143, %v6173
      %v6179 = vmul.f32 %v6144, %v6173
      %v6180 = vmul.f32 %v6145, %v6173
      %v6181 = vmul.f32 %v6146, %v6173
      %6182 = vst [vmem:[#allocation17] sm:$0xff] %v6174
      %6183 = vst [vmem:[#allocation17 + $0x8] sm:$0xff] %v6175
      %6184 = vst [vmem:[#allocation17 + $0x10] sm:$0xff] %v6176
      %6185 = vst [vmem:[#allocation17 + $0x18] sm:$0xff] %v6177
      %6186 = vst [vmem:[#allocation17 + $0x20] sm:$0xff] %v6178
      %6187 = vst [vmem:[#allocation17 + $0x28] sm:$0xff] %v6179
      %6188 = vst [vmem:[#allocation17 + $0x30] sm:$0xff] %v6180
      %6189 = vst [vmem:[#allocation17 + $0x38] sm:$0xff] %v6181
    $region81: #{tpu_custom_call.1} parent=1 // pred_fallthru
      _
    // Predicated region
    $region82: #{tpu_custom_call.1} parent=1 // pred_check
      _
    $region83: #{tpu_custom_call.1} parent=1 // pred_check_branch
      %6191 = sbr.rel (0) target = $region85
    $region84: #{tpu_custom_call.1} parent=1 // pred_region
      %s6193 = ssub.s32 1024, 1024
      %6194 = vsyncadd [#allocation4], %s6193
      %s6196 = sshll.u32 [#allocation17], 4
      %s6197 = int_to_ptr.vmem [resolvable:$true] %s6196
      %6199 = dma.vmem_to_hbm [thread:$0]  %s6197, 1024, %s9, [#allocation4]
    $region85: #{tpu_custom_call.1} parent=1 // pred_fallthru
      _
    // Predicated region
    $region86: #{tpu_custom_call.1} parent=1 // pred_check
      _
    $region87: #{tpu_custom_call.1} parent=1 // pred_check_branch
      %6201 = sbr.rel (0) target = $region89
    $region88: #{tpu_custom_call.1} parent=1 // pred_region
      %6202 = dma.done [#allocation4], 1024
    $region89: #{tpu_custom_call.1} parent=1 // pred_fallthru
      _
    %6203 = vsyncpa [#allocation3], 1
    %6204 = vsyncpa [#allocation6], 1
    %6205 = vsyncpa [#allocation9], 1
    %6206 = vsyncpa [#allocation12], 1
    %6207 = vsyncpa [#allocation15], 1
    %6208 = vsyncpa [#allocation4], 1

</llo_original>
